<compile_context>
chip_gen: v7x
topology: tpu7x:2x2x1
jax: 0.10.0
libtpu: 0.0.40
codegen_flags: <defaults>
</compile_context>

<pallas_src>
import functools

import jax
import jax.numpy as jnp
from jax import lax
from jax.experimental import pallas as pl
from jax.experimental.pallas import tpu as pltpu


def sbe_kernel(xf_ref, xrw_ref, tex_ref, colrow_ref, mask9_ref,
               wflow_ref, flow_b_ref,
               w1e_ref, w1t_ref, bn1_b_ref,
               w2_ref, bn2_b_ref,
               wsce_ref, wsct_ref, bnsc_b_ref,
               out_ref, *, H, W, Cp):
    f32 = jnp.float32
    HW = H * W

    xf = xf_ref[...]                                   # (Cp, HW) channel-major slab
    texf = tex_ref[...]                                # (Cp, HW)
    m9 = mask9_ref[...]                                # (9, HW) f32 boundary masks (hoisted)

    taps = [(dy, dx) for dy in (-1, 0, 1) for dx in (-1, 0, 1)]

    def conv3x3(wt_ref, zf):
        # 3x3 "same" conv as 9 accumulating (Cp,Cp)@(Cp,HW) MXU matmuls on rolled+masked
        # taps; per-tap weight slabs were split host-side (no im2col concat).
        acc = jnp.dot(wt_ref[4], zf, preferred_element_type=f32)   # center tap, mask == 1
        for t, (dy, dx) in enumerate(taps):
            if dy == 0 and dx == 0:
                continue
            off = dy * W + dx
            tap = pltpu.roll(zf, shift=(-off) % HW, axis=1) * m9[t:t + 1, :]
            acc = acc + jnp.dot(wt_ref[t], tap, preferred_element_type=f32)
        return acc

    # ---- flow_make: Conv2d(C->2, 3x3, pad=1, bias=False) + BN(eval, folded) + ReLU ----
    flow = jnp.maximum(conv3x3(wflow_ref, xf) + flow_b_ref[...], 0.0)   # (Cp, HW); rows>=2 are 0

    # ---- flow_warp: F.grid_sample(x, base_grid + flow/[W,H], bilinear, zeros,
    #      align_corners=True), as a separable weighted gather (all f32). ----
    # ix = j + fx*(W-1)/(2W), iy = i + fy*(H-1)/(2H)  (algebraic simplification of the
    # normalized-grid formula with align_corners=True).
    ix = colrow_ref[0:1, :] + flow[0:1, :] * ((W - 1.0) / (2.0 * W))
    iy = colrow_ref[1:2, :] + flow[1:2, :] * ((H - 1.0) / (2.0 * H))
    x0f = jnp.floor(ix)
    y0f = jnp.floor(iy)
    tx = ix - x0f
    ty = iy - y0f
    x0 = x0f.astype(jnp.int32)
    y0 = y0f.astype(jnp.int32)

    # Column / row bilinear weight matrices. The bounded iota only covers [0, W) / [0, H),
    # so out-of-range corners never match -> their weight is 0 -> zeros padding for free.
    iota_w = lax.broadcasted_iota(jnp.int32, (W, HW), 0)
    iota_h = lax.broadcasted_iota(jnp.int32, (H, HW), 0)
    cxw = (jnp.where(iota_w == x0, 1.0 - tx, 0.0) +
           jnp.where(iota_w == x0 + 1, tx, 0.0))                  # (W, HW)
    rw = (jnp.where(iota_h == y0, 1.0 - ty, 0.0) +
          jnp.where(iota_h == y0 + 1, ty, 0.0))                   # (H, HW)

    # Stage 1 (MXU): gather+interpolate along x.  xrw is x pre-reshaped to (Cp*H, W)
    # host-side, so no in-kernel lane->sublane relayout is needed.
    g = jnp.dot(xrw_ref[...], cxw, preferred_element_type=f32)    # (Cp*H, HW)
    # Stage 2 (VPU + sublane reduce): interpolate along y.
    g3 = g.reshape(Cp, H, HW)
    seg_body = jnp.sum(g3 * rw[None, :, :], axis=1)               # (Cp, HW)

    seg_edge = xf - seg_body

    # ---- fine_edge = sigmoid(ResBlk(concat([seg_edge, texture], channel))); the concat is
    #      eliminated by splitting w1 / wsc column-wise host-side ----
    h = jnp.maximum(conv3x3(w1e_ref, seg_edge) + conv3x3(w1t_ref, texf) + bn1_b_ref[...], 0.0)
    h2 = conv3x3(w2_ref, h) + bn2_b_ref[...]
    sc = (jnp.dot(wsce_ref[...], seg_edge, preferred_element_type=f32) +
          jnp.dot(wsct_ref[...], texf, preferred_element_type=f32) + bnsc_b_ref[...])
    fine_edge = jax.nn.sigmoid(jnp.maximum(h2 + sc, 0.0))

    out_ref[...] = seg_body + fine_edge


def squeeze_body_edge(x, texture, packed):
    """x, texture: (B, C, H, W); packed: dict from pack_params (BN folded, channel-padded)."""
    B, C, H, W = x.shape
    Cp = packed["w2_t"].shape[1]
    HW = H * W
    pad_c = Cp - C

    xp = jnp.pad(x.astype(jnp.float32), ((0, 0), (0, pad_c), (0, 0), (0, 0)))
    tp = jnp.pad(texture.astype(jnp.float32), ((0, 0), (0, pad_c), (0, 0), (0, 0)))
    xf = xp.reshape(B, Cp, HW)         # channel-major slab (conv / residual path)
    x_rw = xp.reshape(B, Cp * H, W)    # row-major slab for the separable gather (host reshape)
    texf = tp.reshape(B, Cp, HW)

    # ---- batch-invariant constants, hoisted out of the per-batch grid loop ----
    jj = jnp.tile(jnp.arange(W, dtype=jnp.float32), H)            # jcol of flat pixel p
    ii = jnp.repeat(jnp.arange(H, dtype=jnp.float32), W)          # irow of flat pixel p
    colrow = jnp.stack([jj, ii], axis=0)                          # (2, HW)
    masks = []
    for dy in (-1, 0, 1):
        for dx in (-1, 0, 1):
            m = ((ii + dy >= 0) & (ii + dy <= H - 1) &
                 (jj + dx >= 0) & (jj + dx <= W - 1))
            masks.append(m.astype(jnp.float32))
    mask9 = jnp.stack(masks, axis=0)                              # (9, HW)

    weight_list = [
        packed["wflow_t"], packed["flow_b"],
        packed["w1e_t"], packed["w1t_t"], packed["bn1_b"],
        packed["w2_t"], packed["bn2_b"],
        packed["wsce"], packed["wsct"], packed["bnsc_b"],
    ]

    def const_spec(a):
        nd = a.ndim
        return pl.BlockSpec(a.shape, lambda b, _nd=nd: (0,) * _nd)

    def batch_spec(*dims):
        nd = len(dims)
        return pl.BlockSpec((None,) + dims, lambda b, _nd=nd: (b,) + (0,) * _nd)

    kernel = functools.partial(sbe_kernel, H=H, W=W, Cp=Cp)
    out = pl.pallas_call(
        kernel,
        out_shape=jax.ShapeDtypeStruct((B, Cp, HW), jnp.float32),
        grid_spec=pltpu.PrefetchScalarGridSpec(
            num_scalar_prefetch=0,
            grid=(B,),                                  # batch shards across TCs on v7x
            in_specs=[batch_spec(Cp, HW), batch_spec(Cp * H, W), batch_spec(Cp, HW),
                      const_spec(colrow), const_spec(mask9)]
                     + [const_spec(w) for w in weight_list],
            out_specs=batch_spec(Cp, HW),
        ),
        compiler_params=pltpu.CompilerParams(dimension_semantics=("parallel",)),
    )(xf, x_rw, texf, colrow, mask9, *weight_list)
    return out[:, :C, :].reshape(B, C, H, W)


# ------------------------- host-side parameter preparation -------------------------

def _conv_w_to_taps(w):
    # torch layout (Cout, Cin, kh, kw) -> (kh*kw, Cout, Cin); tap t = ky*3 + kx = (dy+1)*3+(dx+1)
    co, ci, kh, kw = w.shape
    return jnp.transpose(w, (2, 3, 0, 1)).reshape(kh * kw, co, ci)


def _fold_bn(w, bn, eps=1e-5):
    # eval-mode BN folded into the preceding bias-free conv: scale output rows, keep bias.
    gamma, beta, mean, var = bn
    s = gamma / jnp.sqrt(var + eps)
    b = beta - mean * s
    return w * s[:, None, None, None], b


def _pad_conv(w, cout_p, cin_p):
    co, ci, kh, kw = w.shape
    return jnp.pad(w, ((0, cout_p - co), (0, cin_p - ci), (0, 0), (0, 0)))


def _pad_bias(b, cout_p):
    return jnp.pad(b, (0, cout_p - b.shape[0])).reshape(cout_p, 1)


def pack_params(raw, C):
    """Fold BN into conv weights, split concat-input convs, split per-tap, pad channels."""
    Cp = max(8, ((C + 7) // 8) * 8)

    wflow, bflow = _fold_bn(raw["wflow"], raw["bn_flow"])
    wflow_t = _conv_w_to_taps(_pad_conv(wflow, Cp, Cp))           # (9, Cp, Cp)
    flow_b = _pad_bias(bflow, Cp)

    w1, b1 = _fold_bn(raw["w1"], raw["bn1"])
    w1e_t = _conv_w_to_taps(_pad_conv(w1[:, :C], Cp, Cp))         # seg_edge half
    w1t_t = _conv_w_to_taps(_pad_conv(w1[:, C:], Cp, Cp))         # texture half
    bn1_b = _pad_bias(b1, Cp)

    w2, b2 = _fold_bn(raw["w2"], raw["bn2"])
    w2_t = _conv_w_to_taps(_pad_conv(w2, Cp, Cp))
    bn2_b = _pad_bias(b2, Cp)

    wsc, bsc = _fold_bn(raw["wsc"], raw["bnsc"])
    wsce = _pad_conv(wsc[:, :C], Cp, Cp).reshape(Cp, Cp)          # 1x1 conv shortcut halves
    wsct = _pad_conv(wsc[:, C:], Cp, Cp).reshape(Cp, Cp)
    bnsc_b = _pad_bias(bsc, Cp)

    return {
        "wflow_t": wflow_t, "flow_b": flow_b,
        "w1e_t": w1e_t, "w1t_t": w1t_t, "bn1_b": bn1_b,
        "w2_t": w2_t, "bn2_b": bn2_b,
        "wsce": wsce, "wsct": wsct, "bnsc_b": bnsc_b,
    }


def _bn_params(key, ch):
    k1, k2, k3 = jax.random.split(key, 3)
    gamma = 1.0 + 0.1 * jax.random.normal(k1, (ch,), jnp.float32)
    beta = 0.1 * jax.random.normal(k2, (ch,), jnp.float32)
    mean = 0.1 * jax.random.normal(k3, (ch,), jnp.float32)
    var = jnp.ones((ch,), jnp.float32)
    return gamma, beta, mean, var


def init_params(key, C):
    ks = jax.random.split(key, 8)
    return {
        "wflow": 0.1 * jax.random.normal(ks[0], (2, C, 3, 3), jnp.float32),
        "bn_flow": _bn_params(ks[1], 2),
        "w1": 0.1 * jax.random.normal(ks[2], (C, 2 * C, 3, 3), jnp.float32),
        "bn1": _bn_params(ks[3], C),
        "w2": 0.1 * jax.random.normal(ks[4], (C, C, 3, 3), jnp.float32),
        "bn2": _bn_params(ks[5], C),
        "wsc": 0.1 * jax.random.normal(ks[6], (C, 2 * C, 1, 1), jnp.float32),
        "bnsc": _bn_params(ks[7], C),
    }


if __name__ == "__main__":
    key = jax.random.PRNGKey(0)
    B, C, H, W = 2, 4, 16, 16
    kx, kt, kp = jax.random.split(key, 3)
    x = jax.random.normal(kx, (B, C, H, W), jnp.float32)
    texture = jax.random.normal(kt, (B, C, H, W), jnp.float32)
    raw_params = init_params(kp, C)
    packed = pack_params(raw_params, C)   # BN folding / padding / tap & concat splitting host-side

    out = squeeze_body_edge(x, texture, packed)
    out = jax.block_until_ready(out)
    assert out.shape == (B, C, H, W) and out.dtype == jnp.float32
    print("KERNEL_OK")
</pallas_src>

<mosaic_0001>
module attributes {stable_mosaic.version = 11 : i64} {
  func.func @sbe_kernel(%arg0: i32, %arg1: memref<1x8x256xf32, #tpu.memory_space<vmem>>, %arg2: memref<1x128x16xf32, #tpu.memory_space<vmem>>, %arg3: memref<1x8x256xf32, #tpu.memory_space<vmem>>, %arg4: memref<2x256xf32, #tpu.memory_space<vmem>>, %arg5: memref<9x256xf32, #tpu.memory_space<vmem>>, %arg6: memref<9x8x8xf32, #tpu.memory_space<vmem>>, %arg7: memref<8x1xf32, #tpu.memory_space<vmem>>, %arg8: memref<9x8x8xf32, #tpu.memory_space<vmem>>, %arg9: memref<9x8x8xf32, #tpu.memory_space<vmem>>, %arg10: memref<8x1xf32, #tpu.memory_space<vmem>>, %arg11: memref<9x8x8xf32, #tpu.memory_space<vmem>>, %arg12: memref<8x1xf32, #tpu.memory_space<vmem>>, %arg13: memref<8x8xf32, #tpu.memory_space<vmem>>, %arg14: memref<8x8xf32, #tpu.memory_space<vmem>>, %arg15: memref<8x1xf32, #tpu.memory_space<vmem>>, %arg16: memref<1x8x256xf32, #tpu.memory_space<vmem>>) attributes {dimension_semantics = [#tpu.dimension_semantics<parallel>], iteration_bounds = array<i64: 2>, scalar_prefetch = 0 : i64, scratch_operands = 0 : i64, tpu.core_type = #tpu.core_type<tc>, window_params = [{transform_indices = @transform_0, window_bounds = array<i64: 1, 8, 256>}, {transform_indices = @transform_1, window_bounds = array<i64: 1, 128, 16>}, {transform_indices = @transform_2, window_bounds = array<i64: 1, 8, 256>}, {pipeline_mode = #tpu.pipeline_mode<synchronous>, transform_indices = @transform_3, window_bounds = array<i64: 2, 256>}, {pipeline_mode = #tpu.pipeline_mode<synchronous>, transform_indices = @transform_4, window_bounds = array<i64: 9, 256>}, {pipeline_mode = #tpu.pipeline_mode<synchronous>, transform_indices = @transform_5, window_bounds = array<i64: 9, 8, 8>}, {pipeline_mode = #tpu.pipeline_mode<synchronous>, transform_indices = @transform_6, window_bounds = array<i64: 8, 1>}, {pipeline_mode = #tpu.pipeline_mode<synchronous>, transform_indices = @transform_7, window_bounds = array<i64: 9, 8, 8>}, {pipeline_mode = #tpu.pipeline_mode<synchronous>, transform_indices = @transform_8, window_bounds = array<i64: 9, 8, 8>}, {pipeline_mode = #tpu.pipeline_mode<synchronous>, transform_indices = @transform_9, window_bounds = array<i64: 8, 1>}, {pipeline_mode = #tpu.pipeline_mode<synchronous>, transform_indices = @transform_10, window_bounds = array<i64: 9, 8, 8>}, {pipeline_mode = #tpu.pipeline_mode<synchronous>, transform_indices = @transform_11, window_bounds = array<i64: 8, 1>}, {pipeline_mode = #tpu.pipeline_mode<synchronous>, transform_indices = @transform_12, window_bounds = array<i64: 8, 8>}, {pipeline_mode = #tpu.pipeline_mode<synchronous>, transform_indices = @transform_13, window_bounds = array<i64: 8, 8>}, {pipeline_mode = #tpu.pipeline_mode<synchronous>, transform_indices = @transform_14, window_bounds = array<i64: 8, 1>}, {transform_indices = @transform_15, window_bounds = array<i64: 1, 8, 256>}]} {
    %c0 = arith.constant 0 : index
    %c0_0 = arith.constant 0 : index
    %c0_1 = arith.constant 0 : index
    %0 = vector.load %arg1[%c0, %c0_0, %c0_1] : memref<1x8x256xf32, #tpu.memory_space<vmem>>, vector<1x8x256xf32>
    %1 = vector.shape_cast %0 : vector<1x8x256xf32> to vector<8x256xf32>
    %c0_2 = arith.constant 0 : index
    %c0_3 = arith.constant 0 : index
    %c0_4 = arith.constant 0 : index
    %2 = vector.load %arg3[%c0_2, %c0_3, %c0_4] : memref<1x8x256xf32, #tpu.memory_space<vmem>>, vector<1x8x256xf32>
    %3 = vector.shape_cast %2 : vector<1x8x256xf32> to vector<8x256xf32>
    %c0_5 = arith.constant 0 : index
    %c0_6 = arith.constant 0 : index
    %4 = vector.load %arg5[%c0_5, %c0_6] : memref<9x256xf32, #tpu.memory_space<vmem>>, vector<9x256xf32>
    %c4 = arith.constant 4 : index
    %c0_7 = arith.constant 0 : index
    %c0_8 = arith.constant 0 : index
    %5 = vector.load %arg6[%c4, %c0_7, %c0_8] : memref<9x8x8xf32, #tpu.memory_space<vmem>>, vector<1x8x8xf32>
    %6 = vector.shape_cast %5 : vector<1x8x8xf32> to vector<8x8xf32>
    %cst = arith.constant dense<0.000000e+00> : vector<8x256xf32>
    %7 = tpu.matmul %6, %1, %cst {dimension_numbers = #tpu.dot_dimension_numbers<[1], [0], [0], [1], [0, 0, 1, 1], [], []>} : vector<8x8xf32>, vector<8x256xf32>, vector<8x256xf32> -> vector<8x256xf32>
    %c17_i32 = arith.constant 17 : i32
    %8 = tpu.dynamic_rotate %1 by %c17_i32 dim 1 : vector<8x256xf32>, i32 -> vector<8x256xf32>
    %9 = vector.extract_strided_slice %4 {offsets = [0, 0], sizes = [1, 256], strides = [1, 1]} : vector<9x256xf32> to vector<1x256xf32>
    %10 = vector.broadcast %9 : vector<1x256xf32> to vector<8x256xf32>
    %11 = arith.mulf %8, %10 : vector<8x256xf32>
    %c0_9 = arith.constant 0 : index
    %c0_10 = arith.constant 0 : index
    %c0_11 = arith.constant 0 : index
    %12 = vector.load %arg6[%c0_9, %c0_10, %c0_11] : memref<9x8x8xf32, #tpu.memory_space<vmem>>, vector<1x8x8xf32>
    %13 = vector.shape_cast %12 : vector<1x8x8xf32> to vector<8x8xf32>
    %cst_12 = arith.constant dense<0.000000e+00> : vector<8x256xf32>
    %14 = tpu.matmul %13, %11, %cst_12 {dimension_numbers = #tpu.dot_dimension_numbers<[1], [0], [0], [1], [0, 0, 1, 1], [], []>} : vector<8x8xf32>, vector<8x256xf32>, vector<8x256xf32> -> vector<8x256xf32>
    %15 = arith.addf %7, %14 : vector<8x256xf32>
    %c16_i32 = arith.constant 16 : i32
    %16 = tpu.dynamic_rotate %1 by %c16_i32 dim 1 : vector<8x256xf32>, i32 -> vector<8x256xf32>
    %17 = vector.extract_strided_slice %4 {offsets = [1, 0], sizes = [1, 256], strides = [1, 1]} : vector<9x256xf32> to vector<1x256xf32>
    %18 = vector.broadcast %17 : vector<1x256xf32> to vector<8x256xf32>
    %19 = arith.mulf %16, %18 : vector<8x256xf32>
    %c1 = arith.constant 1 : index
    %c0_13 = arith.constant 0 : index
    %c0_14 = arith.constant 0 : index
    %20 = vector.load %arg6[%c1, %c0_13, %c0_14] : memref<9x8x8xf32, #tpu.memory_space<vmem>>, vector<1x8x8xf32>
    %21 = vector.shape_cast %20 : vector<1x8x8xf32> to vector<8x8xf32>
    %cst_15 = arith.constant dense<0.000000e+00> : vector<8x256xf32>
    %22 = tpu.matmul %21, %19, %cst_15 {dimension_numbers = #tpu.dot_dimension_numbers<[1], [0], [0], [1], [0, 0, 1, 1], [], []>} : vector<8x8xf32>, vector<8x256xf32>, vector<8x256xf32> -> vector<8x256xf32>
    %23 = arith.addf %15, %22 : vector<8x256xf32>
    %c15_i32 = arith.constant 15 : i32
    %24 = tpu.dynamic_rotate %1 by %c15_i32 dim 1 : vector<8x256xf32>, i32 -> vector<8x256xf32>
    %25 = vector.extract_strided_slice %4 {offsets = [2, 0], sizes = [1, 256], strides = [1, 1]} : vector<9x256xf32> to vector<1x256xf32>
    %26 = vector.broadcast %25 : vector<1x256xf32> to vector<8x256xf32>
    %27 = arith.mulf %24, %26 : vector<8x256xf32>
    %c2 = arith.constant 2 : index
    %c0_16 = arith.constant 0 : index
    %c0_17 = arith.constant 0 : index
    %28 = vector.load %arg6[%c2, %c0_16, %c0_17] : memref<9x8x8xf32, #tpu.memory_space<vmem>>, vector<1x8x8xf32>
    %29 = vector.shape_cast %28 : vector<1x8x8xf32> to vector<8x8xf32>
    %cst_18 = arith.constant dense<0.000000e+00> : vector<8x256xf32>
    %30 = tpu.matmul %29, %27, %cst_18 {dimension_numbers = #tpu.dot_dimension_numbers<[1], [0], [0], [1], [0, 0, 1, 1], [], []>} : vector<8x8xf32>, vector<8x256xf32>, vector<8x256xf32> -> vector<8x256xf32>
    %31 = arith.addf %23, %30 : vector<8x256xf32>
    %c1_i32 = arith.constant 1 : i32
    %32 = tpu.dynamic_rotate %1 by %c1_i32 dim 1 : vector<8x256xf32>, i32 -> vector<8x256xf32>
    %33 = vector.extract_strided_slice %4 {offsets = [3, 0], sizes = [1, 256], strides = [1, 1]} : vector<9x256xf32> to vector<1x256xf32>
    %34 = vector.broadcast %33 : vector<1x256xf32> to vector<8x256xf32>
    %35 = arith.mulf %32, %34 : vector<8x256xf32>
    %c3 = arith.constant 3 : index
    %c0_19 = arith.constant 0 : index
    %c0_20 = arith.constant 0 : index
    %36 = vector.load %arg6[%c3, %c0_19, %c0_20] : memref<9x8x8xf32, #tpu.memory_space<vmem>>, vector<1x8x8xf32>
    %37 = vector.shape_cast %36 : vector<1x8x8xf32> to vector<8x8xf32>
    %cst_21 = arith.constant dense<0.000000e+00> : vector<8x256xf32>
    %38 = tpu.matmul %37, %35, %cst_21 {dimension_numbers = #tpu.dot_dimension_numbers<[1], [0], [0], [1], [0, 0, 1, 1], [], []>} : vector<8x8xf32>, vector<8x256xf32>, vector<8x256xf32> -> vector<8x256xf32>
    %39 = arith.addf %31, %38 : vector<8x256xf32>
    %c255_i32 = arith.constant 255 : i32
    %40 = tpu.dynamic_rotate %1 by %c255_i32 dim 1 : vector<8x256xf32>, i32 -> vector<8x256xf32>
    %41 = vector.extract_strided_slice %4 {offsets = [5, 0], sizes = [1, 256], strides = [1, 1]} : vector<9x256xf32> to vector<1x256xf32>
    %42 = vector.broadcast %41 : vector<1x256xf32> to vector<8x256xf32>
    %43 = arith.mulf %40, %42 : vector<8x256xf32>
    %c5 = arith.constant 5 : index
    %c0_22 = arith.constant 0 : index
    %c0_23 = arith.constant 0 : index
    %44 = vector.load %arg6[%c5, %c0_22, %c0_23] : memref<9x8x8xf32, #tpu.memory_space<vmem>>, vector<1x8x8xf32>
    %45 = vector.shape_cast %44 : vector<1x8x8xf32> to vector<8x8xf32>
    %cst_24 = arith.constant dense<0.000000e+00> : vector<8x256xf32>
    %46 = tpu.matmul %45, %43, %cst_24 {dimension_numbers = #tpu.dot_dimension_numbers<[1], [0], [0], [1], [0, 0, 1, 1], [], []>} : vector<8x8xf32>, vector<8x256xf32>, vector<8x256xf32> -> vector<8x256xf32>
    %47 = arith.addf %39, %46 : vector<8x256xf32>
    %c241_i32 = arith.constant 241 : i32
    %48 = tpu.dynamic_rotate %1 by %c241_i32 dim 1 : vector<8x256xf32>, i32 -> vector<8x256xf32>
    %49 = vector.extract_strided_slice %4 {offsets = [6, 0], sizes = [1, 256], strides = [1, 1]} : vector<9x256xf32> to vector<1x256xf32>
    %50 = vector.broadcast %49 : vector<1x256xf32> to vector<8x256xf32>
    %51 = arith.mulf %48, %50 : vector<8x256xf32>
    %c6 = arith.constant 6 : index
    %c0_25 = arith.constant 0 : index
    %c0_26 = arith.constant 0 : index
    %52 = vector.load %arg6[%c6, %c0_25, %c0_26] : memref<9x8x8xf32, #tpu.memory_space<vmem>>, vector<1x8x8xf32>
    %53 = vector.shape_cast %52 : vector<1x8x8xf32> to vector<8x8xf32>
    %cst_27 = arith.constant dense<0.000000e+00> : vector<8x256xf32>
    %54 = tpu.matmul %53, %51, %cst_27 {dimension_numbers = #tpu.dot_dimension_numbers<[1], [0], [0], [1], [0, 0, 1, 1], [], []>} : vector<8x8xf32>, vector<8x256xf32>, vector<8x256xf32> -> vector<8x256xf32>
    %55 = arith.addf %47, %54 : vector<8x256xf32>
    %c240_i32 = arith.constant 240 : i32
    %56 = tpu.dynamic_rotate %1 by %c240_i32 dim 1 : vector<8x256xf32>, i32 -> vector<8x256xf32>
    %57 = vector.extract_strided_slice %4 {offsets = [7, 0], sizes = [1, 256], strides = [1, 1]} : vector<9x256xf32> to vector<1x256xf32>
    %58 = vector.broadcast %57 : vector<1x256xf32> to vector<8x256xf32>
    %59 = arith.mulf %56, %58 : vector<8x256xf32>
    %c7 = arith.constant 7 : index
    %c0_28 = arith.constant 0 : index
    %c0_29 = arith.constant 0 : index
    %60 = vector.load %arg6[%c7, %c0_28, %c0_29] : memref<9x8x8xf32, #tpu.memory_space<vmem>>, vector<1x8x8xf32>
    %61 = vector.shape_cast %60 : vector<1x8x8xf32> to vector<8x8xf32>
    %cst_30 = arith.constant dense<0.000000e+00> : vector<8x256xf32>
    %62 = tpu.matmul %61, %59, %cst_30 {dimension_numbers = #tpu.dot_dimension_numbers<[1], [0], [0], [1], [0, 0, 1, 1], [], []>} : vector<8x8xf32>, vector<8x256xf32>, vector<8x256xf32> -> vector<8x256xf32>
    %63 = arith.addf %55, %62 : vector<8x256xf32>
    %c239_i32 = arith.constant 239 : i32
    %64 = tpu.dynamic_rotate %1 by %c239_i32 dim 1 : vector<8x256xf32>, i32 -> vector<8x256xf32>
    %65 = vector.extract_strided_slice %4 {offsets = [8, 0], sizes = [1, 256], strides = [1, 1]} : vector<9x256xf32> to vector<1x256xf32>
    %66 = vector.broadcast %65 : vector<1x256xf32> to vector<8x256xf32>
    %67 = arith.mulf %64, %66 : vector<8x256xf32>
    %c8 = arith.constant 8 : index
    %c0_31 = arith.constant 0 : index
    %c0_32 = arith.constant 0 : index
    %68 = vector.load %arg6[%c8, %c0_31, %c0_32] : memref<9x8x8xf32, #tpu.memory_space<vmem>>, vector<1x8x8xf32>
    %69 = vector.shape_cast %68 : vector<1x8x8xf32> to vector<8x8xf32>
    %cst_33 = arith.constant dense<0.000000e+00> : vector<8x256xf32>
    %70 = tpu.matmul %69, %67, %cst_33 {dimension_numbers = #tpu.dot_dimension_numbers<[1], [0], [0], [1], [0, 0, 1, 1], [], []>} : vector<8x8xf32>, vector<8x256xf32>, vector<8x256xf32> -> vector<8x256xf32>
    %71 = arith.addf %63, %70 : vector<8x256xf32>
    %c0_34 = arith.constant 0 : index
    %c0_35 = arith.constant 0 : index
    %72 = vector.load %arg7[%c0_34, %c0_35] : memref<8x1xf32, #tpu.memory_space<vmem>>, vector<8x1xf32>
    %73 = vector.broadcast %72 : vector<8x1xf32> to vector<8x256xf32>
    %74 = arith.addf %71, %73 : vector<8x256xf32>
    %cst_36 = arith.constant 0.000000e+00 : f32
    %75 = vector.broadcast %cst_36 : f32 to vector<8x256xf32>
    %76 = arith.maximumf %74, %75 : vector<8x256xf32>
    %c0_37 = arith.constant 0 : index
    %c0_38 = arith.constant 0 : index
    %77 = vector.load %arg4[%c0_37, %c0_38] : memref<2x256xf32, #tpu.memory_space<vmem>>, vector<1x256xf32>
    %78 = vector.extract_strided_slice %76 {offsets = [0, 0], sizes = [1, 256], strides = [1, 1]} : vector<8x256xf32> to vector<1x256xf32>
    %cst_39 = arith.constant 4.687500e-01 : f32
    %79 = vector.broadcast %cst_39 : f32 to vector<1x256xf32>
    %80 = arith.mulf %78, %79 : vector<1x256xf32>
    %81 = arith.addf %77, %80 : vector<1x256xf32>
    %c1_40 = arith.constant 1 : index
    %c0_41 = arith.constant 0 : index
    %82 = vector.load %arg4[%c1_40, %c0_41] : memref<2x256xf32, #tpu.memory_space<vmem>>, vector<1x256xf32>
    %83 = vector.extract_strided_slice %76 {offsets = [1, 0], sizes = [1, 256], strides = [1, 1]} : vector<8x256xf32> to vector<1x256xf32>
    %cst_42 = arith.constant 4.687500e-01 : f32
    %84 = vector.broadcast %cst_42 : f32 to vector<1x256xf32>
    %85 = arith.mulf %83, %84 : vector<1x256xf32>
    %86 = arith.addf %82, %85 : vector<1x256xf32>
    %87 = math.floor %81 : vector<1x256xf32>
    %88 = math.floor %86 : vector<1x256xf32>
    %89 = arith.subf %81, %87 : vector<1x256xf32>
    %90 = arith.subf %86, %88 : vector<1x256xf32>
    %91 = arith.fptosi %87 : vector<1x256xf32> to vector<1x256xi32>
    %92 = arith.fptosi %88 : vector<1x256xf32> to vector<1x256xi32>
    %93 = tpu.iota {dimensions = array<i32: 0>} : vector<16x256xi32>
    %94 = tpu.iota {dimensions = array<i32: 0>} : vector<16x256xi32>
    %95 = vector.broadcast %91 : vector<1x256xi32> to vector<16x256xi32>
    %96 = arith.cmpi eq, %93, %95 : vector<16x256xi32>
    %cst_43 = arith.constant 1.000000e+00 : f32
    %97 = vector.broadcast %cst_43 : f32 to vector<1x256xf32>
    %98 = arith.subf %97, %89 : vector<1x256xf32>
    %cst_44 = arith.constant 0.000000e+00 : f32
    %99 = vector.shape_cast %98 : vector<1x256xf32> to vector<1x256xf32>
    %100 = vector.broadcast %99 : vector<1x256xf32> to vector<16x256xf32>
    %101 = vector.broadcast %cst_44 : f32 to vector<16x256xf32>
    %102 = arith.select %96, %100, %101 : vector<16x256xi1>, vector<16x256xf32>
    %c1_i32_45 = arith.constant 1 : i32
    %103 = vector.broadcast %c1_i32_45 : i32 to vector<1x256xi32>
    %104 = arith.addi %91, %103 : vector<1x256xi32>
    %105 = vector.broadcast %104 : vector<1x256xi32> to vector<16x256xi32>
    %106 = arith.cmpi eq, %93, %105 : vector<16x256xi32>
    %cst_46 = arith.constant 0.000000e+00 : f32
    %107 = vector.shape_cast %89 : vector<1x256xf32> to vector<1x256xf32>
    %108 = vector.broadcast %107 : vector<1x256xf32> to vector<16x256xf32>
    %109 = vector.broadcast %cst_46 : f32 to vector<16x256xf32>
    %110 = arith.select %106, %108, %109 : vector<16x256xi1>, vector<16x256xf32>
    %111 = arith.addf %102, %110 : vector<16x256xf32>
    %112 = vector.broadcast %92 : vector<1x256xi32> to vector<16x256xi32>
    %113 = arith.cmpi eq, %94, %112 : vector<16x256xi32>
    %cst_47 = arith.constant 1.000000e+00 : f32
    %114 = vector.broadcast %cst_47 : f32 to vector<1x256xf32>
    %115 = arith.subf %114, %90 : vector<1x256xf32>
    %cst_48 = arith.constant 0.000000e+00 : f32
    %116 = vector.shape_cast %115 : vector<1x256xf32> to vector<1x256xf32>
    %117 = vector.broadcast %116 : vector<1x256xf32> to vector<16x256xf32>
    %118 = vector.broadcast %cst_48 : f32 to vector<16x256xf32>
    %119 = arith.select %113, %117, %118 : vector<16x256xi1>, vector<16x256xf32>
    %c1_i32_49 = arith.constant 1 : i32
    %120 = vector.broadcast %c1_i32_49 : i32 to vector<1x256xi32>
    %121 = arith.addi %92, %120 : vector<1x256xi32>
    %122 = vector.broadcast %121 : vector<1x256xi32> to vector<16x256xi32>
    %123 = arith.cmpi eq, %94, %122 : vector<16x256xi32>
    %cst_50 = arith.constant 0.000000e+00 : f32
    %124 = vector.shape_cast %90 : vector<1x256xf32> to vector<1x256xf32>
    %125 = vector.broadcast %124 : vector<1x256xf32> to vector<16x256xf32>
    %126 = vector.broadcast %cst_50 : f32 to vector<16x256xf32>
    %127 = arith.select %123, %125, %126 : vector<16x256xi1>, vector<16x256xf32>
    %128 = arith.addf %119, %127 : vector<16x256xf32>
    %c0_51 = arith.constant 0 : index
    %c0_52 = arith.constant 0 : index
    %c0_53 = arith.constant 0 : index
    %129 = vector.load %arg2[%c0_51, %c0_52, %c0_53] : memref<1x128x16xf32, #tpu.memory_space<vmem>>, vector<1x128x16xf32>
    %130 = vector.shape_cast %129 : vector<1x128x16xf32> to vector<128x16xf32>
    %cst_54 = arith.constant dense<0.000000e+00> : vector<128x256xf32>
    %131 = tpu.matmul %130, %111, %cst_54 {dimension_numbers = #tpu.dot_dimension_numbers<[1], [0], [0], [1], [0, 0, 1, 1], [], []>} : vector<128x16xf32>, vector<16x256xf32>, vector<128x256xf32> -> vector<128x256xf32>
    %132 = vector.shape_cast %131 : vector<128x256xf32> to vector<8x16x256xf32>
    %133 = vector.shape_cast %128 : vector<16x256xf32> to vector<1x16x256xf32>
    %134 = vector.broadcast %133 : vector<1x16x256xf32> to vector<8x16x256xf32>
    %135 = arith.mulf %132, %134 : vector<8x16x256xf32>
    %cst_55 = arith.constant dense<0.000000e+00> : vector<8x256xf32>
    %136 = vector.multi_reduction <add>, %135, %cst_55 [1] : vector<8x16x256xf32> to vector<8x256xf32>
    %137 = arith.subf %1, %136 : vector<8x256xf32>
    %c4_56 = arith.constant 4 : index
    %c0_57 = arith.constant 0 : index
    %c0_58 = arith.constant 0 : index
    %138 = vector.load %arg8[%c4_56, %c0_57, %c0_58] : memref<9x8x8xf32, #tpu.memory_space<vmem>>, vector<1x8x8xf32>
    %139 = vector.shape_cast %138 : vector<1x8x8xf32> to vector<8x8xf32>
    %cst_59 = arith.constant dense<0.000000e+00> : vector<8x256xf32>
    %140 = tpu.matmul %139, %137, %cst_59 {dimension_numbers = #tpu.dot_dimension_numbers<[1], [0], [0], [1], [0, 0, 1, 1], [], []>} : vector<8x8xf32>, vector<8x256xf32>, vector<8x256xf32> -> vector<8x256xf32>
    %c17_i32_60 = arith.constant 17 : i32
    %141 = tpu.dynamic_rotate %137 by %c17_i32_60 dim 1 : vector<8x256xf32>, i32 -> vector<8x256xf32>
    %142 = vector.extract_strided_slice %4 {offsets = [0, 0], sizes = [1, 256], strides = [1, 1]} : vector<9x256xf32> to vector<1x256xf32>
    %143 = vector.broadcast %142 : vector<1x256xf32> to vector<8x256xf32>
    %144 = arith.mulf %141, %143 : vector<8x256xf32>
    %c0_61 = arith.constant 0 : index
    %c0_62 = arith.constant 0 : index
    %c0_63 = arith.constant 0 : index
    %145 = vector.load %arg8[%c0_61, %c0_62, %c0_63] : memref<9x8x8xf32, #tpu.memory_space<vmem>>, vector<1x8x8xf32>
    %146 = vector.shape_cast %145 : vector<1x8x8xf32> to vector<8x8xf32>
    %cst_64 = arith.constant dense<0.000000e+00> : vector<8x256xf32>
    %147 = tpu.matmul %146, %144, %cst_64 {dimension_numbers = #tpu.dot_dimension_numbers<[1], [0], [0], [1], [0, 0, 1, 1], [], []>} : vector<8x8xf32>, vector<8x256xf32>, vector<8x256xf32> -> vector<8x256xf32>
    %148 = arith.addf %140, %147 : vector<8x256xf32>
    %c16_i32_65 = arith.constant 16 : i32
    %149 = tpu.dynamic_rotate %137 by %c16_i32_65 dim 1 : vector<8x256xf32>, i32 -> vector<8x256xf32>
    %150 = vector.extract_strided_slice %4 {offsets = [1, 0], sizes = [1, 256], strides = [1, 1]} : vector<9x256xf32> to vector<1x256xf32>
    %151 = vector.broadcast %150 : vector<1x256xf32> to vector<8x256xf32>
    %152 = arith.mulf %149, %151 : vector<8x256xf32>
    %c1_66 = arith.constant 1 : index
    %c0_67 = arith.constant 0 : index
    %c0_68 = arith.constant 0 : index
    %153 = vector.load %arg8[%c1_66, %c0_67, %c0_68] : memref<9x8x8xf32, #tpu.memory_space<vmem>>, vector<1x8x8xf32>
    %154 = vector.shape_cast %153 : vector<1x8x8xf32> to vector<8x8xf32>
    %cst_69 = arith.constant dense<0.000000e+00> : vector<8x256xf32>
    %155 = tpu.matmul %154, %152, %cst_69 {dimension_numbers = #tpu.dot_dimension_numbers<[1], [0], [0], [1], [0, 0, 1, 1], [], []>} : vector<8x8xf32>, vector<8x256xf32>, vector<8x256xf32> -> vector<8x256xf32>
    %156 = arith.addf %148, %155 : vector<8x256xf32>
    %c15_i32_70 = arith.constant 15 : i32
    %157 = tpu.dynamic_rotate %137 by %c15_i32_70 dim 1 : vector<8x256xf32>, i32 -> vector<8x256xf32>
    %158 = vector.extract_strided_slice %4 {offsets = [2, 0], sizes = [1, 256], strides = [1, 1]} : vector<9x256xf32> to vector<1x256xf32>
    %159 = vector.broadcast %158 : vector<1x256xf32> to vector<8x256xf32>
    %160 = arith.mulf %157, %159 : vector<8x256xf32>
    %c2_71 = arith.constant 2 : index
    %c0_72 = arith.constant 0 : index
    %c0_73 = arith.constant 0 : index
    %161 = vector.load %arg8[%c2_71, %c0_72, %c0_73] : memref<9x8x8xf32, #tpu.memory_space<vmem>>, vector<1x8x8xf32>
    %162 = vector.shape_cast %161 : vector<1x8x8xf32> to vector<8x8xf32>
    %cst_74 = arith.constant dense<0.000000e+00> : vector<8x256xf32>
    %163 = tpu.matmul %162, %160, %cst_74 {dimension_numbers = #tpu.dot_dimension_numbers<[1], [0], [0], [1], [0, 0, 1, 1], [], []>} : vector<8x8xf32>, vector<8x256xf32>, vector<8x256xf32> -> vector<8x256xf32>
    %164 = arith.addf %156, %163 : vector<8x256xf32>
    %c1_i32_75 = arith.constant 1 : i32
    %165 = tpu.dynamic_rotate %137 by %c1_i32_75 dim 1 : vector<8x256xf32>, i32 -> vector<8x256xf32>
    %166 = vector.extract_strided_slice %4 {offsets = [3, 0], sizes = [1, 256], strides = [1, 1]} : vector<9x256xf32> to vector<1x256xf32>
    %167 = vector.broadcast %166 : vector<1x256xf32> to vector<8x256xf32>
    %168 = arith.mulf %165, %167 : vector<8x256xf32>
    %c3_76 = arith.constant 3 : index
    %c0_77 = arith.constant 0 : index
    %c0_78 = arith.constant 0 : index
    %169 = vector.load %arg8[%c3_76, %c0_77, %c0_78] : memref<9x8x8xf32, #tpu.memory_space<vmem>>, vector<1x8x8xf32>
    %170 = vector.shape_cast %169 : vector<1x8x8xf32> to vector<8x8xf32>
    %cst_79 = arith.constant dense<0.000000e+00> : vector<8x256xf32>
    %171 = tpu.matmul %170, %168, %cst_79 {dimension_numbers = #tpu.dot_dimension_numbers<[1], [0], [0], [1], [0, 0, 1, 1], [], []>} : vector<8x8xf32>, vector<8x256xf32>, vector<8x256xf32> -> vector<8x256xf32>
    %172 = arith.addf %164, %171 : vector<8x256xf32>
    %c255_i32_80 = arith.constant 255 : i32
    %173 = tpu.dynamic_rotate %137 by %c255_i32_80 dim 1 : vector<8x256xf32>, i32 -> vector<8x256xf32>
    %174 = vector.extract_strided_slice %4 {offsets = [5, 0], sizes = [1, 256], strides = [1, 1]} : vector<9x256xf32> to vector<1x256xf32>
    %175 = vector.broadcast %174 : vector<1x256xf32> to vector<8x256xf32>
    %176 = arith.mulf %173, %175 : vector<8x256xf32>
    %c5_81 = arith.constant 5 : index
    %c0_82 = arith.constant 0 : index
    %c0_83 = arith.constant 0 : index
    %177 = vector.load %arg8[%c5_81, %c0_82, %c0_83] : memref<9x8x8xf32, #tpu.memory_space<vmem>>, vector<1x8x8xf32>
    %178 = vector.shape_cast %177 : vector<1x8x8xf32> to vector<8x8xf32>
    %cst_84 = arith.constant dense<0.000000e+00> : vector<8x256xf32>
    %179 = tpu.matmul %178, %176, %cst_84 {dimension_numbers = #tpu.dot_dimension_numbers<[1], [0], [0], [1], [0, 0, 1, 1], [], []>} : vector<8x8xf32>, vector<8x256xf32>, vector<8x256xf32> -> vector<8x256xf32>
    %180 = arith.addf %172, %179 : vector<8x256xf32>
    %c241_i32_85 = arith.constant 241 : i32
    %181 = tpu.dynamic_rotate %137 by %c241_i32_85 dim 1 : vector<8x256xf32>, i32 -> vector<8x256xf32>
    %182 = vector.extract_strided_slice %4 {offsets = [6, 0], sizes = [1, 256], strides = [1, 1]} : vector<9x256xf32> to vector<1x256xf32>
    %183 = vector.broadcast %182 : vector<1x256xf32> to vector<8x256xf32>
    %184 = arith.mulf %181, %183 : vector<8x256xf32>
    %c6_86 = arith.constant 6 : index
    %c0_87 = arith.constant 0 : index
    %c0_88 = arith.constant 0 : index
    %185 = vector.load %arg8[%c6_86, %c0_87, %c0_88] : memref<9x8x8xf32, #tpu.memory_space<vmem>>, vector<1x8x8xf32>
    %186 = vector.shape_cast %185 : vector<1x8x8xf32> to vector<8x8xf32>
    %cst_89 = arith.constant dense<0.000000e+00> : vector<8x256xf32>
    %187 = tpu.matmul %186, %184, %cst_89 {dimension_numbers = #tpu.dot_dimension_numbers<[1], [0], [0], [1], [0, 0, 1, 1], [], []>} : vector<8x8xf32>, vector<8x256xf32>, vector<8x256xf32> -> vector<8x256xf32>
    %188 = arith.addf %180, %187 : vector<8x256xf32>
    %c240_i32_90 = arith.constant 240 : i32
    %189 = tpu.dynamic_rotate %137 by %c240_i32_90 dim 1 : vector<8x256xf32>, i32 -> vector<8x256xf32>
    %190 = vector.extract_strided_slice %4 {offsets = [7, 0], sizes = [1, 256], strides = [1, 1]} : vector<9x256xf32> to vector<1x256xf32>
    %191 = vector.broadcast %190 : vector<1x256xf32> to vector<8x256xf32>
    %192 = arith.mulf %189, %191 : vector<8x256xf32>
    %c7_91 = arith.constant 7 : index
    %c0_92 = arith.constant 0 : index
    %c0_93 = arith.constant 0 : index
    %193 = vector.load %arg8[%c7_91, %c0_92, %c0_93] : memref<9x8x8xf32, #tpu.memory_space<vmem>>, vector<1x8x8xf32>
    %194 = vector.shape_cast %193 : vector<1x8x8xf32> to vector<8x8xf32>
    %cst_94 = arith.constant dense<0.000000e+00> : vector<8x256xf32>
    %195 = tpu.matmul %194, %192, %cst_94 {dimension_numbers = #tpu.dot_dimension_numbers<[1], [0], [0], [1], [0, 0, 1, 1], [], []>} : vector<8x8xf32>, vector<8x256xf32>, vector<8x256xf32> -> vector<8x256xf32>
    %196 = arith.addf %188, %195 : vector<8x256xf32>
    %c239_i32_95 = arith.constant 239 : i32
    %197 = tpu.dynamic_rotate %137 by %c239_i32_95 dim 1 : vector<8x256xf32>, i32 -> vector<8x256xf32>
    %198 = vector.extract_strided_slice %4 {offsets = [8, 0], sizes = [1, 256], strides = [1, 1]} : vector<9x256xf32> to vector<1x256xf32>
    %199 = vector.broadcast %198 : vector<1x256xf32> to vector<8x256xf32>
    %200 = arith.mulf %197, %199 : vector<8x256xf32>
    %c8_96 = arith.constant 8 : index
    %c0_97 = arith.constant 0 : index
    %c0_98 = arith.constant 0 : index
    %201 = vector.load %arg8[%c8_96, %c0_97, %c0_98] : memref<9x8x8xf32, #tpu.memory_space<vmem>>, vector<1x8x8xf32>
    %202 = vector.shape_cast %201 : vector<1x8x8xf32> to vector<8x8xf32>
    %cst_99 = arith.constant dense<0.000000e+00> : vector<8x256xf32>
    %203 = tpu.matmul %202, %200, %cst_99 {dimension_numbers = #tpu.dot_dimension_numbers<[1], [0], [0], [1], [0, 0, 1, 1], [], []>} : vector<8x8xf32>, vector<8x256xf32>, vector<8x256xf32> -> vector<8x256xf32>
    %204 = arith.addf %196, %203 : vector<8x256xf32>
    %c4_100 = arith.constant 4 : index
    %c0_101 = arith.constant 0 : index
    %c0_102 = arith.constant 0 : index
    %205 = vector.load %arg9[%c4_100, %c0_101, %c0_102] : memref<9x8x8xf32, #tpu.memory_space<vmem>>, vector<1x8x8xf32>
    %206 = vector.shape_cast %205 : vector<1x8x8xf32> to vector<8x8xf32>
    %cst_103 = arith.constant dense<0.000000e+00> : vector<8x256xf32>
    %207 = tpu.matmul %206, %3, %cst_103 {dimension_numbers = #tpu.dot_dimension_numbers<[1], [0], [0], [1], [0, 0, 1, 1], [], []>} : vector<8x8xf32>, vector<8x256xf32>, vector<8x256xf32> -> vector<8x256xf32>
    %c17_i32_104 = arith.constant 17 : i32
    %208 = tpu.dynamic_rotate %3 by %c17_i32_104 dim 1 : vector<8x256xf32>, i32 -> vector<8x256xf32>
    %209 = vector.extract_strided_slice %4 {offsets = [0, 0], sizes = [1, 256], strides = [1, 1]} : vector<9x256xf32> to vector<1x256xf32>
    %210 = vector.broadcast %209 : vector<1x256xf32> to vector<8x256xf32>
    %211 = arith.mulf %208, %210 : vector<8x256xf32>
    %c0_105 = arith.constant 0 : index
    %c0_106 = arith.constant 0 : index
    %c0_107 = arith.constant 0 : index
    %212 = vector.load %arg9[%c0_105, %c0_106, %c0_107] : memref<9x8x8xf32, #tpu.memory_space<vmem>>, vector<1x8x8xf32>
    %213 = vector.shape_cast %212 : vector<1x8x8xf32> to vector<8x8xf32>
    %cst_108 = arith.constant dense<0.000000e+00> : vector<8x256xf32>
    %214 = tpu.matmul %213, %211, %cst_108 {dimension_numbers = #tpu.dot_dimension_numbers<[1], [0], [0], [1], [0, 0, 1, 1], [], []>} : vector<8x8xf32>, vector<8x256xf32>, vector<8x256xf32> -> vector<8x256xf32>
    %215 = arith.addf %207, %214 : vector<8x256xf32>
    %c16_i32_109 = arith.constant 16 : i32
    %216 = tpu.dynamic_rotate %3 by %c16_i32_109 dim 1 : vector<8x256xf32>, i32 -> vector<8x256xf32>
    %217 = vector.extract_strided_slice %4 {offsets = [1, 0], sizes = [1, 256], strides = [1, 1]} : vector<9x256xf32> to vector<1x256xf32>
    %218 = vector.broadcast %217 : vector<1x256xf32> to vector<8x256xf32>
    %219 = arith.mulf %216, %218 : vector<8x256xf32>
    %c1_110 = arith.constant 1 : index
    %c0_111 = arith.constant 0 : index
    %c0_112 = arith.constant 0 : index
    %220 = vector.load %arg9[%c1_110, %c0_111, %c0_112] : memref<9x8x8xf32, #tpu.memory_space<vmem>>, vector<1x8x8xf32>
    %221 = vector.shape_cast %220 : vector<1x8x8xf32> to vector<8x8xf32>
    %cst_113 = arith.constant dense<0.000000e+00> : vector<8x256xf32>
    %222 = tpu.matmul %221, %219, %cst_113 {dimension_numbers = #tpu.dot_dimension_numbers<[1], [0], [0], [1], [0, 0, 1, 1], [], []>} : vector<8x8xf32>, vector<8x256xf32>, vector<8x256xf32> -> vector<8x256xf32>
    %223 = arith.addf %215, %222 : vector<8x256xf32>
    %c15_i32_114 = arith.constant 15 : i32
    %224 = tpu.dynamic_rotate %3 by %c15_i32_114 dim 1 : vector<8x256xf32>, i32 -> vector<8x256xf32>
    %225 = vector.extract_strided_slice %4 {offsets = [2, 0], sizes = [1, 256], strides = [1, 1]} : vector<9x256xf32> to vector<1x256xf32>
    %226 = vector.broadcast %225 : vector<1x256xf32> to vector<8x256xf32>
    %227 = arith.mulf %224, %226 : vector<8x256xf32>
    %c2_115 = arith.constant 2 : index
    %c0_116 = arith.constant 0 : index
    %c0_117 = arith.constant 0 : index
    %228 = vector.load %arg9[%c2_115, %c0_116, %c0_117] : memref<9x8x8xf32, #tpu.memory_space<vmem>>, vector<1x8x8xf32>
    %229 = vector.shape_cast %228 : vector<1x8x8xf32> to vector<8x8xf32>
    %cst_118 = arith.constant dense<0.000000e+00> : vector<8x256xf32>
    %230 = tpu.matmul %229, %227, %cst_118 {dimension_numbers = #tpu.dot_dimension_numbers<[1], [0], [0], [1], [0, 0, 1, 1], [], []>} : vector<8x8xf32>, vector<8x256xf32>, vector<8x256xf32> -> vector<8x256xf32>
    %231 = arith.addf %223, %230 : vector<8x256xf32>
    %c1_i32_119 = arith.constant 1 : i32
    %232 = tpu.dynamic_rotate %3 by %c1_i32_119 dim 1 : vector<8x256xf32>, i32 -> vector<8x256xf32>
    %233 = vector.extract_strided_slice %4 {offsets = [3, 0], sizes = [1, 256], strides = [1, 1]} : vector<9x256xf32> to vector<1x256xf32>
    %234 = vector.broadcast %233 : vector<1x256xf32> to vector<8x256xf32>
    %235 = arith.mulf %232, %234 : vector<8x256xf32>
    %c3_120 = arith.constant 3 : index
    %c0_121 = arith.constant 0 : index
    %c0_122 = arith.constant 0 : index
    %236 = vector.load %arg9[%c3_120, %c0_121, %c0_122] : memref<9x8x8xf32, #tpu.memory_space<vmem>>, vector<1x8x8xf32>
    %237 = vector.shape_cast %236 : vector<1x8x8xf32> to vector<8x8xf32>
    %cst_123 = arith.constant dense<0.000000e+00> : vector<8x256xf32>
    %238 = tpu.matmul %237, %235, %cst_123 {dimension_numbers = #tpu.dot_dimension_numbers<[1], [0], [0], [1], [0, 0, 1, 1], [], []>} : vector<8x8xf32>, vector<8x256xf32>, vector<8x256xf32> -> vector<8x256xf32>
    %239 = arith.addf %231, %238 : vector<8x256xf32>
    %c255_i32_124 = arith.constant 255 : i32
    %240 = tpu.dynamic_rotate %3 by %c255_i32_124 dim 1 : vector<8x256xf32>, i32 -> vector<8x256xf32>
    %241 = vector.extract_strided_slice %4 {offsets = [5, 0], sizes = [1, 256], strides = [1, 1]} : vector<9x256xf32> to vector<1x256xf32>
    %242 = vector.broadcast %241 : vector<1x256xf32> to vector<8x256xf32>
    %243 = arith.mulf %240, %242 : vector<8x256xf32>
    %c5_125 = arith.constant 5 : index
    %c0_126 = arith.constant 0 : index
    %c0_127 = arith.constant 0 : index
    %244 = vector.load %arg9[%c5_125, %c0_126, %c0_127] : memref<9x8x8xf32, #tpu.memory_space<vmem>>, vector<1x8x8xf32>
    %245 = vector.shape_cast %244 : vector<1x8x8xf32> to vector<8x8xf32>
    %cst_128 = arith.constant dense<0.000000e+00> : vector<8x256xf32>
    %246 = tpu.matmul %245, %243, %cst_128 {dimension_numbers = #tpu.dot_dimension_numbers<[1], [0], [0], [1], [0, 0, 1, 1], [], []>} : vector<8x8xf32>, vector<8x256xf32>, vector<8x256xf32> -> vector<8x256xf32>
    %247 = arith.addf %239, %246 : vector<8x256xf32>
    %c241_i32_129 = arith.constant 241 : i32
    %248 = tpu.dynamic_rotate %3 by %c241_i32_129 dim 1 : vector<8x256xf32>, i32 -> vector<8x256xf32>
    %249 = vector.extract_strided_slice %4 {offsets = [6, 0], sizes = [1, 256], strides = [1, 1]} : vector<9x256xf32> to vector<1x256xf32>
    %250 = vector.broadcast %249 : vector<1x256xf32> to vector<8x256xf32>
    %251 = arith.mulf %248, %250 : vector<8x256xf32>
    %c6_130 = arith.constant 6 : index
    %c0_131 = arith.constant 0 : index
    %c0_132 = arith.constant 0 : index
    %252 = vector.load %arg9[%c6_130, %c0_131, %c0_132] : memref<9x8x8xf32, #tpu.memory_space<vmem>>, vector<1x8x8xf32>
    %253 = vector.shape_cast %252 : vector<1x8x8xf32> to vector<8x8xf32>
    %cst_133 = arith.constant dense<0.000000e+00> : vector<8x256xf32>
    %254 = tpu.matmul %253, %251, %cst_133 {dimension_numbers = #tpu.dot_dimension_numbers<[1], [0], [0], [1], [0, 0, 1, 1], [], []>} : vector<8x8xf32>, vector<8x256xf32>, vector<8x256xf32> -> vector<8x256xf32>
    %255 = arith.addf %247, %254 : vector<8x256xf32>
    %c240_i32_134 = arith.constant 240 : i32
    %256 = tpu.dynamic_rotate %3 by %c240_i32_134 dim 1 : vector<8x256xf32>, i32 -> vector<8x256xf32>
    %257 = vector.extract_strided_slice %4 {offsets = [7, 0], sizes = [1, 256], strides = [1, 1]} : vector<9x256xf32> to vector<1x256xf32>
    %258 = vector.broadcast %257 : vector<1x256xf32> to vector<8x256xf32>
    %259 = arith.mulf %256, %258 : vector<8x256xf32>
    %c7_135 = arith.constant 7 : index
    %c0_136 = arith.constant 0 : index
    %c0_137 = arith.constant 0 : index
    %260 = vector.load %arg9[%c7_135, %c0_136, %c0_137] : memref<9x8x8xf32, #tpu.memory_space<vmem>>, vector<1x8x8xf32>
    %261 = vector.shape_cast %260 : vector<1x8x8xf32> to vector<8x8xf32>
    %cst_138 = arith.constant dense<0.000000e+00> : vector<8x256xf32>
    %262 = tpu.matmul %261, %259, %cst_138 {dimension_numbers = #tpu.dot_dimension_numbers<[1], [0], [0], [1], [0, 0, 1, 1], [], []>} : vector<8x8xf32>, vector<8x256xf32>, vector<8x256xf32> -> vector<8x256xf32>
    %263 = arith.addf %255, %262 : vector<8x256xf32>
    %c239_i32_139 = arith.constant 239 : i32
    %264 = tpu.dynamic_rotate %3 by %c239_i32_139 dim 1 : vector<8x256xf32>, i32 -> vector<8x256xf32>
    %265 = vector.extract_strided_slice %4 {offsets = [8, 0], sizes = [1, 256], strides = [1, 1]} : vector<9x256xf32> to vector<1x256xf32>
    %266 = vector.broadcast %265 : vector<1x256xf32> to vector<8x256xf32>
    %267 = arith.mulf %264, %266 : vector<8x256xf32>
    %c8_140 = arith.constant 8 : index
    %c0_141 = arith.constant 0 : index
    %c0_142 = arith.constant 0 : index
    %268 = vector.load %arg9[%c8_140, %c0_141, %c0_142] : memref<9x8x8xf32, #tpu.memory_space<vmem>>, vector<1x8x8xf32>
    %269 = vector.shape_cast %268 : vector<1x8x8xf32> to vector<8x8xf32>
    %cst_143 = arith.constant dense<0.000000e+00> : vector<8x256xf32>
    %270 = tpu.matmul %269, %267, %cst_143 {dimension_numbers = #tpu.dot_dimension_numbers<[1], [0], [0], [1], [0, 0, 1, 1], [], []>} : vector<8x8xf32>, vector<8x256xf32>, vector<8x256xf32> -> vector<8x256xf32>
    %271 = arith.addf %263, %270 : vector<8x256xf32>
    %272 = arith.addf %204, %271 : vector<8x256xf32>
    %c0_144 = arith.constant 0 : index
    %c0_145 = arith.constant 0 : index
    %273 = vector.load %arg10[%c0_144, %c0_145] : memref<8x1xf32, #tpu.memory_space<vmem>>, vector<8x1xf32>
    %274 = vector.broadcast %273 : vector<8x1xf32> to vector<8x256xf32>
    %275 = arith.addf %272, %274 : vector<8x256xf32>
    %cst_146 = arith.constant 0.000000e+00 : f32
    %276 = vector.broadcast %cst_146 : f32 to vector<8x256xf32>
    %277 = arith.maximumf %275, %276 : vector<8x256xf32>
    %c4_147 = arith.constant 4 : index
    %c0_148 = arith.constant 0 : index
    %c0_149 = arith.constant 0 : index
    %278 = vector.load %arg11[%c4_147, %c0_148, %c0_149] : memref<9x8x8xf32, #tpu.memory_space<vmem>>, vector<1x8x8xf32>
    %279 = vector.shape_cast %278 : vector<1x8x8xf32> to vector<8x8xf32>
    %cst_150 = arith.constant dense<0.000000e+00> : vector<8x256xf32>
    %280 = tpu.matmul %279, %277, %cst_150 {dimension_numbers = #tpu.dot_dimension_numbers<[1], [0], [0], [1], [0, 0, 1, 1], [], []>} : vector<8x8xf32>, vector<8x256xf32>, vector<8x256xf32> -> vector<8x256xf32>
    %c17_i32_151 = arith.constant 17 : i32
    %281 = tpu.dynamic_rotate %277 by %c17_i32_151 dim 1 : vector<8x256xf32>, i32 -> vector<8x256xf32>
    %282 = vector.extract_strided_slice %4 {offsets = [0, 0], sizes = [1, 256], strides = [1, 1]} : vector<9x256xf32> to vector<1x256xf32>
    %283 = vector.broadcast %282 : vector<1x256xf32> to vector<8x256xf32>
    %284 = arith.mulf %281, %283 : vector<8x256xf32>
    %c0_152 = arith.constant 0 : index
    %c0_153 = arith.constant 0 : index
    %c0_154 = arith.constant 0 : index
    %285 = vector.load %arg11[%c0_152, %c0_153, %c0_154] : memref<9x8x8xf32, #tpu.memory_space<vmem>>, vector<1x8x8xf32>
    %286 = vector.shape_cast %285 : vector<1x8x8xf32> to vector<8x8xf32>
    %cst_155 = arith.constant dense<0.000000e+00> : vector<8x256xf32>
    %287 = tpu.matmul %286, %284, %cst_155 {dimension_numbers = #tpu.dot_dimension_numbers<[1], [0], [0], [1], [0, 0, 1, 1], [], []>} : vector<8x8xf32>, vector<8x256xf32>, vector<8x256xf32> -> vector<8x256xf32>
    %288 = arith.addf %280, %287 : vector<8x256xf32>
    %c16_i32_156 = arith.constant 16 : i32
    %289 = tpu.dynamic_rotate %277 by %c16_i32_156 dim 1 : vector<8x256xf32>, i32 -> vector<8x256xf32>
    %290 = vector.extract_strided_slice %4 {offsets = [1, 0], sizes = [1, 256], strides = [1, 1]} : vector<9x256xf32> to vector<1x256xf32>
    %291 = vector.broadcast %290 : vector<1x256xf32> to vector<8x256xf32>
    %292 = arith.mulf %289, %291 : vector<8x256xf32>
    %c1_157 = arith.constant 1 : index
    %c0_158 = arith.constant 0 : index
    %c0_159 = arith.constant 0 : index
    %293 = vector.load %arg11[%c1_157, %c0_158, %c0_159] : memref<9x8x8xf32, #tpu.memory_space<vmem>>, vector<1x8x8xf32>
    %294 = vector.shape_cast %293 : vector<1x8x8xf32> to vector<8x8xf32>
    %cst_160 = arith.constant dense<0.000000e+00> : vector<8x256xf32>
    %295 = tpu.matmul %294, %292, %cst_160 {dimension_numbers = #tpu.dot_dimension_numbers<[1], [0], [0], [1], [0, 0, 1, 1], [], []>} : vector<8x8xf32>, vector<8x256xf32>, vector<8x256xf32> -> vector<8x256xf32>
    %296 = arith.addf %288, %295 : vector<8x256xf32>
    %c15_i32_161 = arith.constant 15 : i32
    %297 = tpu.dynamic_rotate %277 by %c15_i32_161 dim 1 : vector<8x256xf32>, i32 -> vector<8x256xf32>
    %298 = vector.extract_strided_slice %4 {offsets = [2, 0], sizes = [1, 256], strides = [1, 1]} : vector<9x256xf32> to vector<1x256xf32>
    %299 = vector.broadcast %298 : vector<1x256xf32> to vector<8x256xf32>
    %300 = arith.mulf %297, %299 : vector<8x256xf32>
    %c2_162 = arith.constant 2 : index
    %c0_163 = arith.constant 0 : index
    %c0_164 = arith.constant 0 : index
    %301 = vector.load %arg11[%c2_162, %c0_163, %c0_164] : memref<9x8x8xf32, #tpu.memory_space<vmem>>, vector<1x8x8xf32>
    %302 = vector.shape_cast %301 : vector<1x8x8xf32> to vector<8x8xf32>
    %cst_165 = arith.constant dense<0.000000e+00> : vector<8x256xf32>
    %303 = tpu.matmul %302, %300, %cst_165 {dimension_numbers = #tpu.dot_dimension_numbers<[1], [0], [0], [1], [0, 0, 1, 1], [], []>} : vector<8x8xf32>, vector<8x256xf32>, vector<8x256xf32> -> vector<8x256xf32>
    %304 = arith.addf %296, %303 : vector<8x256xf32>
    %c1_i32_166 = arith.constant 1 : i32
    %305 = tpu.dynamic_rotate %277 by %c1_i32_166 dim 1 : vector<8x256xf32>, i32 -> vector<8x256xf32>
    %306 = vector.extract_strided_slice %4 {offsets = [3, 0], sizes = [1, 256], strides = [1, 1]} : vector<9x256xf32> to vector<1x256xf32>
    %307 = vector.broadcast %306 : vector<1x256xf32> to vector<8x256xf32>
    %308 = arith.mulf %305, %307 : vector<8x256xf32>
    %c3_167 = arith.constant 3 : index
    %c0_168 = arith.constant 0 : index
    %c0_169 = arith.constant 0 : index
    %309 = vector.load %arg11[%c3_167, %c0_168, %c0_169] : memref<9x8x8xf32, #tpu.memory_space<vmem>>, vector<1x8x8xf32>
    %310 = vector.shape_cast %309 : vector<1x8x8xf32> to vector<8x8xf32>
    %cst_170 = arith.constant dense<0.000000e+00> : vector<8x256xf32>
    %311 = tpu.matmul %310, %308, %cst_170 {dimension_numbers = #tpu.dot_dimension_numbers<[1], [0], [0], [1], [0, 0, 1, 1], [], []>} : vector<8x8xf32>, vector<8x256xf32>, vector<8x256xf32> -> vector<8x256xf32>
    %312 = arith.addf %304, %311 : vector<8x256xf32>
    %c255_i32_171 = arith.constant 255 : i32
    %313 = tpu.dynamic_rotate %277 by %c255_i32_171 dim 1 : vector<8x256xf32>, i32 -> vector<8x256xf32>
    %314 = vector.extract_strided_slice %4 {offsets = [5, 0], sizes = [1, 256], strides = [1, 1]} : vector<9x256xf32> to vector<1x256xf32>
    %315 = vector.broadcast %314 : vector<1x256xf32> to vector<8x256xf32>
    %316 = arith.mulf %313, %315 : vector<8x256xf32>
    %c5_172 = arith.constant 5 : index
    %c0_173 = arith.constant 0 : index
    %c0_174 = arith.constant 0 : index
    %317 = vector.load %arg11[%c5_172, %c0_173, %c0_174] : memref<9x8x8xf32, #tpu.memory_space<vmem>>, vector<1x8x8xf32>
    %318 = vector.shape_cast %317 : vector<1x8x8xf32> to vector<8x8xf32>
    %cst_175 = arith.constant dense<0.000000e+00> : vector<8x256xf32>
    %319 = tpu.matmul %318, %316, %cst_175 {dimension_numbers = #tpu.dot_dimension_numbers<[1], [0], [0], [1], [0, 0, 1, 1], [], []>} : vector<8x8xf32>, vector<8x256xf32>, vector<8x256xf32> -> vector<8x256xf32>
    %320 = arith.addf %312, %319 : vector<8x256xf32>
    %c241_i32_176 = arith.constant 241 : i32
    %321 = tpu.dynamic_rotate %277 by %c241_i32_176 dim 1 : vector<8x256xf32>, i32 -> vector<8x256xf32>
    %322 = vector.extract_strided_slice %4 {offsets = [6, 0], sizes = [1, 256], strides = [1, 1]} : vector<9x256xf32> to vector<1x256xf32>
    %323 = vector.broadcast %322 : vector<1x256xf32> to vector<8x256xf32>
    %324 = arith.mulf %321, %323 : vector<8x256xf32>
    %c6_177 = arith.constant 6 : index
    %c0_178 = arith.constant 0 : index
    %c0_179 = arith.constant 0 : index
    %325 = vector.load %arg11[%c6_177, %c0_178, %c0_179] : memref<9x8x8xf32, #tpu.memory_space<vmem>>, vector<1x8x8xf32>
    %326 = vector.shape_cast %325 : vector<1x8x8xf32> to vector<8x8xf32>
    %cst_180 = arith.constant dense<0.000000e+00> : vector<8x256xf32>
    %327 = tpu.matmul %326, %324, %cst_180 {dimension_numbers = #tpu.dot_dimension_numbers<[1], [0], [0], [1], [0, 0, 1, 1], [], []>} : vector<8x8xf32>, vector<8x256xf32>, vector<8x256xf32> -> vector<8x256xf32>
    %328 = arith.addf %320, %327 : vector<8x256xf32>
    %c240_i32_181 = arith.constant 240 : i32
    %329 = tpu.dynamic_rotate %277 by %c240_i32_181 dim 1 : vector<8x256xf32>, i32 -> vector<8x256xf32>
    %330 = vector.extract_strided_slice %4 {offsets = [7, 0], sizes = [1, 256], strides = [1, 1]} : vector<9x256xf32> to vector<1x256xf32>
    %331 = vector.broadcast %330 : vector<1x256xf32> to vector<8x256xf32>
    %332 = arith.mulf %329, %331 : vector<8x256xf32>
    %c7_182 = arith.constant 7 : index
    %c0_183 = arith.constant 0 : index
    %c0_184 = arith.constant 0 : index
    %333 = vector.load %arg11[%c7_182, %c0_183, %c0_184] : memref<9x8x8xf32, #tpu.memory_space<vmem>>, vector<1x8x8xf32>
    %334 = vector.shape_cast %333 : vector<1x8x8xf32> to vector<8x8xf32>
    %cst_185 = arith.constant dense<0.000000e+00> : vector<8x256xf32>
    %335 = tpu.matmul %334, %332, %cst_185 {dimension_numbers = #tpu.dot_dimension_numbers<[1], [0], [0], [1], [0, 0, 1, 1], [], []>} : vector<8x8xf32>, vector<8x256xf32>, vector<8x256xf32> -> vector<8x256xf32>
    %336 = arith.addf %328, %335 : vector<8x256xf32>
    %c239_i32_186 = arith.constant 239 : i32
    %337 = tpu.dynamic_rotate %277 by %c239_i32_186 dim 1 : vector<8x256xf32>, i32 -> vector<8x256xf32>
    %338 = vector.extract_strided_slice %4 {offsets = [8, 0], sizes = [1, 256], strides = [1, 1]} : vector<9x256xf32> to vector<1x256xf32>
    %339 = vector.broadcast %338 : vector<1x256xf32> to vector<8x256xf32>
    %340 = arith.mulf %337, %339 : vector<8x256xf32>
    %c8_187 = arith.constant 8 : index
    %c0_188 = arith.constant 0 : index
    %c0_189 = arith.constant 0 : index
    %341 = vector.load %arg11[%c8_187, %c0_188, %c0_189] : memref<9x8x8xf32, #tpu.memory_space<vmem>>, vector<1x8x8xf32>
    %342 = vector.shape_cast %341 : vector<1x8x8xf32> to vector<8x8xf32>
    %cst_190 = arith.constant dense<0.000000e+00> : vector<8x256xf32>
    %343 = tpu.matmul %342, %340, %cst_190 {dimension_numbers = #tpu.dot_dimension_numbers<[1], [0], [0], [1], [0, 0, 1, 1], [], []>} : vector<8x8xf32>, vector<8x256xf32>, vector<8x256xf32> -> vector<8x256xf32>
    %344 = arith.addf %336, %343 : vector<8x256xf32>
    %c0_191 = arith.constant 0 : index
    %c0_192 = arith.constant 0 : index
    %345 = vector.load %arg12[%c0_191, %c0_192] : memref<8x1xf32, #tpu.memory_space<vmem>>, vector<8x1xf32>
    %346 = vector.broadcast %345 : vector<8x1xf32> to vector<8x256xf32>
    %347 = arith.addf %344, %346 : vector<8x256xf32>
    %c0_193 = arith.constant 0 : index
    %c0_194 = arith.constant 0 : index
    %348 = vector.load %arg13[%c0_193, %c0_194] : memref<8x8xf32, #tpu.memory_space<vmem>>, vector<8x8xf32>
    %cst_195 = arith.constant dense<0.000000e+00> : vector<8x256xf32>
    %349 = tpu.matmul %348, %137, %cst_195 {dimension_numbers = #tpu.dot_dimension_numbers<[1], [0], [0], [1], [0, 0, 1, 1], [], []>} : vector<8x8xf32>, vector<8x256xf32>, vector<8x256xf32> -> vector<8x256xf32>
    %c0_196 = arith.constant 0 : index
    %c0_197 = arith.constant 0 : index
    %350 = vector.load %arg14[%c0_196, %c0_197] : memref<8x8xf32, #tpu.memory_space<vmem>>, vector<8x8xf32>
    %cst_198 = arith.constant dense<0.000000e+00> : vector<8x256xf32>
    %351 = tpu.matmul %350, %3, %cst_198 {dimension_numbers = #tpu.dot_dimension_numbers<[1], [0], [0], [1], [0, 0, 1, 1], [], []>} : vector<8x8xf32>, vector<8x256xf32>, vector<8x256xf32> -> vector<8x256xf32>
    %352 = arith.addf %349, %351 : vector<8x256xf32>
    %c0_199 = arith.constant 0 : index
    %c0_200 = arith.constant 0 : index
    %353 = vector.load %arg15[%c0_199, %c0_200] : memref<8x1xf32, #tpu.memory_space<vmem>>, vector<8x1xf32>
    %354 = vector.broadcast %353 : vector<8x1xf32> to vector<8x256xf32>
    %355 = arith.addf %352, %354 : vector<8x256xf32>
    %356 = arith.addf %347, %355 : vector<8x256xf32>
    %cst_201 = arith.constant 0.000000e+00 : f32
    %357 = vector.broadcast %cst_201 : f32 to vector<8x256xf32>
    %358 = arith.maximumf %356, %357 : vector<8x256xf32>
    %359 = arith.negf %358 : vector<8x256xf32>
    %360 = math.exp %359 : vector<8x256xf32>
    %cst_202 = arith.constant 1.000000e+00 : f32
    %361 = vector.broadcast %cst_202 : f32 to vector<8x256xf32>
    %362 = arith.addf %361, %360 : vector<8x256xf32>
    %363 = arith.divf %361, %362 : vector<8x256xf32>
    %364 = arith.addf %136, %363 : vector<8x256xf32>
    %c0_203 = arith.constant 0 : index
    %c0_204 = arith.constant 0 : index
    %c0_205 = arith.constant 0 : index
    %365 = vector.load %arg16[%c0_203, %c0_204, %c0_205] : memref<1x8x256xf32, #tpu.memory_space<vmem>>, vector<1x8x256xf32>
    %366 = vector.shape_cast %365 : vector<1x8x256xf32> to vector<8x256xf32>
    %367 = vector.shape_cast %364 : vector<8x256xf32> to vector<1x8x256xf32>
    tpu.vector_store %arg16[%c0_203, %c0_204, %c0_205], %367 {strides = array<i32>} : memref<1x8x256xf32, #tpu.memory_space<vmem>>, vector<1x8x256xf32>,
    return
  }
  func.func @transform_0(%arg0: i32) -> (i32, i32, i32) {
    %c0_i32 = arith.constant 0 : i32
    %c0_i32_0 = arith.constant 0 : i32
    %c0_i32_1 = arith.constant 0 : i32
    return %arg0, %c0_i32, %c0_i32_0 : i32, i32, i32
  }
  func.func @transform_1(%arg0: i32) -> (i32, i32, i32) {
    %c0_i32 = arith.constant 0 : i32
    %c0_i32_0 = arith.constant 0 : i32
    %c0_i32_1 = arith.constant 0 : i32
    return %arg0, %c0_i32, %c0_i32_0 : i32, i32, i32
  }
  func.func @transform_2(%arg0: i32) -> (i32, i32, i32) {
    %c0_i32 = arith.constant 0 : i32
    %c0_i32_0 = arith.constant 0 : i32
    %c0_i32_1 = arith.constant 0 : i32
    return %arg0, %c0_i32, %c0_i32_0 : i32, i32, i32
  }
  func.func @transform_3(%arg0: i32) -> (i32, i32) {
    %c0_i32 = arith.constant 0 : i32
    %c0_i32_0 = arith.constant 0 : i32
    %c0_i32_1 = arith.constant 0 : i32
    return %c0_i32, %c0_i32_0 : i32, i32
  }
  func.func @transform_4(%arg0: i32) -> (i32, i32) {
    %c0_i32 = arith.constant 0 : i32
    %c0_i32_0 = arith.constant 0 : i32
    %c0_i32_1 = arith.constant 0 : i32
    return %c0_i32, %c0_i32_0 : i32, i32
  }
  func.func @transform_5(%arg0: i32) -> (i32, i32, i32) {
    %c0_i32 = arith.constant 0 : i32
    %c0_i32_0 = arith.constant 0 : i32
    %c0_i32_1 = arith.constant 0 : i32
    %c0_i32_2 = arith.constant 0 : i32
    return %c0_i32, %c0_i32_0, %c0_i32_1 : i32, i32, i32
  }
  func.func @transform_6(%arg0: i32) -> (i32, i32) {
    %c0_i32 = arith.constant 0 : i32
    %c0_i32_0 = arith.constant 0 : i32
    %c0_i32_1 = arith.constant 0 : i32
    return %c0_i32, %c0_i32_0 : i32, i32
  }
  func.func @transform_7(%arg0: i32) -> (i32, i32, i32) {
    %c0_i32 = arith.constant 0 : i32
    %c0_i32_0 = arith.constant 0 : i32
    %c0_i32_1 = arith.constant 0 : i32
    %c0_i32_2 = arith.constant 0 : i32
    return %c0_i32, %c0_i32_0, %c0_i32_1 : i32, i32, i32
  }
  func.func @transform_8(%arg0: i32) -> (i32, i32, i32) {
    %c0_i32 = arith.constant 0 : i32
    %c0_i32_0 = arith.constant 0 : i32
    %c0_i32_1 = arith.constant 0 : i32
    %c0_i32_2 = arith.constant 0 : i32
    return %c0_i32, %c0_i32_0, %c0_i32_1 : i32, i32, i32
  }
  func.func @transform_9(%arg0: i32) -> (i32, i32) {
    %c0_i32 = arith.constant 0 : i32
    %c0_i32_0 = arith.constant 0 : i32
    %c0_i32_1 = arith.constant 0 : i32
    return %c0_i32, %c0_i32_0 : i32, i32
  }
  func.func @transform_10(%arg0: i32) -> (i32, i32, i32) {
    %c0_i32 = arith.constant 0 : i32
    %c0_i32_0 = arith.constant 0 : i32
    %c0_i32_1 = arith.constant 0 : i32
    %c0_i32_2 = arith.constant 0 : i32
    return %c0_i32, %c0_i32_0, %c0_i32_1 : i32, i32, i32
  }
  func.func @transform_11(%arg0: i32) -> (i32, i32) {
    %c0_i32 = arith.constant 0 : i32
    %c0_i32_0 = arith.constant 0 : i32
    %c0_i32_1 = arith.constant 0 : i32
    return %c0_i32, %c0_i32_0 : i32, i32
  }
  func.func @transform_12(%arg0: i32) -> (i32, i32) {
    %c0_i32 = arith.constant 0 : i32
    %c0_i32_0 = arith.constant 0 : i32
    %c0_i32_1 = arith.constant 0 : i32
    return %c0_i32, %c0_i32_0 : i32, i32
  }
  func.func @transform_13(%arg0: i32) -> (i32, i32) {
    %c0_i32 = arith.constant 0 : i32
    %c0_i32_0 = arith.constant 0 : i32
    %c0_i32_1 = arith.constant 0 : i32
    return %c0_i32, %c0_i32_0 : i32, i32
  }
  func.func @transform_14(%arg0: i32) -> (i32, i32) {
    %c0_i32 = arith.constant 0 : i32
    %c0_i32_0 = arith.constant 0 : i32
    %c0_i32_1 = arith.constant 0 : i32
    return %c0_i32, %c0_i32_0 : i32, i32
  }
  func.func @transform_15(%arg0: i32) -> (i32, i32, i32) {
    %c0_i32 = arith.constant 0 : i32
    %c0_i32_0 = arith.constant 0 : i32
    %c0_i32_1 = arith.constant 0 : i32
    return %arg0, %c0_i32, %c0_i32_0 : i32, i32, i32
  }
}

</mosaic_0001>

<llo_original>
// kernel: tpu_custom_call.1
$region0: #{tpu_custom_call.1}
  #allocation0 [shape = 'u32[]', space=smem, size = 0x4, offset = 0x4, fixed_abs, tag = 'smem constant byte address 0x4 - core index']
  #allocation1 [shape = 'u32[144,128]{1,0:T(1,128)}', space=vmem, size = 0x12000, scoped, tag = 'internal scratch']
  %s0 = inlined_call_operand.vmem [shape: f32[2,8,256], index: 0, kind: input, shape index: {}]
  %s1 = inlined_call_operand.vmem [shape: f32[2,128,16], index: 1, kind: input, shape index: {}]
  %s2 = inlined_call_operand.vmem [shape: f32[2,8,256], index: 2, kind: input, shape index: {}]
  %s3 = inlined_call_operand.vmem [shape: f32[2,256], index: 3, kind: input, shape index: {}]
  %s4 = inlined_call_operand.vmem [shape: f32[9,256], index: 4, kind: input, shape index: {}]
  %s5 = inlined_call_operand.vmem [shape: f32[9,8,8], index: 5, kind: input, shape index: {}]
  %s6 = inlined_call_operand.vmem [shape: f32[8,1], index: 6, kind: input, shape index: {}]
  %s7 = inlined_call_operand.vmem [shape: f32[9,8,8], index: 7, kind: input, shape index: {}]
  %s8 = inlined_call_operand.vmem [shape: f32[9,8,8], index: 8, kind: input, shape index: {}]
  %s9 = inlined_call_operand.vmem [shape: f32[8,1], index: 9, kind: input, shape index: {}]
  %s10 = inlined_call_operand.vmem [shape: f32[9,8,8], index: 10, kind: input, shape index: {}]
  %s11 = inlined_call_operand.vmem [shape: f32[8,1], index: 11, kind: input, shape index: {}]
  %s12 = inlined_call_operand.vmem [shape: f32[8,8], index: 12, kind: input, shape index: {}]
  %s13 = inlined_call_operand.vmem [shape: f32[8,8], index: 13, kind: input, shape index: {}]
  %s14 = inlined_call_operand.vmem [shape: f32[8,1], index: 14, kind: input, shape index: {}]
  %s15 = inlined_call_operand.hbm [shape: f32[2,8,256], index: 15, kind: output, shape index: {}]
  %s16 = sld [smem:[#allocation0]]
  $region93: #{tpu_custom_call.1} parent=0
    _
  %s18 = ssub.s32 1, %s16
  %s19 = scalar_select 0, %s18, %s16
  $region1: #{tpu_custom_call.1} parent=0
    #allocation2 [shape = 'u8[16384]{0}', space=vmem, size = 0x4000, scoped, tag = 'output window, operand 0']
    #allocation3 [shape = 's32[2]{0}', space=sflag, size = 0x8, scoped, tag = 'scoped memory for tpu_custom_call.1']
    %20 = vsyncpa [#allocation3], 0
    %s21 = scalar_lea.sflag [#allocation3], 1
    %22 = vsyncpa %s21, 0
    loop: start=0, step=1, limit=4
    $region2: #{tpu_custom_call.1} parent=1 // loop_pre_header
      _
    $region3: #{tpu_custom_call.1} parent=1 // loop_header
      %s24 = sphi 0, %s28
      %p25 = scmp.ge.s32.totalorder %s24, 4
      %s34 = sphi 0, %s36
      %s37 = sphi 0, %s34
      %s38 = sphi 0, %s37
      %s54 = sphi 0, %s38
      %s60 = sphi 0, %s62
      %s63 = sphi 0, %s60
      %s64 = sphi 0, %s63
      %s80 = sphi 0, %s64
      %s86 = sphi 0, %s88
      %s89 = sphi 0, %s86
      %s90 = sphi 0, %s89
      %s106 = sphi 0, %s90
      %s110 = sphi 0, %s110
      %s112 = sphi 0, %s110
      %s113 = sphi 0, %s112
      %s127 = sphi 0, %s113
      %s131 = sphi 0, %s131
      %s133 = sphi 0, %s131
      %s134 = sphi 0, %s133
      %s148 = sphi 0, %s134
      %s152 = sphi 0, %s152
      %s154 = sphi 0, %s152
      %s155 = sphi 0, %s154
      %s169 = sphi 0, %s155
      %s173 = sphi 0, %s173
      %s175 = sphi 0, %s173
      %s176 = sphi 0, %s175
      %s190 = sphi 0, %s176
      %s194 = sphi 0, %s194
      %s196 = sphi 0, %s194
      %s197 = sphi 0, %s196
      %s211 = sphi 0, %s197
      %s215 = sphi 0, %s215
      %s217 = sphi 0, %s215
      %s218 = sphi 0, %s217
      %s232 = sphi 0, %s218
      %s236 = sphi 0, %s236
      %s238 = sphi 0, %s236
      %s239 = sphi 0, %s238
      %s253 = sphi 0, %s239
      %s257 = sphi 0, %s257
      %s259 = sphi 0, %s257
      %s260 = sphi 0, %s259
      %s274 = sphi 0, %s260
      %s278 = sphi 0, %s278
      %s280 = sphi 0, %s278
      %s281 = sphi 0, %s280
      %s295 = sphi 0, %s281
      %s299 = sphi 0, %s299
      %s301 = sphi 0, %s299
      %s302 = sphi 0, %s301
      %s316 = sphi 0, %s302
      %s320 = sphi 0, %s320
      %s322 = sphi 0, %s320
      %s323 = sphi 0, %s322
      %s337 = sphi 0, %s323
      %s341 = sphi 0, %s341
      %s343 = sphi 0, %s341
      %s344 = sphi 0, %s343
      %s358 = sphi 0, %s344
      %s364 = sphi 0, %s366
      %s367 = sphi 0, %s364
      %s368 = sphi 0, %s367
      %s384 = sphi 0, %s368
    $region4: #{tpu_custom_call.1} parent=1 // loop_header_branch
      %27 = sbr.rel (%p25) target = $region8
    $region5: #{tpu_custom_call.1} parent=1 // loop_body
      %s29 = ssub.s32 %s24, 1
      %s30 = ssub.s32 %s24, 2
      %s31 = sadd.s32 %s24, 1
      %s32 = ssub.s32 %s24, %s31
      %p33 = scmp.eq.s32.totalorder %s32, 0
      %s35 = sadd.s32 %s34, 1
      %s36 = scalar_select %p33, %s34, %s35
      %p39 = pneg %p33
      %p40 = scmp.eq.s32.totalorder %s24, 1
      %p41 = por %p39, %p40
      %p42 = scmp.ne.s32.totalorder %s34, %s37
      %p43 = scmp.eq.s32.totalorder %s24, 0
      %p44 = por %p42, %p43
      %p45 = scmp.ne.s32.totalorder %s34, %s37
      %p46 = scmp.eq.s32.totalorder %s29, 1
      %p47 = por %p45, %p46
      %p48 = scmp.ne.s32.totalorder %s37, %s38
      %p49 = scmp.eq.s32.totalorder %s29, 0
      %p50 = por %p48, %p49
      %p51 = scmp.ne.s32.totalorder %s37, %s38
      %p52 = scmp.eq.s32.totalorder %s30, 1
      %p53 = por %p51, %p52
      %p55 = scmp.ne.s32.totalorder %s38, %s54
      %p56 = scmp.eq.s32.totalorder %s30, 0
      %p57 = por %p55, %p56
      %s58 = ssub.s32 %s24, %s31
      %p59 = scmp.eq.s32.totalorder %s58, 0
      %s61 = sadd.s32 %s60, 1
      %s62 = scalar_select %p59, %s60, %s61
      %p65 = pneg %p59
      %p66 = scmp.eq.s32.totalorder %s24, 1
      %p67 = por %p65, %p66
      %p68 = scmp.ne.s32.totalorder %s60, %s63
      %p69 = scmp.eq.s32.totalorder %s24, 0
      %p70 = por %p68, %p69
      %p71 = scmp.ne.s32.totalorder %s60, %s63
      %p72 = scmp.eq.s32.totalorder %s29, 1
      %p73 = por %p71, %p72
      %p74 = scmp.ne.s32.totalorder %s63, %s64
      %p75 = scmp.eq.s32.totalorder %s29, 0
      %p76 = por %p74, %p75
      %p77 = scmp.ne.s32.totalorder %s63, %s64
      %p78 = scmp.eq.s32.totalorder %s30, 1
      %p79 = por %p77, %p78
      %p81 = scmp.ne.s32.totalorder %s64, %s80
      %p82 = scmp.eq.s32.totalorder %s30, 0
      %p83 = por %p81, %p82
      %s84 = ssub.s32 %s24, %s31
      %p85 = scmp.eq.s32.totalorder %s84, 0
      %s87 = sadd.s32 %s86, 1
      %s88 = scalar_select %p85, %s86, %s87
      %p91 = pneg %p85
      %p92 = scmp.eq.s32.totalorder %s24, 1
      %p93 = por %p91, %p92
      %p94 = scmp.ne.s32.totalorder %s86, %s89
      %p95 = scmp.eq.s32.totalorder %s24, 0
      %p96 = por %p94, %p95
      %p97 = scmp.ne.s32.totalorder %s86, %s89
      %p98 = scmp.eq.s32.totalorder %s29, 1
      %p99 = por %p97, %p98
      %p100 = scmp.ne.s32.totalorder %s89, %s90
      %p101 = scmp.eq.s32.totalorder %s29, 0
      %p102 = por %p100, %p101
      %p103 = scmp.ne.s32.totalorder %s89, %s90
      %p104 = scmp.eq.s32.totalorder %s30, 1
      %p105 = por %p103, %p104
      %p107 = scmp.ne.s32.totalorder %s90, %s106
      %p108 = scmp.eq.s32.totalorder %s30, 0
      %p109 = por %p107, %p108
      %s111 = sadd.s32 %s110, 1
      %p114 = scmp.eq.s32.totalorder %s24, 1
      %p115 = scmp.ne.s32.totalorder %s110, %s112
      %p116 = scmp.eq.s32.totalorder %s24, 0
      %p117 = por %p115, %p116
      %p118 = scmp.ne.s32.totalorder %s110, %s112
      %p119 = scmp.eq.s32.totalorder %s29, 1
      %p120 = por %p118, %p119
      %p121 = scmp.ne.s32.totalorder %s112, %s113
      %p122 = scmp.eq.s32.totalorder %s29, 0
      %p123 = por %p121, %p122
      %p124 = scmp.ne.s32.totalorder %s112, %s113
      %p125 = scmp.eq.s32.totalorder %s30, 1
      %p126 = por %p124, %p125
      %p128 = scmp.ne.s32.totalorder %s113, %s127
      %p129 = scmp.eq.s32.totalorder %s30, 0
      %p130 = por %p128, %p129
      %s132 = sadd.s32 %s131, 1
      %p135 = scmp.eq.s32.totalorder %s24, 1
      %p136 = scmp.ne.s32.totalorder %s131, %s133
      %p137 = scmp.eq.s32.totalorder %s24, 0
      %p138 = por %p136, %p137
      %p139 = scmp.ne.s32.totalorder %s131, %s133
      %p140 = scmp.eq.s32.totalorder %s29, 1
      %p141 = por %p139, %p140
      %p142 = scmp.ne.s32.totalorder %s133, %s134
      %p143 = scmp.eq.s32.totalorder %s29, 0
      %p144 = por %p142, %p143
      %p145 = scmp.ne.s32.totalorder %s133, %s134
      %p146 = scmp.eq.s32.totalorder %s30, 1
      %p147 = por %p145, %p146
      %p149 = scmp.ne.s32.totalorder %s134, %s148
      %p150 = scmp.eq.s32.totalorder %s30, 0
      %p151 = por %p149, %p150
      %s153 = sadd.s32 %s152, 1
      %p156 = scmp.eq.s32.totalorder %s24, 1
      %p157 = scmp.ne.s32.totalorder %s152, %s154
      %p158 = scmp.eq.s32.totalorder %s24, 0
      %p159 = por %p157, %p158
      %p160 = scmp.ne.s32.totalorder %s152, %s154
      %p161 = scmp.eq.s32.totalorder %s29, 1
      %p162 = por %p160, %p161
      %p163 = scmp.ne.s32.totalorder %s154, %s155
      %p164 = scmp.eq.s32.totalorder %s29, 0
      %p165 = por %p163, %p164
      %p166 = scmp.ne.s32.totalorder %s154, %s155
      %p167 = scmp.eq.s32.totalorder %s30, 1
      %p168 = por %p166, %p167
      %p170 = scmp.ne.s32.totalorder %s155, %s169
      %p171 = scmp.eq.s32.totalorder %s30, 0
      %p172 = por %p170, %p171
      %s174 = sadd.s32 %s173, 1
      %p177 = scmp.eq.s32.totalorder %s24, 1
      %p178 = scmp.ne.s32.totalorder %s173, %s175
      %p179 = scmp.eq.s32.totalorder %s24, 0
      %p180 = por %p178, %p179
      %p181 = scmp.ne.s32.totalorder %s173, %s175
      %p182 = scmp.eq.s32.totalorder %s29, 1
      %p183 = por %p181, %p182
      %p184 = scmp.ne.s32.totalorder %s175, %s176
      %p185 = scmp.eq.s32.totalorder %s29, 0
      %p186 = por %p184, %p185
      %p187 = scmp.ne.s32.totalorder %s175, %s176
      %p188 = scmp.eq.s32.totalorder %s30, 1
      %p189 = por %p187, %p188
      %p191 = scmp.ne.s32.totalorder %s176, %s190
      %p192 = scmp.eq.s32.totalorder %s30, 0
      %p193 = por %p191, %p192
      %s195 = sadd.s32 %s194, 1
      %p198 = scmp.eq.s32.totalorder %s24, 1
      %p199 = scmp.ne.s32.totalorder %s194, %s196
      %p200 = scmp.eq.s32.totalorder %s24, 0
      %p201 = por %p199, %p200
      %p202 = scmp.ne.s32.totalorder %s194, %s196
      %p203 = scmp.eq.s32.totalorder %s29, 1
      %p204 = por %p202, %p203
      %p205 = scmp.ne.s32.totalorder %s196, %s197
      %p206 = scmp.eq.s32.totalorder %s29, 0
      %p207 = por %p205, %p206
      %p208 = scmp.ne.s32.totalorder %s196, %s197
      %p209 = scmp.eq.s32.totalorder %s30, 1
      %p210 = por %p208, %p209
      %p212 = scmp.ne.s32.totalorder %s197, %s211
      %p213 = scmp.eq.s32.totalorder %s30, 0
      %p214 = por %p212, %p213
      %s216 = sadd.s32 %s215, 1
      %p219 = scmp.eq.s32.totalorder %s24, 1
      %p220 = scmp.ne.s32.totalorder %s215, %s217
      %p221 = scmp.eq.s32.totalorder %s24, 0
      %p222 = por %p220, %p221
      %p223 = scmp.ne.s32.totalorder %s215, %s217
      %p224 = scmp.eq.s32.totalorder %s29, 1
      %p225 = por %p223, %p224
      %p226 = scmp.ne.s32.totalorder %s217, %s218
      %p227 = scmp.eq.s32.totalorder %s29, 0
      %p228 = por %p226, %p227
      %p229 = scmp.ne.s32.totalorder %s217, %s218
      %p230 = scmp.eq.s32.totalorder %s30, 1
      %p231 = por %p229, %p230
      %p233 = scmp.ne.s32.totalorder %s218, %s232
      %p234 = scmp.eq.s32.totalorder %s30, 0
      %p235 = por %p233, %p234
      %s237 = sadd.s32 %s236, 1
      %p240 = scmp.eq.s32.totalorder %s24, 1
      %p241 = scmp.ne.s32.totalorder %s236, %s238
      %p242 = scmp.eq.s32.totalorder %s24, 0
      %p243 = por %p241, %p242
      %p244 = scmp.ne.s32.totalorder %s236, %s238
      %p245 = scmp.eq.s32.totalorder %s29, 1
      %p246 = por %p244, %p245
      %p247 = scmp.ne.s32.totalorder %s238, %s239
      %p248 = scmp.eq.s32.totalorder %s29, 0
      %p249 = por %p247, %p248
      %p250 = scmp.ne.s32.totalorder %s238, %s239
      %p251 = scmp.eq.s32.totalorder %s30, 1
      %p252 = por %p250, %p251
      %p254 = scmp.ne.s32.totalorder %s239, %s253
      %p255 = scmp.eq.s32.totalorder %s30, 0
      %p256 = por %p254, %p255
      %s258 = sadd.s32 %s257, 1
      %p261 = scmp.eq.s32.totalorder %s24, 1
      %p262 = scmp.ne.s32.totalorder %s257, %s259
      %p263 = scmp.eq.s32.totalorder %s24, 0
      %p264 = por %p262, %p263
      %p265 = scmp.ne.s32.totalorder %s257, %s259
      %p266 = scmp.eq.s32.totalorder %s29, 1
      %p267 = por %p265, %p266
      %p268 = scmp.ne.s32.totalorder %s259, %s260
      %p269 = scmp.eq.s32.totalorder %s29, 0
      %p270 = por %p268, %p269
      %p271 = scmp.ne.s32.totalorder %s259, %s260
      %p272 = scmp.eq.s32.totalorder %s30, 1
      %p273 = por %p271, %p272
      %p275 = scmp.ne.s32.totalorder %s260, %s274
      %p276 = scmp.eq.s32.totalorder %s30, 0
      %p277 = por %p275, %p276
      %s279 = sadd.s32 %s278, 1
      %p282 = scmp.eq.s32.totalorder %s24, 1
      %p283 = scmp.ne.s32.totalorder %s278, %s280
      %p284 = scmp.eq.s32.totalorder %s24, 0
      %p285 = por %p283, %p284
      %p286 = scmp.ne.s32.totalorder %s278, %s280
      %p287 = scmp.eq.s32.totalorder %s29, 1
      %p288 = por %p286, %p287
      %p289 = scmp.ne.s32.totalorder %s280, %s281
      %p290 = scmp.eq.s32.totalorder %s29, 0
      %p291 = por %p289, %p290
      %p292 = scmp.ne.s32.totalorder %s280, %s281
      %p293 = scmp.eq.s32.totalorder %s30, 1
      %p294 = por %p292, %p293
      %p296 = scmp.ne.s32.totalorder %s281, %s295
      %p297 = scmp.eq.s32.totalorder %s30, 0
      %p298 = por %p296, %p297
      %s300 = sadd.s32 %s299, 1
      %p303 = scmp.eq.s32.totalorder %s24, 1
      %p304 = scmp.ne.s32.totalorder %s299, %s301
      %p305 = scmp.eq.s32.totalorder %s24, 0
      %p306 = por %p304, %p305
      %p307 = scmp.ne.s32.totalorder %s299, %s301
      %p308 = scmp.eq.s32.totalorder %s29, 1
      %p309 = por %p307, %p308
      %p310 = scmp.ne.s32.totalorder %s301, %s302
      %p311 = scmp.eq.s32.totalorder %s29, 0
      %p312 = por %p310, %p311
      %p313 = scmp.ne.s32.totalorder %s301, %s302
      %p314 = scmp.eq.s32.totalorder %s30, 1
      %p315 = por %p313, %p314
      %p317 = scmp.ne.s32.totalorder %s302, %s316
      %p318 = scmp.eq.s32.totalorder %s30, 0
      %p319 = por %p317, %p318
      %s321 = sadd.s32 %s320, 1
      %p324 = scmp.eq.s32.totalorder %s24, 1
      %p325 = scmp.ne.s32.totalorder %s320, %s322
      %p326 = scmp.eq.s32.totalorder %s24, 0
      %p327 = por %p325, %p326
      %p328 = scmp.ne.s32.totalorder %s320, %s322
      %p329 = scmp.eq.s32.totalorder %s29, 1
      %p330 = por %p328, %p329
      %p331 = scmp.ne.s32.totalorder %s322, %s323
      %p332 = scmp.eq.s32.totalorder %s29, 0
      %p333 = por %p331, %p332
      %p334 = scmp.ne.s32.totalorder %s322, %s323
      %p335 = scmp.eq.s32.totalorder %s30, 1
      %p336 = por %p334, %p335
      %p338 = scmp.ne.s32.totalorder %s323, %s337
      %p339 = scmp.eq.s32.totalorder %s30, 0
      %p340 = por %p338, %p339
      %s342 = sadd.s32 %s341, 1
      %p345 = scmp.eq.s32.totalorder %s24, 1
      %p346 = scmp.ne.s32.totalorder %s341, %s343
      %p347 = scmp.eq.s32.totalorder %s24, 0
      %p348 = por %p346, %p347
      %p349 = scmp.ne.s32.totalorder %s341, %s343
      %p350 = scmp.eq.s32.totalorder %s29, 1
      %p351 = por %p349, %p350
      %p352 = scmp.ne.s32.totalorder %s343, %s344
      %p353 = scmp.eq.s32.totalorder %s29, 0
      %p354 = por %p352, %p353
      %p355 = scmp.ne.s32.totalorder %s343, %s344
      %p356 = scmp.eq.s32.totalorder %s30, 1
      %p357 = por %p355, %p356
      %p359 = scmp.ne.s32.totalorder %s344, %s358
      %p360 = scmp.eq.s32.totalorder %s30, 0
      %p361 = por %p359, %p360
      %s362 = ssub.s32 %s24, %s31
      %p363 = scmp.eq.s32.totalorder %s362, 0
      %s365 = sadd.s32 %s364, 1
      %s366 = scalar_select %p363, %s364, %s365
      %p369 = pneg %p363
      %p370 = scmp.eq.s32.totalorder %s24, 1
      %p371 = por %p369, %p370
      %p372 = scmp.ne.s32.totalorder %s364, %s367
      %p373 = scmp.eq.s32.totalorder %s24, 0
      %p374 = por %p372, %p373
      %p375 = scmp.ne.s32.totalorder %s364, %s367
      %p376 = scmp.eq.s32.totalorder %s29, 1
      %p377 = por %p375, %p376
      %p378 = scmp.ne.s32.totalorder %s367, %s368
      %p379 = scmp.eq.s32.totalorder %s29, 0
      %p380 = por %p378, %p379
      %p381 = scmp.ne.s32.totalorder %s367, %s368
      %p382 = scmp.eq.s32.totalorder %s30, 1
      %p383 = por %p381, %p382
      %p385 = scmp.ne.s32.totalorder %s368, %s384
      %p386 = scmp.eq.s32.totalorder %s30, 0
      %p387 = por %p385, %p386
      %p388 = scmp.le.s32.totalorder 1, %s24
      %p389 = scmp.lt.s32.totalorder %s24, 3
      %p390 = pnand %p388, %p389
      %p391 = pneg %p390
      // Predicated region
      $region9: #{tpu_custom_call.1} parent=5 // pred_check
        _
      $region10: #{tpu_custom_call.1} parent=5 // pred_check_branch
        %393 = sbr.rel (%p390) target = $region12
      $region11: #{tpu_custom_call.1} parent=5 // pred_region
        %s394 = ssub.s32 %s24, 1
        // Predicated region
        $region13: #{tpu_custom_call.1} parent=11 // pred_check
          %p395 = pneg %p123
        $region14: #{tpu_custom_call.1} parent=11 // pred_check_branch
          %397 = sbr.rel (%p395) target = $region16
        $region15: #{tpu_custom_call.1} parent=11 // pred_region
          _
        $region16: #{tpu_custom_call.1} parent=11 // pred_fallthru
          _
        // Predicated region
        $region17: #{tpu_custom_call.1} parent=11 // pred_check
          %p398 = pneg %p144
        $region18: #{tpu_custom_call.1} parent=11 // pred_check_branch
          %400 = sbr.rel (%p398) target = $region20
        $region19: #{tpu_custom_call.1} parent=11 // pred_region
          _
        $region20: #{tpu_custom_call.1} parent=11 // pred_fallthru
          _
        // Predicated region
        $region21: #{tpu_custom_call.1} parent=11 // pred_check
          %p401 = pneg %p165
        $region22: #{tpu_custom_call.1} parent=11 // pred_check_branch
          %403 = sbr.rel (%p401) target = $region24
        $region23: #{tpu_custom_call.1} parent=11 // pred_region
          _
        $region24: #{tpu_custom_call.1} parent=11 // pred_fallthru
          _
        // Predicated region
        $region25: #{tpu_custom_call.1} parent=11 // pred_check
          %p404 = pneg %p186
        $region26: #{tpu_custom_call.1} parent=11 // pred_check_branch
          %406 = sbr.rel (%p404) target = $region28
        $region27: #{tpu_custom_call.1} parent=11 // pred_region
          _
        $region28: #{tpu_custom_call.1} parent=11 // pred_fallthru
          _
        // Predicated region
        $region29: #{tpu_custom_call.1} parent=11 // pred_check
          %p407 = pneg %p207
        $region30: #{tpu_custom_call.1} parent=11 // pred_check_branch
          %409 = sbr.rel (%p407) target = $region32
        $region31: #{tpu_custom_call.1} parent=11 // pred_region
          _
        $region32: #{tpu_custom_call.1} parent=11 // pred_fallthru
          _
        // Predicated region
        $region33: #{tpu_custom_call.1} parent=11 // pred_check
          %p410 = pneg %p228
        $region34: #{tpu_custom_call.1} parent=11 // pred_check_branch
          %412 = sbr.rel (%p410) target = $region36
        $region35: #{tpu_custom_call.1} parent=11 // pred_region
          _
        $region36: #{tpu_custom_call.1} parent=11 // pred_fallthru
          _
        // Predicated region
        $region37: #{tpu_custom_call.1} parent=11 // pred_check
          %p413 = pneg %p249
        $region38: #{tpu_custom_call.1} parent=11 // pred_check_branch
          %415 = sbr.rel (%p413) target = $region40
        $region39: #{tpu_custom_call.1} parent=11 // pred_region
          _
        $region40: #{tpu_custom_call.1} parent=11 // pred_fallthru
          _
        // Predicated region
        $region41: #{tpu_custom_call.1} parent=11 // pred_check
          %p416 = pneg %p270
        $region42: #{tpu_custom_call.1} parent=11 // pred_check_branch
          %418 = sbr.rel (%p416) target = $region44
        $region43: #{tpu_custom_call.1} parent=11 // pred_region
          _
        $region44: #{tpu_custom_call.1} parent=11 // pred_fallthru
          _
        // Predicated region
        $region45: #{tpu_custom_call.1} parent=11 // pred_check
          %p419 = pneg %p291
        $region46: #{tpu_custom_call.1} parent=11 // pred_check_branch
          %421 = sbr.rel (%p419) target = $region48
        $region47: #{tpu_custom_call.1} parent=11 // pred_region
          _
        $region48: #{tpu_custom_call.1} parent=11 // pred_fallthru
          _
        // Predicated region
        $region49: #{tpu_custom_call.1} parent=11 // pred_check
          %p422 = pneg %p312
        $region50: #{tpu_custom_call.1} parent=11 // pred_check_branch
          %424 = sbr.rel (%p422) target = $region52
        $region51: #{tpu_custom_call.1} parent=11 // pred_region
          _
        $region52: #{tpu_custom_call.1} parent=11 // pred_fallthru
          _
        // Predicated region
        $region53: #{tpu_custom_call.1} parent=11 // pred_check
          %p425 = pneg %p333
        $region54: #{tpu_custom_call.1} parent=11 // pred_check_branch
          %427 = sbr.rel (%p425) target = $region56
        $region55: #{tpu_custom_call.1} parent=11 // pred_region
          _
        $region56: #{tpu_custom_call.1} parent=11 // pred_fallthru
          _
        // Predicated region
        $region57: #{tpu_custom_call.1} parent=11 // pred_check
          %p428 = pneg %p354
        $region58: #{tpu_custom_call.1} parent=11 // pred_check_branch
          %430 = sbr.rel (%p428) target = $region60
        $region59: #{tpu_custom_call.1} parent=11 // pred_region
          _
        $region60: #{tpu_custom_call.1} parent=11 // pred_fallthru
          _
      $region12: #{tpu_custom_call.1} parent=5 // pred_fallthru
        _
      %p431 = scmp.lt.s32.totalorder %s24, 2
      // Predicated region
      $region61: #{tpu_custom_call.1} parent=5 // pred_check
        %p432 = pneg %p431
      $region62: #{tpu_custom_call.1} parent=5 // pred_check_branch
        %434 = sbr.rel (%p432) target = $region64
      $region63: #{tpu_custom_call.1} parent=5 // pred_region
        // Predicated region
        $region65: #{tpu_custom_call.1} parent=63 // pred_check
          %p435 = pneg %p44
        $region66: #{tpu_custom_call.1} parent=63 // pred_check_branch
          %437 = sbr.rel (%p435) target = $region68
        $region67: #{tpu_custom_call.1} parent=63 // pred_region
          %p438 = scmp.lt.s32.totalorder %s24, 1
          %s439 = scalar_select %p438, %s24, 1
          %s440 = smul.addr %s439, 2
          %s441 = smul.addr %s440, 8
          %s442 = scalar_lea.vmem %s0, %s441
        $region68: #{tpu_custom_call.1} parent=63 // pred_fallthru
          _
        // Predicated region
        $region69: #{tpu_custom_call.1} parent=63 // pred_check
          %p443 = pneg %p70
        $region70: #{tpu_custom_call.1} parent=63 // pred_check_branch
          %445 = sbr.rel (%p443) target = $region72
        $region71: #{tpu_custom_call.1} parent=63 // pred_region
          %p446 = scmp.lt.s32.totalorder %s24, 1
          %s447 = scalar_select %p446, %s24, 1
          %s448 = smul.addr %s447, 16
          %s449 = smul.addr %s448, 8
          %s450 = scalar_lea.vmem %s1, %s449
        $region72: #{tpu_custom_call.1} parent=63 // pred_fallthru
          _
        // Predicated region
        $region73: #{tpu_custom_call.1} parent=63 // pred_check
          %p451 = pneg %p96
        $region74: #{tpu_custom_call.1} parent=63 // pred_check_branch
          %453 = sbr.rel (%p451) target = $region76
        $region75: #{tpu_custom_call.1} parent=63 // pred_region
          %p454 = scmp.lt.s32.totalorder %s24, 1
          %s455 = scalar_select %p454, %s24, 1
          %s456 = smul.addr %s455, 2
          %s457 = smul.addr %s456, 8
          %s458 = scalar_lea.vmem %s2, %s457
        $region76: #{tpu_custom_call.1} parent=63 // pred_fallthru
          _
      $region64: #{tpu_custom_call.1} parent=5 // pred_fallthru
        _
      %p459 = scmp.le.s32.totalorder 1, %s24
      %p460 = scmp.lt.s32.totalorder %s24, 3
      %p461 = pnand %p459, %p460
      %p462 = pneg %p461
      // Predicated region
      $region77: #{tpu_custom_call.1} parent=5 // pred_check
        _
      $region78: #{tpu_custom_call.1} parent=5 // pred_check_branch
        %464 = sbr.rel (%p461) target = $region80
      $region79: #{tpu_custom_call.1} parent=5 // pred_region
        %s465 = ssub.s32 %s24, 1
        %p466 = scmp.lt.s32.totalorder %s29, 1
        %s467 = scalar_select %p466, %s29, 1
        %s468 = smul.addr %s467, 2
        %s469 = smul.addr %s468, 8
        %s470 = scalar_lea.vmem %s0, %s469
        %p471 = pneg %p50
        %p472 = pneg %p47
        %p473 = scmp.lt.s32.totalorder %s29, 1
        %s474 = scalar_select %p473, %s29, 1
        %s475 = smul.addr %s474, 16
        %s476 = smul.addr %s475, 8
        %s477 = scalar_lea.vmem %s1, %s476
        %p478 = pneg %p76
        %p479 = pneg %p73
        %p480 = scmp.lt.s32.totalorder %s29, 1
        %s481 = scalar_select %p480, %s29, 1
        %s482 = smul.addr %s481, 2
        %s483 = smul.addr %s482, 8
        %s484 = scalar_lea.vmem %s2, %s483
        %p485 = pneg %p102
        %p486 = pneg %p99
        %p487 = pneg %p123
        %p488 = pneg %p120
        %p489 = pneg %p144
        %p490 = pneg %p141
        %p491 = pneg %p165
        %p492 = pneg %p162
        %p493 = pneg %p186
        %p494 = pneg %p183
        %p495 = pneg %p207
        %p496 = pneg %p204
        %p497 = pneg %p228
        %p498 = pneg %p225
        %p499 = pneg %p249
        %p500 = pneg %p246
        %p501 = pneg %p270
        %p502 = pneg %p267
        %p503 = pneg %p291
        %p504 = pneg %p288
        %p505 = pneg %p312
        %p506 = pneg %p309
        %p507 = pneg %p333
        %p508 = pneg %p330
        %p509 = pneg %p354
        %p510 = pneg %p351
        %p511 = pneg %p380
        %p512 = pneg %p377
        %s513 = sand.u32 %s367, 1
        %s514 = scalar_lea.sflag [#allocation3], %s513
        %s515 = sand.u32 %s367, 1
        %s516 = smul.addr %s515, 16
        %s517 = scalar_lea.vmem [#allocation2], %s516
        %p518 = scmp.lt.s32.totalorder %s29, 1
        %s519 = scalar_select %p518, %s29, 1
        %s520 = smul.addr %s519, 2
        %s521 = smul.addr %s520, 8
        %s522 = scalar_lea.vmem %s0, %s521
        %p523 = scmp.lt.s32.totalorder %s29, 1
        %s524 = scalar_select %p523, %s29, 1
        %s525 = smul.addr %s524, 16
        %s526 = smul.addr %s525, 8
        %s527 = scalar_lea.vmem %s1, %s526
        %p528 = scmp.lt.s32.totalorder %s29, 1
        %s529 = scalar_select %p528, %s29, 1
        %s530 = smul.addr %s529, 2
        %s531 = smul.addr %s530, 8
        %s532 = scalar_lea.vmem %s2, %s531
        %v533 = vld [vmem:[%s522] sm:$0xff]
        %v534 = vld [vmem:[%s522 + $0x8] sm:$0xff]
        %v535 = vld [vmem:[%s532] sm:$0xff]
        %v536 = vld [vmem:[%s532 + $0x8] sm:$0xff]
        %v537 = vld [vmem:[%s4] sm:$0xff]
        %v538 = vld [vmem:[%s4 + $0x8] sm:$0xff]
        %v539 = vld [vmem:[%s4 + $0x10] sm:$0x1]
        %v540 = vld [vmem:[%s4 + $0x18] sm:$0x1]
        %s541 = scalar_lea.vmem %s5, 32
        %v542 = vld [vmem:[%s541] sm:$0xff]
        %543 = vrot.lane.b32.xlu0 %v533, 17
        %v544 = vpop.permute.xlu0 %543
        %545 = vrot.lane.b32.xlu0 %v534, 17
        %v546 = vpop.permute.xlu0 %545
        %v547 = vlaneseq
        %v548 = vand.u32 %v547, 127
        %vm549 = vcmp.lt.s32.totalorder %v548, 17
        %v550 = vsel %vm549, %v544, %v546
        %v551 = vsel %vm549, %v546, %v544
        %v552 = vlaneseq
        %v553 = vshrl.u32 %v552, 7
        %v554 = vsub.s32 0, %v553
        %v555 = vrot.slane %v537, %v554
        %v556 = vlaneseq
        %v557 = vshrl.u32 %v556, 7
        %v558 = vsub.s32 0, %v557
        %v559 = vrot.slane %v538, %v558
        %v560 = vmul.f32 %v551, %v555
        %v561 = vmul.f32 %v550, %v559
        %v562 = vld [vmem:[%s5] sm:$0xff]
        %vm563 = vcmask 64512
        %v565 = vsel %vm563, %v562, 0
        %567 = vmatprep.subr.mxu0 %v561
        %568 = vmatpush1.msra.mxu0 %v560
        %569 = vmatprep.subr.mxu0 0.0
        %570 = vmatpush1.msra.mxu0 0.0
        %571 = vmatprep.subr.mxu0 0.0
        %572 = vmatpush1.msra.mxu0 0.0
        %573 = vmatprep.subr.mxu0 0.0
        %574 = vmatpush1.msra.mxu0 0.0
        %575 = vmatprep.subr.mxu0 0.0
        %576 = vmatpush1.msra.mxu0 0.0
        %577 = vmatprep.subr.mxu0 0.0
        %578 = vmatpush1.msra.mxu0 0.0
        %579 = vmatprep.subr.mxu0 0.0
        %580 = vmatpush1.msra.mxu0 0.0
        %581 = vmatprep.subr.mxu0 0.0
        %582 = vmatpush1.msra.mxu0 0.0
        %583 = vmatprep.subr.mxu0 0.0
        %584 = vmatpush1.msra.mxu0 0.0
        %585 = vmatprep.subr.mxu0 0.0
        %586 = vmatpush1.msra.mxu0 0.0
        %587 = vmatprep.subr.mxu0 0.0
        %588 = vmatpush1.msra.mxu0 0.0
        %589 = vmatprep.subr.mxu0 0.0
        %590 = vmatpush1.msra.mxu0 0.0
        %591 = vmatprep.subr.mxu0 0.0
        %592 = vmatpush1.msra.mxu0 0.0
        %593 = vmatprep.subr.mxu0 0.0
        %594 = vmatpush1.msra.mxu0 0.0
        %595 = vmatprep.subr.mxu0 0.0
        %596 = vmatpush1.msra.mxu0 0.0
        %597 = vmatprep.subr.mxu0 0.0
        %598 = vmatpush1.msra.mxu0 0.0
        %599 = vmatprep.subr.mxu0 0.0
        %600 = vmatpush1.msra.mxu0 0.0
        %601 = vmatprep.subr.mxu0 0.0
        %602 = vmatpush1.msra.mxu0 0.0
        %603 = vmatprep.subr.mxu0 0.0
        %604 = vmatpush1.msra.mxu0 0.0
        %605 = vmatprep.subr.mxu0 0.0
        %606 = vmatpush1.msra.mxu0 0.0
        %607 = vmatprep.subr.mxu0 0.0
        %608 = vmatpush1.msra.mxu0 0.0
        %609 = vmatprep.subr.mxu0 0.0
        %610 = vmatpush1.msra.mxu0 0.0
        %611 = vmatprep.subr.mxu0 0.0
        %612 = vmatpush1.msra.mxu0 0.0
        %613 = vmatprep.subr.mxu0 0.0
        %614 = vmatpush1.msra.mxu0 0.0
        %615 = vmatprep.subr.mxu0 0.0
        %616 = vmatpush1.msra.mxu0 0.0
        %617 = vmatprep.subr.mxu0 0.0
        %618 = vmatpush1.msra.mxu0 0.0
        %619 = vmatprep.subr.mxu0 0.0
        %620 = vmatpush1.msra.mxu0 0.0
        %621 = vmatprep.subr.mxu0 0.0
        %622 = vmatpush1.msra.mxu0 0.0
        %623 = vmatprep.subr.mxu0 0.0
        %624 = vmatpush1.msra.mxu0 0.0
        %625 = vmatprep.subr.mxu0 0.0
        %626 = vmatpush1.msra.mxu0 0.0
        %627 = vmatprep.subr.mxu0 0.0
        %628 = vmatpush1.msra.mxu0 0.0
        %629 = vmatprep.subr.mxu0 0.0
        %630 = vmatpush1.msra.mxu0 0.0
        %631 = vmatprep.mubr.f32.mxu0 0.0
        %632 = vmatmul.mubr.f32.gmra.mrb[0].mxu0 %v565
        %v633 = vpop.f32.mrb[0].mxu0
        %v634 = vadd.f32 0.0, %v633
        %v635 = vpop.f32.mrb[0].mxu0
        %v636 = vadd.f32 0.0, %v635
        %637 = vdwg.mxu0
        %v639 = vsel %vm563, %v542, 0
        %641 = vmatprep.subr.mxu0 %v534
        %642 = vmatpush1.msra.mxu0 %v533
        %643 = vmatprep.subr.mxu0 0.0
        %644 = vmatpush1.msra.mxu0 0.0
        %645 = vmatprep.subr.mxu0 0.0
        %646 = vmatpush1.msra.mxu0 0.0
        %647 = vmatprep.subr.mxu0 0.0
        %648 = vmatpush1.msra.mxu0 0.0
        %649 = vmatprep.subr.mxu0 0.0
        %650 = vmatpush1.msra.mxu0 0.0
        %651 = vmatprep.subr.mxu0 0.0
        %652 = vmatpush1.msra.mxu0 0.0
        %653 = vmatprep.subr.mxu0 0.0
        %654 = vmatpush1.msra.mxu0 0.0
        %655 = vmatprep.subr.mxu0 0.0
        %656 = vmatpush1.msra.mxu0 0.0
        %657 = vmatprep.subr.mxu0 0.0
        %658 = vmatpush1.msra.mxu0 0.0
        %659 = vmatprep.subr.mxu0 0.0
        %660 = vmatpush1.msra.mxu0 0.0
        %661 = vmatprep.subr.mxu0 0.0
        %662 = vmatpush1.msra.mxu0 0.0
        %663 = vmatprep.subr.mxu0 0.0
        %664 = vmatpush1.msra.mxu0 0.0
        %665 = vmatprep.subr.mxu0 0.0
        %666 = vmatpush1.msra.mxu0 0.0
        %667 = vmatprep.subr.mxu0 0.0
        %668 = vmatpush1.msra.mxu0 0.0
        %669 = vmatprep.subr.mxu0 0.0
        %670 = vmatpush1.msra.mxu0 0.0
        %671 = vmatprep.subr.mxu0 0.0
        %672 = vmatpush1.msra.mxu0 0.0
        %673 = vmatprep.subr.mxu0 0.0
        %674 = vmatpush1.msra.mxu0 0.0
        %675 = vmatprep.subr.mxu0 0.0
        %676 = vmatpush1.msra.mxu0 0.0
        %677 = vmatprep.subr.mxu0 0.0
        %678 = vmatpush1.msra.mxu0 0.0
        %679 = vmatprep.subr.mxu0 0.0
        %680 = vmatpush1.msra.mxu0 0.0
        %681 = vmatprep.subr.mxu0 0.0
        %682 = vmatpush1.msra.mxu0 0.0
        %683 = vmatprep.subr.mxu0 0.0
        %684 = vmatpush1.msra.mxu0 0.0
        %685 = vmatprep.subr.mxu0 0.0
        %686 = vmatpush1.msra.mxu0 0.0
        %687 = vmatprep.subr.mxu0 0.0
        %688 = vmatpush1.msra.mxu0 0.0
        %689 = vmatprep.subr.mxu0 0.0
        %690 = vmatpush1.msra.mxu0 0.0
        %691 = vmatprep.subr.mxu0 0.0
        %692 = vmatpush1.msra.mxu0 0.0
        %693 = vmatprep.subr.mxu0 0.0
        %694 = vmatpush1.msra.mxu0 0.0
        %695 = vmatprep.subr.mxu0 0.0
        %696 = vmatpush1.msra.mxu0 0.0
        %697 = vmatprep.subr.mxu0 0.0
        %698 = vmatpush1.msra.mxu0 0.0
        %699 = vmatprep.subr.mxu0 0.0
        %700 = vmatpush1.msra.mxu0 0.0
        %701 = vmatprep.subr.mxu0 0.0
        %702 = vmatpush1.msra.mxu0 0.0
        %703 = vmatprep.subr.mxu0 0.0
        %704 = vmatpush1.msra.mxu0 0.0
        %705 = vmatprep.mubr.f32.mxu0 0.0
        %706 = vmatmul.mubr.f32.gmra.mrb[0].mxu0 %v639
        %v707 = vpop.f32.mrb[0].mxu0
        %v708 = vadd.f32 %v634, %v707
        %v709 = vpop.f32.mrb[0].mxu0
        %v710 = vadd.f32 %v636, %v709
        %711 = vdwg.mxu0
        %712 = vrot.lane.b32.xlu0 %v533, 16
        %v713 = vpop.permute.xlu0 %712
        %714 = vrot.lane.b32.xlu0 %v534, 16
        %v715 = vpop.permute.xlu0 %714
        %vm716 = vcmp.lt.s32.totalorder %v548, 16
        %v717 = vsel %vm716, %v713, %v715
        %v718 = vsel %vm716, %v715, %v713
        %v719 = vlaneseq
        %v720 = vshrl.u32 %v719, 7
        %v721 = vsub.s32 1, %v720
        %v722 = vrot.slane %v537, %v721
        %v723 = vlaneseq
        %v724 = vshrl.u32 %v723, 7
        %v725 = vsub.s32 1, %v724
        %v726 = vrot.slane %v538, %v725
        %v727 = vmul.f32 %v718, %v722
        %v728 = vmul.f32 %v717, %v726
        %s729 = scalar_lea.vmem %s5, 8
        %v730 = vld [vmem:[%s729] sm:$0xff]
        %v732 = vsel %vm563, %v730, 0
        %734 = vmatprep.subr.mxu0 %v728
        %735 = vmatpush1.msra.mxu0 %v727
        %736 = vmatprep.subr.mxu0 0.0
        %737 = vmatpush1.msra.mxu0 0.0
        %738 = vmatprep.subr.mxu0 0.0
        %739 = vmatpush1.msra.mxu0 0.0
        %740 = vmatprep.subr.mxu0 0.0
        %741 = vmatpush1.msra.mxu0 0.0
        %742 = vmatprep.subr.mxu0 0.0
        %743 = vmatpush1.msra.mxu0 0.0
        %744 = vmatprep.subr.mxu0 0.0
        %745 = vmatpush1.msra.mxu0 0.0
        %746 = vmatprep.subr.mxu0 0.0
        %747 = vmatpush1.msra.mxu0 0.0
        %748 = vmatprep.subr.mxu0 0.0
        %749 = vmatpush1.msra.mxu0 0.0
        %750 = vmatprep.subr.mxu0 0.0
        %751 = vmatpush1.msra.mxu0 0.0
        %752 = vmatprep.subr.mxu0 0.0
        %753 = vmatpush1.msra.mxu0 0.0
        %754 = vmatprep.subr.mxu0 0.0
        %755 = vmatpush1.msra.mxu0 0.0
        %756 = vmatprep.subr.mxu0 0.0
        %757 = vmatpush1.msra.mxu0 0.0
        %758 = vmatprep.subr.mxu0 0.0
        %759 = vmatpush1.msra.mxu0 0.0
        %760 = vmatprep.subr.mxu0 0.0
        %761 = vmatpush1.msra.mxu0 0.0
        %762 = vmatprep.subr.mxu0 0.0
        %763 = vmatpush1.msra.mxu0 0.0
        %764 = vmatprep.subr.mxu0 0.0
        %765 = vmatpush1.msra.mxu0 0.0
        %766 = vmatprep.subr.mxu0 0.0
        %767 = vmatpush1.msra.mxu0 0.0
        %768 = vmatprep.subr.mxu0 0.0
        %769 = vmatpush1.msra.mxu0 0.0
        %770 = vmatprep.subr.mxu0 0.0
        %771 = vmatpush1.msra.mxu0 0.0
        %772 = vmatprep.subr.mxu0 0.0
        %773 = vmatpush1.msra.mxu0 0.0
        %774 = vmatprep.subr.mxu0 0.0
        %775 = vmatpush1.msra.mxu0 0.0
        %776 = vmatprep.subr.mxu0 0.0
        %777 = vmatpush1.msra.mxu0 0.0
        %778 = vmatprep.subr.mxu0 0.0
        %779 = vmatpush1.msra.mxu0 0.0
        %780 = vmatprep.subr.mxu0 0.0
        %781 = vmatpush1.msra.mxu0 0.0
        %782 = vmatprep.subr.mxu0 0.0
        %783 = vmatpush1.msra.mxu0 0.0
        %784 = vmatprep.subr.mxu0 0.0
        %785 = vmatpush1.msra.mxu0 0.0
        %786 = vmatprep.subr.mxu0 0.0
        %787 = vmatpush1.msra.mxu0 0.0
        %788 = vmatprep.subr.mxu0 0.0
        %789 = vmatpush1.msra.mxu0 0.0
        %790 = vmatprep.subr.mxu0 0.0
        %791 = vmatpush1.msra.mxu0 0.0
        %792 = vmatprep.subr.mxu0 0.0
        %793 = vmatpush1.msra.mxu0 0.0
        %794 = vmatprep.subr.mxu0 0.0
        %795 = vmatpush1.msra.mxu0 0.0
        %796 = vmatprep.subr.mxu0 0.0
        %797 = vmatpush1.msra.mxu0 0.0
        %798 = vmatprep.mubr.f32.mxu0 0.0
        %799 = vmatmul.mubr.f32.gmra.mrb[0].mxu0 %v732
        %v800 = vpop.f32.mrb[0].mxu0
        %v801 = vadd.f32 0.0, %v800
        %v802 = vpop.f32.mrb[0].mxu0
        %v803 = vadd.f32 0.0, %v802
        %804 = vdwg.mxu0
        %v805 = vadd.f32 %v708, %v801
        %v806 = vadd.f32 %v710, %v803
        %807 = vrot.lane.b32.xlu0 %v533, 15
        %v808 = vpop.permute.xlu0 %807
        %809 = vrot.lane.b32.xlu0 %v534, 15
        %v810 = vpop.permute.xlu0 %809
        %vm811 = vcmp.lt.s32.totalorder %v548, 15
        %v812 = vsel %vm811, %v808, %v810
        %v813 = vsel %vm811, %v810, %v808
        %v814 = vlaneseq
        %v815 = vshrl.u32 %v814, 7
        %v816 = vsub.s32 2, %v815
        %v817 = vrot.slane %v537, %v816
        %v818 = vlaneseq
        %v819 = vshrl.u32 %v818, 7
        %v820 = vsub.s32 2, %v819
        %v821 = vrot.slane %v538, %v820
        %v822 = vmul.f32 %v813, %v817
        %v823 = vmul.f32 %v812, %v821
        %s824 = scalar_lea.vmem %s5, 16
        %v825 = vld [vmem:[%s824] sm:$0xff]
        %v827 = vsel %vm563, %v825, 0
        %829 = vmatprep.subr.mxu0 %v823
        %830 = vmatpush1.msra.mxu0 %v822
        %831 = vmatprep.subr.mxu0 0.0
        %832 = vmatpush1.msra.mxu0 0.0
        %833 = vmatprep.subr.mxu0 0.0
        %834 = vmatpush1.msra.mxu0 0.0
        %835 = vmatprep.subr.mxu0 0.0
        %836 = vmatpush1.msra.mxu0 0.0
        %837 = vmatprep.subr.mxu0 0.0
        %838 = vmatpush1.msra.mxu0 0.0
        %839 = vmatprep.subr.mxu0 0.0
        %840 = vmatpush1.msra.mxu0 0.0
        %841 = vmatprep.subr.mxu0 0.0
        %842 = vmatpush1.msra.mxu0 0.0
        %843 = vmatprep.subr.mxu0 0.0
        %844 = vmatpush1.msra.mxu0 0.0
        %845 = vmatprep.subr.mxu0 0.0
        %846 = vmatpush1.msra.mxu0 0.0
        %847 = vmatprep.subr.mxu0 0.0
        %848 = vmatpush1.msra.mxu0 0.0
        %849 = vmatprep.subr.mxu0 0.0
        %850 = vmatpush1.msra.mxu0 0.0
        %851 = vmatprep.subr.mxu0 0.0
        %852 = vmatpush1.msra.mxu0 0.0
        %853 = vmatprep.subr.mxu0 0.0
        %854 = vmatpush1.msra.mxu0 0.0
        %855 = vmatprep.subr.mxu0 0.0
        %856 = vmatpush1.msra.mxu0 0.0
        %857 = vmatprep.subr.mxu0 0.0
        %858 = vmatpush1.msra.mxu0 0.0
        %859 = vmatprep.subr.mxu0 0.0
        %860 = vmatpush1.msra.mxu0 0.0
        %861 = vmatprep.subr.mxu0 0.0
        %862 = vmatpush1.msra.mxu0 0.0
        %863 = vmatprep.subr.mxu0 0.0
        %864 = vmatpush1.msra.mxu0 0.0
        %865 = vmatprep.subr.mxu0 0.0
        %866 = vmatpush1.msra.mxu0 0.0
        %867 = vmatprep.subr.mxu0 0.0
        %868 = vmatpush1.msra.mxu0 0.0
        %869 = vmatprep.subr.mxu0 0.0
        %870 = vmatpush1.msra.mxu0 0.0
        %871 = vmatprep.subr.mxu0 0.0
        %872 = vmatpush1.msra.mxu0 0.0
        %873 = vmatprep.subr.mxu0 0.0
        %874 = vmatpush1.msra.mxu0 0.0
        %875 = vmatprep.subr.mxu0 0.0
        %876 = vmatpush1.msra.mxu0 0.0
        %877 = vmatprep.subr.mxu0 0.0
        %878 = vmatpush1.msra.mxu0 0.0
        %879 = vmatprep.subr.mxu0 0.0
        %880 = vmatpush1.msra.mxu0 0.0
        %881 = vmatprep.subr.mxu0 0.0
        %882 = vmatpush1.msra.mxu0 0.0
        %883 = vmatprep.subr.mxu0 0.0
        %884 = vmatpush1.msra.mxu0 0.0
        %885 = vmatprep.subr.mxu0 0.0
        %886 = vmatpush1.msra.mxu0 0.0
        %887 = vmatprep.subr.mxu0 0.0
        %888 = vmatpush1.msra.mxu0 0.0
        %889 = vmatprep.subr.mxu0 0.0
        %890 = vmatpush1.msra.mxu0 0.0
        %891 = vmatprep.subr.mxu0 0.0
        %892 = vmatpush1.msra.mxu0 0.0
        %893 = vmatprep.mubr.f32.mxu0 0.0
        %894 = vmatmul.mubr.f32.gmra.mrb[0].mxu0 %v827
        %v895 = vpop.f32.mrb[0].mxu0
        %v896 = vadd.f32 0.0, %v895
        %v897 = vpop.f32.mrb[0].mxu0
        %v898 = vadd.f32 0.0, %v897
        %899 = vdwg.mxu0
        %v900 = vadd.f32 %v805, %v896
        %v901 = vadd.f32 %v806, %v898
        %902 = vrot.lane.b32.xlu0 %v533, 1
        %v903 = vpop.permute.xlu0 %902
        %904 = vrot.lane.b32.xlu0 %v534, 1
        %v905 = vpop.permute.xlu0 %904
        %vm906 = vcmp.lt.s32.totalorder %v548, 1
        %v907 = vsel %vm906, %v903, %v905
        %v908 = vsel %vm906, %v905, %v903
        %v909 = vlaneseq
        %v910 = vshrl.u32 %v909, 7
        %v911 = vsub.s32 3, %v910
        %v912 = vrot.slane %v537, %v911
        %v913 = vlaneseq
        %v914 = vshrl.u32 %v913, 7
        %v915 = vsub.s32 3, %v914
        %v916 = vrot.slane %v538, %v915
        %v917 = vmul.f32 %v908, %v912
        %v918 = vmul.f32 %v907, %v916
        %s919 = scalar_lea.vmem %s5, 24
        %v920 = vld [vmem:[%s919] sm:$0xff]
        %v922 = vsel %vm563, %v920, 0
        %924 = vmatprep.subr.mxu0 %v918
        %925 = vmatpush1.msra.mxu0 %v917
        %926 = vmatprep.subr.mxu0 0.0
        %927 = vmatpush1.msra.mxu0 0.0
        %928 = vmatprep.subr.mxu0 0.0
        %929 = vmatpush1.msra.mxu0 0.0
        %930 = vmatprep.subr.mxu0 0.0
        %931 = vmatpush1.msra.mxu0 0.0
        %932 = vmatprep.subr.mxu0 0.0
        %933 = vmatpush1.msra.mxu0 0.0
        %934 = vmatprep.subr.mxu0 0.0
        %935 = vmatpush1.msra.mxu0 0.0
        %936 = vmatprep.subr.mxu0 0.0
        %937 = vmatpush1.msra.mxu0 0.0
        %938 = vmatprep.subr.mxu0 0.0
        %939 = vmatpush1.msra.mxu0 0.0
        %940 = vmatprep.subr.mxu0 0.0
        %941 = vmatpush1.msra.mxu0 0.0
        %942 = vmatprep.subr.mxu0 0.0
        %943 = vmatpush1.msra.mxu0 0.0
        %944 = vmatprep.subr.mxu0 0.0
        %945 = vmatpush1.msra.mxu0 0.0
        %946 = vmatprep.subr.mxu0 0.0
        %947 = vmatpush1.msra.mxu0 0.0
        %948 = vmatprep.subr.mxu0 0.0
        %949 = vmatpush1.msra.mxu0 0.0
        %950 = vmatprep.subr.mxu0 0.0
        %951 = vmatpush1.msra.mxu0 0.0
        %952 = vmatprep.subr.mxu0 0.0
        %953 = vmatpush1.msra.mxu0 0.0
        %954 = vmatprep.subr.mxu0 0.0
        %955 = vmatpush1.msra.mxu0 0.0
        %956 = vmatprep.subr.mxu0 0.0
        %957 = vmatpush1.msra.mxu0 0.0
        %958 = vmatprep.subr.mxu0 0.0
        %959 = vmatpush1.msra.mxu0 0.0
        %960 = vmatprep.subr.mxu0 0.0
        %961 = vmatpush1.msra.mxu0 0.0
        %962 = vmatprep.subr.mxu0 0.0
        %963 = vmatpush1.msra.mxu0 0.0
        %964 = vmatprep.subr.mxu0 0.0
        %965 = vmatpush1.msra.mxu0 0.0
        %966 = vmatprep.subr.mxu0 0.0
        %967 = vmatpush1.msra.mxu0 0.0
        %968 = vmatprep.subr.mxu0 0.0
        %969 = vmatpush1.msra.mxu0 0.0
        %970 = vmatprep.subr.mxu0 0.0
        %971 = vmatpush1.msra.mxu0 0.0
        %972 = vmatprep.subr.mxu0 0.0
        %973 = vmatpush1.msra.mxu0 0.0
        %974 = vmatprep.subr.mxu0 0.0
        %975 = vmatpush1.msra.mxu0 0.0
        %976 = vmatprep.subr.mxu0 0.0
        %977 = vmatpush1.msra.mxu0 0.0
        %978 = vmatprep.subr.mxu0 0.0
        %979 = vmatpush1.msra.mxu0 0.0
        %980 = vmatprep.subr.mxu0 0.0
        %981 = vmatpush1.msra.mxu0 0.0
        %982 = vmatprep.subr.mxu0 0.0
        %983 = vmatpush1.msra.mxu0 0.0
        %984 = vmatprep.subr.mxu0 0.0
        %985 = vmatpush1.msra.mxu0 0.0
        %986 = vmatprep.subr.mxu0 0.0
        %987 = vmatpush1.msra.mxu0 0.0
        %988 = vmatprep.mubr.f32.mxu0 0.0
        %989 = vmatmul.mubr.f32.gmra.mrb[0].mxu0 %v922
        %v990 = vpop.f32.mrb[0].mxu0
        %v991 = vadd.f32 0.0, %v990
        %v992 = vpop.f32.mrb[0].mxu0
        %v993 = vadd.f32 0.0, %v992
        %994 = vdwg.mxu0
        %v995 = vadd.f32 %v900, %v991
        %v996 = vadd.f32 %v901, %v993
        %997 = vrot.lane.b32.xlu0 %v533, 127
        %v998 = vpop.permute.xlu0 %997
        %999 = vrot.lane.b32.xlu0 %v534, 127
        %v1000 = vpop.permute.xlu0 %999
        %vm1001 = vcmp.lt.s32.totalorder %v548, 127
        %v1002 = vsel %vm1001, %v998, %v1000
        %v1003 = vsel %vm1001, %v1000, %v998
        %v1004 = vlaneseq
        %v1005 = vshrl.u32 %v1004, 7
        %v1006 = vsub.s32 5, %v1005
        %v1007 = vrot.slane %v537, %v1006
        %v1008 = vlaneseq
        %v1009 = vshrl.u32 %v1008, 7
        %v1010 = vsub.s32 5, %v1009
        %v1011 = vrot.slane %v538, %v1010
        %v1012 = vmul.f32 %v1002, %v1007
        %v1013 = vmul.f32 %v1003, %v1011
        %s1014 = scalar_lea.vmem %s5, 40
        %v1015 = vld [vmem:[%s1014] sm:$0xff]
        %v1017 = vsel %vm563, %v1015, 0
        %1019 = vmatprep.subr.mxu0 %v1013
        %1020 = vmatpush1.msra.mxu0 %v1012
        %1021 = vmatprep.subr.mxu0 0.0
        %1022 = vmatpush1.msra.mxu0 0.0
        %1023 = vmatprep.subr.mxu0 0.0
        %1024 = vmatpush1.msra.mxu0 0.0
        %1025 = vmatprep.subr.mxu0 0.0
        %1026 = vmatpush1.msra.mxu0 0.0
        %1027 = vmatprep.subr.mxu0 0.0
        %1028 = vmatpush1.msra.mxu0 0.0
        %1029 = vmatprep.subr.mxu0 0.0
        %1030 = vmatpush1.msra.mxu0 0.0
        %1031 = vmatprep.subr.mxu0 0.0
        %1032 = vmatpush1.msra.mxu0 0.0
        %1033 = vmatprep.subr.mxu0 0.0
        %1034 = vmatpush1.msra.mxu0 0.0
        %1035 = vmatprep.subr.mxu0 0.0
        %1036 = vmatpush1.msra.mxu0 0.0
        %1037 = vmatprep.subr.mxu0 0.0
        %1038 = vmatpush1.msra.mxu0 0.0
        %1039 = vmatprep.subr.mxu0 0.0
        %1040 = vmatpush1.msra.mxu0 0.0
        %1041 = vmatprep.subr.mxu0 0.0
        %1042 = vmatpush1.msra.mxu0 0.0
        %1043 = vmatprep.subr.mxu0 0.0
        %1044 = vmatpush1.msra.mxu0 0.0
        %1045 = vmatprep.subr.mxu0 0.0
        %1046 = vmatpush1.msra.mxu0 0.0
        %1047 = vmatprep.subr.mxu0 0.0
        %1048 = vmatpush1.msra.mxu0 0.0
        %1049 = vmatprep.subr.mxu0 0.0
        %1050 = vmatpush1.msra.mxu0 0.0
        %1051 = vmatprep.subr.mxu0 0.0
        %1052 = vmatpush1.msra.mxu0 0.0
        %1053 = vmatprep.subr.mxu0 0.0
        %1054 = vmatpush1.msra.mxu0 0.0
        %1055 = vmatprep.subr.mxu0 0.0
        %1056 = vmatpush1.msra.mxu0 0.0
        %1057 = vmatprep.subr.mxu0 0.0
        %1058 = vmatpush1.msra.mxu0 0.0
        %1059 = vmatprep.subr.mxu0 0.0
        %1060 = vmatpush1.msra.mxu0 0.0
        %1061 = vmatprep.subr.mxu0 0.0
        %1062 = vmatpush1.msra.mxu0 0.0
        %1063 = vmatprep.subr.mxu0 0.0
        %1064 = vmatpush1.msra.mxu0 0.0
        %1065 = vmatprep.subr.mxu0 0.0
        %1066 = vmatpush1.msra.mxu0 0.0
        %1067 = vmatprep.subr.mxu0 0.0
        %1068 = vmatpush1.msra.mxu0 0.0
        %1069 = vmatprep.subr.mxu0 0.0
        %1070 = vmatpush1.msra.mxu0 0.0
        %1071 = vmatprep.subr.mxu0 0.0
        %1072 = vmatpush1.msra.mxu0 0.0
        %1073 = vmatprep.subr.mxu0 0.0
        %1074 = vmatpush1.msra.mxu0 0.0
        %1075 = vmatprep.subr.mxu0 0.0
        %1076 = vmatpush1.msra.mxu0 0.0
        %1077 = vmatprep.subr.mxu0 0.0
        %1078 = vmatpush1.msra.mxu0 0.0
        %1079 = vmatprep.subr.mxu0 0.0
        %1080 = vmatpush1.msra.mxu0 0.0
        %1081 = vmatprep.subr.mxu0 0.0
        %1082 = vmatpush1.msra.mxu0 0.0
        %1083 = vmatprep.mubr.f32.mxu0 0.0
        %1084 = vmatmul.mubr.f32.gmra.mrb[0].mxu0 %v1017
        %v1085 = vpop.f32.mrb[0].mxu0
        %v1086 = vadd.f32 0.0, %v1085
        %v1087 = vpop.f32.mrb[0].mxu0
        %v1088 = vadd.f32 0.0, %v1087
        %1089 = vdwg.mxu0
        %v1090 = vadd.f32 %v995, %v1086
        %v1091 = vadd.f32 %v996, %v1088
        %1092 = vrot.lane.b32.xlu0 %v533, 113
        %v1093 = vpop.permute.xlu0 %1092
        %1094 = vrot.lane.b32.xlu0 %v534, 113
        %v1095 = vpop.permute.xlu0 %1094
        %vm1096 = vcmp.lt.s32.totalorder %v548, 113
        %v1097 = vsel %vm1096, %v1093, %v1095
        %v1098 = vsel %vm1096, %v1095, %v1093
        %v1099 = vlaneseq
        %v1100 = vshrl.u32 %v1099, 7
        %v1101 = vsub.s32 6, %v1100
        %v1102 = vrot.slane %v537, %v1101
        %v1103 = vlaneseq
        %v1104 = vshrl.u32 %v1103, 7
        %v1105 = vsub.s32 6, %v1104
        %v1106 = vrot.slane %v538, %v1105
        %v1107 = vmul.f32 %v1097, %v1102
        %v1108 = vmul.f32 %v1098, %v1106
        %s1109 = scalar_lea.vmem %s5, 48
        %v1110 = vld [vmem:[%s1109] sm:$0xff]
        %v1112 = vsel %vm563, %v1110, 0
        %1114 = vmatprep.subr.mxu0 %v1108
        %1115 = vmatpush1.msra.mxu0 %v1107
        %1116 = vmatprep.subr.mxu0 0.0
        %1117 = vmatpush1.msra.mxu0 0.0
        %1118 = vmatprep.subr.mxu0 0.0
        %1119 = vmatpush1.msra.mxu0 0.0
        %1120 = vmatprep.subr.mxu0 0.0
        %1121 = vmatpush1.msra.mxu0 0.0
        %1122 = vmatprep.subr.mxu0 0.0
        %1123 = vmatpush1.msra.mxu0 0.0
        %1124 = vmatprep.subr.mxu0 0.0
        %1125 = vmatpush1.msra.mxu0 0.0
        %1126 = vmatprep.subr.mxu0 0.0
        %1127 = vmatpush1.msra.mxu0 0.0
        %1128 = vmatprep.subr.mxu0 0.0
        %1129 = vmatpush1.msra.mxu0 0.0
        %1130 = vmatprep.subr.mxu0 0.0
        %1131 = vmatpush1.msra.mxu0 0.0
        %1132 = vmatprep.subr.mxu0 0.0
        %1133 = vmatpush1.msra.mxu0 0.0
        %1134 = vmatprep.subr.mxu0 0.0
        %1135 = vmatpush1.msra.mxu0 0.0
        %1136 = vmatprep.subr.mxu0 0.0
        %1137 = vmatpush1.msra.mxu0 0.0
        %1138 = vmatprep.subr.mxu0 0.0
        %1139 = vmatpush1.msra.mxu0 0.0
        %1140 = vmatprep.subr.mxu0 0.0
        %1141 = vmatpush1.msra.mxu0 0.0
        %1142 = vmatprep.subr.mxu0 0.0
        %1143 = vmatpush1.msra.mxu0 0.0
        %1144 = vmatprep.subr.mxu0 0.0
        %1145 = vmatpush1.msra.mxu0 0.0
        %1146 = vmatprep.subr.mxu0 0.0
        %1147 = vmatpush1.msra.mxu0 0.0
        %1148 = vmatprep.subr.mxu0 0.0
        %1149 = vmatpush1.msra.mxu0 0.0
        %1150 = vmatprep.subr.mxu0 0.0
        %1151 = vmatpush1.msra.mxu0 0.0
        %1152 = vmatprep.subr.mxu0 0.0
        %1153 = vmatpush1.msra.mxu0 0.0
        %1154 = vmatprep.subr.mxu0 0.0
        %1155 = vmatpush1.msra.mxu0 0.0
        %1156 = vmatprep.subr.mxu0 0.0
        %1157 = vmatpush1.msra.mxu0 0.0
        %1158 = vmatprep.subr.mxu0 0.0
        %1159 = vmatpush1.msra.mxu0 0.0
        %1160 = vmatprep.subr.mxu0 0.0
        %1161 = vmatpush1.msra.mxu0 0.0
        %1162 = vmatprep.subr.mxu0 0.0
        %1163 = vmatpush1.msra.mxu0 0.0
        %1164 = vmatprep.subr.mxu0 0.0
        %1165 = vmatpush1.msra.mxu0 0.0
        %1166 = vmatprep.subr.mxu0 0.0
        %1167 = vmatpush1.msra.mxu0 0.0
        %1168 = vmatprep.subr.mxu0 0.0
        %1169 = vmatpush1.msra.mxu0 0.0
        %1170 = vmatprep.subr.mxu0 0.0
        %1171 = vmatpush1.msra.mxu0 0.0
        %1172 = vmatprep.subr.mxu0 0.0
        %1173 = vmatpush1.msra.mxu0 0.0
        %1174 = vmatprep.subr.mxu0 0.0
        %1175 = vmatpush1.msra.mxu0 0.0
        %1176 = vmatprep.subr.mxu0 0.0
        %1177 = vmatpush1.msra.mxu0 0.0
        %1178 = vmatprep.mubr.f32.mxu0 0.0
        %1179 = vmatmul.mubr.f32.gmra.mrb[0].mxu0 %v1112
        %v1180 = vpop.f32.mrb[0].mxu0
        %v1181 = vadd.f32 0.0, %v1180
        %v1182 = vpop.f32.mrb[0].mxu0
        %v1183 = vadd.f32 0.0, %v1182
        %1184 = vdwg.mxu0
        %v1185 = vadd.f32 %v1090, %v1181
        %v1186 = vadd.f32 %v1091, %v1183
        %1187 = vrot.lane.b32.xlu0 %v533, 112
        %v1188 = vpop.permute.xlu0 %1187
        %1189 = vrot.lane.b32.xlu0 %v534, 112
        %v1190 = vpop.permute.xlu0 %1189
        %vm1191 = vcmp.lt.s32.totalorder %v548, 112
        %v1192 = vsel %vm1191, %v1188, %v1190
        %v1193 = vsel %vm1191, %v1190, %v1188
        %v1194 = vlaneseq
        %v1195 = vshrl.u32 %v1194, 7
        %v1196 = vsub.s32 7, %v1195
        %v1197 = vrot.slane %v537, %v1196
        %v1198 = vlaneseq
        %v1199 = vshrl.u32 %v1198, 7
        %v1200 = vsub.s32 7, %v1199
        %v1201 = vrot.slane %v538, %v1200
        %v1202 = vmul.f32 %v1192, %v1197
        %v1203 = vmul.f32 %v1193, %v1201
        %s1204 = scalar_lea.vmem %s5, 56
        %v1205 = vld [vmem:[%s1204] sm:$0xff]
        %v1207 = vsel %vm563, %v1205, 0
        %1209 = vmatprep.subr.mxu0 %v1203
        %1210 = vmatpush1.msra.mxu0 %v1202
        %1211 = vmatprep.subr.mxu0 0.0
        %1212 = vmatpush1.msra.mxu0 0.0
        %1213 = vmatprep.subr.mxu0 0.0
        %1214 = vmatpush1.msra.mxu0 0.0
        %1215 = vmatprep.subr.mxu0 0.0
        %1216 = vmatpush1.msra.mxu0 0.0
        %1217 = vmatprep.subr.mxu0 0.0
        %1218 = vmatpush1.msra.mxu0 0.0
        %1219 = vmatprep.subr.mxu0 0.0
        %1220 = vmatpush1.msra.mxu0 0.0
        %1221 = vmatprep.subr.mxu0 0.0
        %1222 = vmatpush1.msra.mxu0 0.0
        %1223 = vmatprep.subr.mxu0 0.0
        %1224 = vmatpush1.msra.mxu0 0.0
        %1225 = vmatprep.subr.mxu0 0.0
        %1226 = vmatpush1.msra.mxu0 0.0
        %1227 = vmatprep.subr.mxu0 0.0
        %1228 = vmatpush1.msra.mxu0 0.0
        %1229 = vmatprep.subr.mxu0 0.0
        %1230 = vmatpush1.msra.mxu0 0.0
        %1231 = vmatprep.subr.mxu0 0.0
        %1232 = vmatpush1.msra.mxu0 0.0
        %1233 = vmatprep.subr.mxu0 0.0
        %1234 = vmatpush1.msra.mxu0 0.0
        %1235 = vmatprep.subr.mxu0 0.0
        %1236 = vmatpush1.msra.mxu0 0.0
        %1237 = vmatprep.subr.mxu0 0.0
        %1238 = vmatpush1.msra.mxu0 0.0
        %1239 = vmatprep.subr.mxu0 0.0
        %1240 = vmatpush1.msra.mxu0 0.0
        %1241 = vmatprep.subr.mxu0 0.0
        %1242 = vmatpush1.msra.mxu0 0.0
        %1243 = vmatprep.subr.mxu0 0.0
        %1244 = vmatpush1.msra.mxu0 0.0
        %1245 = vmatprep.subr.mxu0 0.0
        %1246 = vmatpush1.msra.mxu0 0.0
        %1247 = vmatprep.subr.mxu0 0.0
        %1248 = vmatpush1.msra.mxu0 0.0
        %1249 = vmatprep.subr.mxu0 0.0
        %1250 = vmatpush1.msra.mxu0 0.0
        %1251 = vmatprep.subr.mxu0 0.0
        %1252 = vmatpush1.msra.mxu0 0.0
        %1253 = vmatprep.subr.mxu0 0.0
        %1254 = vmatpush1.msra.mxu0 0.0
        %1255 = vmatprep.subr.mxu0 0.0
        %1256 = vmatpush1.msra.mxu0 0.0
        %1257 = vmatprep.subr.mxu0 0.0
        %1258 = vmatpush1.msra.mxu0 0.0
        %1259 = vmatprep.subr.mxu0 0.0
        %1260 = vmatpush1.msra.mxu0 0.0
        %1261 = vmatprep.subr.mxu0 0.0
        %1262 = vmatpush1.msra.mxu0 0.0
        %1263 = vmatprep.subr.mxu0 0.0
        %1264 = vmatpush1.msra.mxu0 0.0
        %1265 = vmatprep.subr.mxu0 0.0
        %1266 = vmatpush1.msra.mxu0 0.0
        %1267 = vmatprep.subr.mxu0 0.0
        %1268 = vmatpush1.msra.mxu0 0.0
        %1269 = vmatprep.subr.mxu0 0.0
        %1270 = vmatpush1.msra.mxu0 0.0
        %1271 = vmatprep.subr.mxu0 0.0
        %1272 = vmatpush1.msra.mxu0 0.0
        %1273 = vmatprep.mubr.f32.mxu0 0.0
        %1274 = vmatmul.mubr.f32.gmra.mrb[0].mxu0 %v1207
        %v1275 = vpop.f32.mrb[0].mxu0
        %v1276 = vadd.f32 0.0, %v1275
        %v1277 = vpop.f32.mrb[0].mxu0
        %v1278 = vadd.f32 0.0, %v1277
        %1279 = vdwg.mxu0
        %v1280 = vadd.f32 %v1185, %v1276
        %v1281 = vadd.f32 %v1186, %v1278
        %1282 = vrot.lane.b32.xlu0 %v533, 111
        %v1283 = vpop.permute.xlu0 %1282
        %1284 = vrot.lane.b32.xlu0 %v534, 111
        %v1285 = vpop.permute.xlu0 %1284
        %vm1286 = vcmp.lt.s32.totalorder %v548, 111
        %v1287 = vsel %vm1286, %v1283, %v1285
        %v1288 = vsel %vm1286, %v1285, %v1283
        %v1289 = vlaneseq
        %v1290 = vshrl.u32 %v1289, 7
        %v1291 = vsub.s32 0, %v1290
        %v1292 = vrot.slane %v539, %v1291
        %v1293 = vlaneseq
        %v1294 = vshrl.u32 %v1293, 7
        %v1295 = vsub.s32 0, %v1294
        %v1296 = vrot.slane %v540, %v1295
        %v1297 = vmul.f32 %v1287, %v1292
        %v1298 = vmul.f32 %v1288, %v1296
        %s1299 = scalar_lea.vmem %s5, 64
        %v1300 = vld [vmem:[%s1299] sm:$0xff]
        %v1302 = vsel %vm563, %v1300, 0
        %1304 = vmatprep.subr.mxu0 %v1298
        %1305 = vmatpush1.msra.mxu0 %v1297
        %1306 = vmatprep.subr.mxu0 0.0
        %1307 = vmatpush1.msra.mxu0 0.0
        %1308 = vmatprep.subr.mxu0 0.0
        %1309 = vmatpush1.msra.mxu0 0.0
        %1310 = vmatprep.subr.mxu0 0.0
        %1311 = vmatpush1.msra.mxu0 0.0
        %1312 = vmatprep.subr.mxu0 0.0
        %1313 = vmatpush1.msra.mxu0 0.0
        %1314 = vmatprep.subr.mxu0 0.0
        %1315 = vmatpush1.msra.mxu0 0.0
        %1316 = vmatprep.subr.mxu0 0.0
        %1317 = vmatpush1.msra.mxu0 0.0
        %1318 = vmatprep.subr.mxu0 0.0
        %1319 = vmatpush1.msra.mxu0 0.0
        %1320 = vmatprep.subr.mxu0 0.0
        %1321 = vmatpush1.msra.mxu0 0.0
        %1322 = vmatprep.subr.mxu0 0.0
        %1323 = vmatpush1.msra.mxu0 0.0
        %1324 = vmatprep.subr.mxu0 0.0
        %1325 = vmatpush1.msra.mxu0 0.0
        %1326 = vmatprep.subr.mxu0 0.0
        %1327 = vmatpush1.msra.mxu0 0.0
        %1328 = vmatprep.subr.mxu0 0.0
        %1329 = vmatpush1.msra.mxu0 0.0
        %1330 = vmatprep.subr.mxu0 0.0
        %1331 = vmatpush1.msra.mxu0 0.0
        %1332 = vmatprep.subr.mxu0 0.0
        %1333 = vmatpush1.msra.mxu0 0.0
        %1334 = vmatprep.subr.mxu0 0.0
        %1335 = vmatpush1.msra.mxu0 0.0
        %1336 = vmatprep.subr.mxu0 0.0
        %1337 = vmatpush1.msra.mxu0 0.0
        %1338 = vmatprep.subr.mxu0 0.0
        %1339 = vmatpush1.msra.mxu0 0.0
        %1340 = vmatprep.subr.mxu0 0.0
        %1341 = vmatpush1.msra.mxu0 0.0
        %1342 = vmatprep.subr.mxu0 0.0
        %1343 = vmatpush1.msra.mxu0 0.0
        %1344 = vmatprep.subr.mxu0 0.0
        %1345 = vmatpush1.msra.mxu0 0.0
        %1346 = vmatprep.subr.mxu0 0.0
        %1347 = vmatpush1.msra.mxu0 0.0
        %1348 = vmatprep.subr.mxu0 0.0
        %1349 = vmatpush1.msra.mxu0 0.0
        %1350 = vmatprep.subr.mxu0 0.0
        %1351 = vmatpush1.msra.mxu0 0.0
        %1352 = vmatprep.subr.mxu0 0.0
        %1353 = vmatpush1.msra.mxu0 0.0
        %1354 = vmatprep.subr.mxu0 0.0
        %1355 = vmatpush1.msra.mxu0 0.0
        %1356 = vmatprep.subr.mxu0 0.0
        %1357 = vmatpush1.msra.mxu0 0.0
        %1358 = vmatprep.subr.mxu0 0.0
        %1359 = vmatpush1.msra.mxu0 0.0
        %1360 = vmatprep.subr.mxu0 0.0
        %1361 = vmatpush1.msra.mxu0 0.0
        %1362 = vmatprep.subr.mxu0 0.0
        %1363 = vmatpush1.msra.mxu0 0.0
        %1364 = vmatprep.subr.mxu0 0.0
        %1365 = vmatpush1.msra.mxu0 0.0
        %1366 = vmatprep.subr.mxu0 0.0
        %1367 = vmatpush1.msra.mxu0 0.0
        %1368 = vmatprep.mubr.f32.mxu0 0.0
        %1369 = vmatmul.mubr.f32.gmra.mrb[0].mxu0 %v1302
        %v1370 = vpop.f32.mrb[0].mxu0
        %v1371 = vadd.f32 0.0, %v1370
        %v1372 = vpop.f32.mrb[0].mxu0
        %v1373 = vadd.f32 0.0, %v1372
        %1374 = vdwg.mxu0
        %v1375 = vadd.f32 %v1280, %v1371
        %v1376 = vadd.f32 %v1281, %v1373
        %v1377 = vld [vmem:[%s6] sm:$0xff]
        %1379 = vset.pattern.permute.xlu0 0
        %1380 = vperm.xlu0 %1379, %v1377
        %v1381 = vpop.permute.xlu0 %1380
        %v1383 = vadd.f32 %v1375, %v1381
        %v1384 = vadd.f32 %v1376, %v1381
        %v1385 = vmax.f32 %v1383, 0.0
        %v1386 = vmax.f32 %v1384, 0.0
        %v1387 = vld [vmem:[%s3] ss:$2 sm:$0x3]
        %v1388 = vmul.f32 %v1385, 0.46875
        %v1389 = vmul.f32 %v1386, 0.46875
        %v1392 = vcombine.low %v1388, %v1389
        %v1394 = vunpack.c.l.s4 1966171168
        %v1395 = vunpack.c.0.s8 %v1394
        %v1396 = vlaneseq
        %v1397 = vshrl.u32 %v1396, 7
        %v1398 = vsub.s32 %v1395, %v1397
        %v1399 = vrot.slane %v1392, %v1398
        %v1401 = vunpack.c.l.s4 1966171168
        %v1402 = vunpack.c.0.s8 %v1401
        %v1403 = vlaneseq
        %v1404 = vshrl.u32 %v1403, 7
        %v1405 = vsub.s32 %v1402, %v1404
        %v1406 = vrot.slane %v1399, %v1405
        %v1408 = vadd.f32 %v1387, %v1406
        %s1409 = scalar_lea.vmem %s3, 1
        %v1410 = vld [vmem:[%s1409] ss:$2 sm:$0x3]
        %v1411 = vcombine.high %v1399, %v1399
        %v1413 = vunpack.c.l.s4 1966171168
        %v1414 = vunpack.c.0.s8 %v1413
        %v1415 = vlaneseq
        %v1416 = vshrl.u32 %v1415, 7
        %v1417 = vsub.s32 %v1414, %v1416
        %v1418 = vrot.slane %v1411, %v1417
        %v1420 = vadd.f32 %v1410, %v1418
        %v1421 = vfloor.f32 %v1408
        %v1422 = vfloor.f32 %v1420
        %v1423 = vsub.f32 %v1408, %v1421
        %v1424 = vsub.f32 %v1420, %v1422
        %v1425 = vcvt.f32.s32.to.zero.pseudo %v1421
        %v1426 = vcvt.f32.s32.to.zero.pseudo %v1422
        %v1427 = vlaneseq
        %v1428 = vshrl.u32 %v1427, 7
        %v1429 = vadd.s32 %v1428, 8
        %v1430 = vlaneseq
        %v1431 = vshrl.u32 %v1430, 7
        %v1432 = vsub.s32 0, %v1431
        %v1433 = vrot.slane %v1425, %v1432
        %v1434 = vlaneseq
        %v1435 = vshrl.u32 %v1434, 7
        %v1436 = vsub.s32 1, %v1435
        %v1437 = vrot.slane %v1425, %v1436
        %vm1438 = vcmp.eq.s32.totalorder %v1428, %v1433
        %vm1439 = vcmp.eq.s32.totalorder %v1428, %v1437
        %vm1440 = vcmp.eq.s32.totalorder %v1429, %v1433
        %vm1441 = vcmp.eq.s32.totalorder %v1429, %v1437
        %v1442 = vsub.f32 1.0, %v1423
        %v1444 = vlaneseq
        %v1445 = vshrl.u32 %v1444, 7
        %v1446 = vsub.s32 0, %v1445
        %v1447 = vrot.slane %v1442, %v1446
        %v1448 = vlaneseq
        %v1449 = vshrl.u32 %v1448, 7
        %v1450 = vsub.s32 1, %v1449
        %v1451 = vrot.slane %v1442, %v1450
        %v1454 = vsel %vm1438, %v1447, 0.0
        %v1455 = vsel %vm1439, %v1451, 0.0
        %v1456 = vsel %vm1440, %v1447, 0.0
        %v1457 = vsel %vm1441, %v1451, 0.0
        %v1458 = vadd.s32 %v1425, 1
        %v1459 = vlaneseq
        %v1460 = vshrl.u32 %v1459, 7
        %v1461 = vsub.s32 0, %v1460
        %v1462 = vrot.slane %v1458, %v1461
        %v1463 = vlaneseq
        %v1464 = vshrl.u32 %v1463, 7
        %v1465 = vsub.s32 1, %v1464
        %v1466 = vrot.slane %v1458, %v1465
        %vm1467 = vcmp.eq.s32.totalorder %v1428, %v1462
        %vm1468 = vcmp.eq.s32.totalorder %v1428, %v1466
        %vm1469 = vcmp.eq.s32.totalorder %v1429, %v1462
        %vm1470 = vcmp.eq.s32.totalorder %v1429, %v1466
        %v1472 = vlaneseq
        %v1473 = vshrl.u32 %v1472, 7
        %v1474 = vsub.s32 0, %v1473
        %v1475 = vrot.slane %v1423, %v1474
        %v1476 = vlaneseq
        %v1477 = vshrl.u32 %v1476, 7
        %v1478 = vsub.s32 1, %v1477
        %v1479 = vrot.slane %v1423, %v1478
        %v1482 = vsel %vm1467, %v1475, 0.0
        %v1483 = vsel %vm1468, %v1479, 0.0
        %v1484 = vsel %vm1469, %v1475, 0.0
        %v1485 = vsel %vm1470, %v1479, 0.0
        %v1486 = vadd.f32 %v1454, %v1482
        %v1487 = vadd.f32 %v1455, %v1483
        %v1488 = vadd.f32 %v1456, %v1484
        %v1489 = vadd.f32 %v1457, %v1485
        %v1490 = vlaneseq
        %v1491 = vshrl.u32 %v1490, 7
        %v1492 = vsub.s32 0, %v1491
        %v1493 = vrot.slane %v1426, %v1492
        %v1494 = vlaneseq
        %v1495 = vshrl.u32 %v1494, 7
        %v1496 = vsub.s32 1, %v1495
        %v1497 = vrot.slane %v1426, %v1496
        %vm1498 = vcmp.eq.s32.totalorder %v1428, %v1493
        %vm1499 = vcmp.eq.s32.totalorder %v1428, %v1497
        %vm1500 = vcmp.eq.s32.totalorder %v1429, %v1493
        %vm1501 = vcmp.eq.s32.totalorder %v1429, %v1497
        %v1502 = vsub.f32 1.0, %v1424
        %v1504 = vlaneseq
        %v1505 = vshrl.u32 %v1504, 7
        %v1506 = vsub.s32 0, %v1505
        %v1507 = vrot.slane %v1502, %v1506
        %v1508 = vlaneseq
        %v1509 = vshrl.u32 %v1508, 7
        %v1510 = vsub.s32 1, %v1509
        %v1511 = vrot.slane %v1502, %v1510
        %v1514 = vsel %vm1498, %v1507, 0.0
        %v1515 = vsel %vm1499, %v1511, 0.0
        %v1516 = vsel %vm1500, %v1507, 0.0
        %v1517 = vsel %vm1501, %v1511, 0.0
        %v1518 = vadd.s32 %v1426, 1
        %v1519 = vlaneseq
        %v1520 = vshrl.u32 %v1519, 7
        %v1521 = vsub.s32 0, %v1520
        %v1522 = vrot.slane %v1518, %v1521
        %v1523 = vlaneseq
        %v1524 = vshrl.u32 %v1523, 7
        %v1525 = vsub.s32 1, %v1524
        %v1526 = vrot.slane %v1518, %v1525
        %vm1527 = vcmp.eq.s32.totalorder %v1428, %v1522
        %vm1528 = vcmp.eq.s32.totalorder %v1428, %v1526
        %vm1529 = vcmp.eq.s32.totalorder %v1429, %v1522
        %vm1530 = vcmp.eq.s32.totalorder %v1429, %v1526
        %v1532 = vlaneseq
        %v1533 = vshrl.u32 %v1532, 7
        %v1534 = vsub.s32 0, %v1533
        %v1535 = vrot.slane %v1424, %v1534
        %v1536 = vlaneseq
        %v1537 = vshrl.u32 %v1536, 7
        %v1538 = vsub.s32 1, %v1537
        %v1539 = vrot.slane %v1424, %v1538
        %v1542 = vsel %vm1527, %v1535, 0.0
        %v1543 = vsel %vm1528, %v1539, 0.0
        %v1544 = vsel %vm1529, %v1535, 0.0
        %v1545 = vsel %vm1530, %v1539, 0.0
        %v1546 = vadd.f32 %v1514, %v1542
        %v1547 = vadd.f32 %v1515, %v1543
        %v1548 = vadd.f32 %v1516, %v1544
        %v1549 = vadd.f32 %v1517, %v1545
        %v1550 = vld [vmem:[%s527] sm:$0xff]
        %v1551 = vld [vmem:[%s527 + $0x8] sm:$0xff]
        %v1552 = vld [vmem:[%s527 + $0x10] sm:$0xff]
        %v1553 = vld [vmem:[%s527 + $0x18] sm:$0xff]
        %v1554 = vld [vmem:[%s527 + $0x20] sm:$0xff]
        %v1555 = vld [vmem:[%s527 + $0x28] sm:$0xff]
        %v1556 = vld [vmem:[%s527 + $0x30] sm:$0xff]
        %v1557 = vld [vmem:[%s527 + $0x38] sm:$0xff]
        %v1558 = vld [vmem:[%s527 + $0x40] sm:$0xff]
        %v1559 = vld [vmem:[%s527 + $0x48] sm:$0xff]
        %v1560 = vld [vmem:[%s527 + $0x50] sm:$0xff]
        %v1561 = vld [vmem:[%s527 + $0x58] sm:$0xff]
        %v1562 = vld [vmem:[%s527 + $0x60] sm:$0xff]
        %v1563 = vld [vmem:[%s527 + $0x68] sm:$0xff]
        %v1564 = vld [vmem:[%s527 + $0x70] sm:$0xff]
        %v1565 = vld [vmem:[%s527 + $0x78] sm:$0xff]
        %vm1566 = vcmask 130048
        %v1568 = vsel %vm1566, %v1550, 0
        %v1571 = vsel %vm1566, %v1551, 0
        %v1574 = vsel %vm1566, %v1552, 0
        %v1577 = vsel %vm1566, %v1553, 0
        %v1580 = vsel %vm1566, %v1554, 0
        %v1583 = vsel %vm1566, %v1555, 0
        %v1586 = vsel %vm1566, %v1556, 0
        %v1589 = vsel %vm1566, %v1557, 0
        %v1592 = vsel %vm1566, %v1558, 0
        %v1595 = vsel %vm1566, %v1559, 0
        %v1598 = vsel %vm1566, %v1560, 0
        %v1601 = vsel %vm1566, %v1561, 0
        %v1604 = vsel %vm1566, %v1562, 0
        %v1607 = vsel %vm1566, %v1563, 0
        %v1610 = vsel %vm1566, %v1564, 0
        %v1613 = vsel %vm1566, %v1565, 0
        %1615 = vmatprep.subr.mxu0 %v1487
        %1616 = vmatpush1.msra.mxu0 %v1486
        %1617 = vmatprep.subr.mxu0 %v1489
        %1618 = vmatpush1.msra.mxu0 %v1488
        %1619 = vmatprep.subr.mxu0 0.0
        %1620 = vmatpush1.msra.mxu0 0.0
        %1621 = vmatprep.subr.mxu0 0.0
        %1622 = vmatpush1.msra.mxu0 0.0
        %1623 = vmatprep.subr.mxu0 0.0
        %1624 = vmatpush1.msra.mxu0 0.0
        %1625 = vmatprep.subr.mxu0 0.0
        %1626 = vmatpush1.msra.mxu0 0.0
        %1627 = vmatprep.subr.mxu0 0.0
        %1628 = vmatpush1.msra.mxu0 0.0
        %1629 = vmatprep.subr.mxu0 0.0
        %1630 = vmatpush1.msra.mxu0 0.0
        %1631 = vmatprep.subr.mxu0 0.0
        %1632 = vmatpush1.msra.mxu0 0.0
        %1633 = vmatprep.subr.mxu0 0.0
        %1634 = vmatpush1.msra.mxu0 0.0
        %1635 = vmatprep.subr.mxu0 0.0
        %1636 = vmatpush1.msra.mxu0 0.0
        %1637 = vmatprep.subr.mxu0 0.0
        %1638 = vmatpush1.msra.mxu0 0.0
        %1639 = vmatprep.subr.mxu0 0.0
        %1640 = vmatpush1.msra.mxu0 0.0
        %1641 = vmatprep.subr.mxu0 0.0
        %1642 = vmatpush1.msra.mxu0 0.0
        %1643 = vmatprep.subr.mxu0 0.0
        %1644 = vmatpush1.msra.mxu0 0.0
        %1645 = vmatprep.subr.mxu0 0.0
        %1646 = vmatpush1.msra.mxu0 0.0
        %1647 = vmatprep.subr.mxu0 0.0
        %1648 = vmatpush1.msra.mxu0 0.0
        %1649 = vmatprep.subr.mxu0 0.0
        %1650 = vmatpush1.msra.mxu0 0.0
        %1651 = vmatprep.subr.mxu0 0.0
        %1652 = vmatpush1.msra.mxu0 0.0
        %1653 = vmatprep.subr.mxu0 0.0
        %1654 = vmatpush1.msra.mxu0 0.0
        %1655 = vmatprep.subr.mxu0 0.0
        %1656 = vmatpush1.msra.mxu0 0.0
        %1657 = vmatprep.subr.mxu0 0.0
        %1658 = vmatpush1.msra.mxu0 0.0
        %1659 = vmatprep.subr.mxu0 0.0
        %1660 = vmatpush1.msra.mxu0 0.0
        %1661 = vmatprep.subr.mxu0 0.0
        %1662 = vmatpush1.msra.mxu0 0.0
        %1663 = vmatprep.subr.mxu0 0.0
        %1664 = vmatpush1.msra.mxu0 0.0
        %1665 = vmatprep.subr.mxu0 0.0
        %1666 = vmatpush1.msra.mxu0 0.0
        %1667 = vmatprep.subr.mxu0 0.0
        %1668 = vmatpush1.msra.mxu0 0.0
        %1669 = vmatprep.subr.mxu0 0.0
        %1670 = vmatpush1.msra.mxu0 0.0
        %1671 = vmatprep.subr.mxu0 0.0
        %1672 = vmatpush1.msra.mxu0 0.0
        %1673 = vmatprep.subr.mxu0 0.0
        %1674 = vmatpush1.msra.mxu0 0.0
        %1675 = vmatprep.subr.mxu0 0.0
        %1676 = vmatpush1.msra.mxu0 0.0
        %1677 = vmatprep.subr.mxu0 0.0
        %1678 = vmatpush1.msra.mxu0 0.0
        %1679 = vmatprep.mubr.f32.mxu0 0.0
        %1680 = vmatmul.mubr.f32.gmra.mrb[0].mxu0 %v1568
        %v1681 = vpop.f32.mrb[0].mxu0
        %v1682 = vadd.f32 0.0, %v1681
        %v1683 = vpop.f32.mrb[0].mxu0
        %v1684 = vadd.f32 0.0, %v1683
        %1685 = vmatprep.mubr.f32.mxu0 0.0
        %1686 = vmatmul.mubr.f32.gmra.mrb[0].mxu0 %v1571
        %v1687 = vpop.f32.mrb[0].mxu0
        %v1688 = vadd.f32 0.0, %v1687
        %v1689 = vpop.f32.mrb[0].mxu0
        %v1690 = vadd.f32 0.0, %v1689
        %1691 = vmatprep.mubr.f32.mxu0 0.0
        %1692 = vmatmul.mubr.f32.gmra.mrb[0].mxu0 %v1574
        %v1693 = vpop.f32.mrb[0].mxu0
        %v1694 = vadd.f32 0.0, %v1693
        %v1695 = vpop.f32.mrb[0].mxu0
        %v1696 = vadd.f32 0.0, %v1695
        %1697 = vmatprep.mubr.f32.mxu0 0.0
        %1698 = vmatmul.mubr.f32.gmra.mrb[0].mxu0 %v1577
        %v1699 = vpop.f32.mrb[0].mxu0
        %v1700 = vadd.f32 0.0, %v1699
        %v1701 = vpop.f32.mrb[0].mxu0
        %v1702 = vadd.f32 0.0, %v1701
        %1703 = vmatprep.mubr.f32.mxu0 0.0
        %1704 = vmatmul.mubr.f32.gmra.mrb[0].mxu0 %v1580
        %v1705 = vpop.f32.mrb[0].mxu0
        %v1706 = vadd.f32 0.0, %v1705
        %v1707 = vpop.f32.mrb[0].mxu0
        %v1708 = vadd.f32 0.0, %v1707
        %1709 = vmatprep.mubr.f32.mxu0 0.0
        %1710 = vmatmul.mubr.f32.gmra.mrb[0].mxu0 %v1583
        %v1711 = vpop.f32.mrb[0].mxu0
        %v1712 = vadd.f32 0.0, %v1711
        %v1713 = vpop.f32.mrb[0].mxu0
        %v1714 = vadd.f32 0.0, %v1713
        %1715 = vmatprep.mubr.f32.mxu0 0.0
        %1716 = vmatmul.mubr.f32.gmra.mrb[0].mxu0 %v1586
        %v1717 = vpop.f32.mrb[0].mxu0
        %v1718 = vadd.f32 0.0, %v1717
        %v1719 = vpop.f32.mrb[0].mxu0
        %v1720 = vadd.f32 0.0, %v1719
        %1721 = vmatprep.mubr.f32.mxu0 0.0
        %1722 = vmatmul.mubr.f32.gmra.mrb[0].mxu0 %v1589
        %v1723 = vpop.f32.mrb[0].mxu0
        %v1724 = vadd.f32 0.0, %v1723
        %v1725 = vpop.f32.mrb[0].mxu0
        %v1726 = vadd.f32 0.0, %v1725
        %1727 = vmatprep.mubr.f32.mxu0 0.0
        %1728 = vmatmul.mubr.f32.gmra.mrb[0].mxu0 %v1592
        %v1729 = vpop.f32.mrb[0].mxu0
        %v1730 = vadd.f32 0.0, %v1729
        %v1731 = vpop.f32.mrb[0].mxu0
        %v1732 = vadd.f32 0.0, %v1731
        %1733 = vmatprep.mubr.f32.mxu0 0.0
        %1734 = vmatmul.mubr.f32.gmra.mrb[0].mxu0 %v1595
        %v1735 = vpop.f32.mrb[0].mxu0
        %v1736 = vadd.f32 0.0, %v1735
        %v1737 = vpop.f32.mrb[0].mxu0
        %v1738 = vadd.f32 0.0, %v1737
        %1739 = vmatprep.mubr.f32.mxu0 0.0
        %1740 = vmatmul.mubr.f32.gmra.mrb[0].mxu0 %v1598
        %v1741 = vpop.f32.mrb[0].mxu0
        %v1742 = vadd.f32 0.0, %v1741
        %v1743 = vpop.f32.mrb[0].mxu0
        %v1744 = vadd.f32 0.0, %v1743
        %1745 = vmatprep.mubr.f32.mxu0 0.0
        %1746 = vmatmul.mubr.f32.gmra.mrb[0].mxu0 %v1601
        %v1747 = vpop.f32.mrb[0].mxu0
        %v1748 = vadd.f32 0.0, %v1747
        %v1749 = vpop.f32.mrb[0].mxu0
        %v1750 = vadd.f32 0.0, %v1749
        %1751 = vmatprep.mubr.f32.mxu0 0.0
        %1752 = vmatmul.mubr.f32.gmra.mrb[0].mxu0 %v1604
        %v1753 = vpop.f32.mrb[0].mxu0
        %v1754 = vadd.f32 0.0, %v1753
        %v1755 = vpop.f32.mrb[0].mxu0
        %v1756 = vadd.f32 0.0, %v1755
        %1757 = vmatprep.mubr.f32.mxu0 0.0
        %1758 = vmatmul.mubr.f32.gmra.mrb[0].mxu0 %v1607
        %v1759 = vpop.f32.mrb[0].mxu0
        %v1760 = vadd.f32 0.0, %v1759
        %v1761 = vpop.f32.mrb[0].mxu0
        %v1762 = vadd.f32 0.0, %v1761
        %1763 = vmatprep.mubr.f32.mxu0 0.0
        %1764 = vmatmul.mubr.f32.gmra.mrb[0].mxu0 %v1610
        %v1765 = vpop.f32.mrb[0].mxu0
        %v1766 = vadd.f32 0.0, %v1765
        %v1767 = vpop.f32.mrb[0].mxu0
        %v1768 = vadd.f32 0.0, %v1767
        %1769 = vmatprep.mubr.f32.mxu0 0.0
        %1770 = vmatmul.mubr.f32.gmra.mrb[0].mxu0 %v1613
        %v1771 = vpop.f32.mrb[0].mxu0
        %v1772 = vadd.f32 0.0, %v1771
        %v1773 = vpop.f32.mrb[0].mxu0
        %v1774 = vadd.f32 0.0, %v1773
        %1775 = vdwg.mxu0
        %v1776 = vmul.f32 %v1682, %v1546
        %v1777 = vmul.f32 %v1684, %v1547
        %v1778 = vmul.f32 %v1688, %v1548
        %v1779 = vmul.f32 %v1690, %v1549
        %v1780 = vmul.f32 %v1694, %v1546
        %v1781 = vmul.f32 %v1696, %v1547
        %v1782 = vmul.f32 %v1700, %v1548
        %v1783 = vmul.f32 %v1702, %v1549
        %v1784 = vmul.f32 %v1706, %v1546
        %v1785 = vmul.f32 %v1708, %v1547
        %v1786 = vmul.f32 %v1712, %v1548
        %v1787 = vmul.f32 %v1714, %v1549
        %v1788 = vmul.f32 %v1718, %v1546
        %v1789 = vmul.f32 %v1720, %v1547
        %v1790 = vmul.f32 %v1724, %v1548
        %v1791 = vmul.f32 %v1726, %v1549
        %v1792 = vmul.f32 %v1730, %v1546
        %v1793 = vmul.f32 %v1732, %v1547
        %v1794 = vmul.f32 %v1736, %v1548
        %v1795 = vmul.f32 %v1738, %v1549
        %v1796 = vmul.f32 %v1742, %v1546
        %v1797 = vmul.f32 %v1744, %v1547
        %v1798 = vmul.f32 %v1748, %v1548
        %v1799 = vmul.f32 %v1750, %v1549
        %v1800 = vmul.f32 %v1754, %v1546
        %v1801 = vmul.f32 %v1756, %v1547
        %v1802 = vmul.f32 %v1760, %v1548
        %v1803 = vmul.f32 %v1762, %v1549
        %v1804 = vmul.f32 %v1766, %v1546
        %v1805 = vmul.f32 %v1768, %v1547
        %v1806 = vmul.f32 %v1772, %v1548
        %v1807 = vmul.f32 %v1774, %v1549
        %v1808 = vadd.f32 %v1776, %v1778
        %v1809 = vrot.slane %v1808, 4
        %v1810 = vadd.f32 %v1808, %v1809
        %v1811 = vrot.slane %v1810, 2
        %v1812 = vadd.f32 %v1810, %v1811
        %v1813 = vrot.slane %v1812, 1
        %v1814 = vadd.f32 %v1812, %v1813
        %v1815 = vadd.f32 %v1777, %v1779
        %v1816 = vrot.slane %v1815, 4
        %v1817 = vadd.f32 %v1815, %v1816
        %v1818 = vrot.slane %v1817, 2
        %v1819 = vadd.f32 %v1817, %v1818
        %v1820 = vrot.slane %v1819, 1
        %v1821 = vadd.f32 %v1819, %v1820
        %v1822 = vadd.f32 %v1780, %v1782
        %v1823 = vrot.slane %v1822, 4
        %v1824 = vadd.f32 %v1822, %v1823
        %v1825 = vrot.slane %v1824, 2
        %v1826 = vadd.f32 %v1824, %v1825
        %v1827 = vrot.slane %v1826, 1
        %v1828 = vadd.f32 %v1826, %v1827
        %v1829 = vadd.f32 %v1781, %v1783
        %v1830 = vrot.slane %v1829, 4
        %v1831 = vadd.f32 %v1829, %v1830
        %v1832 = vrot.slane %v1831, 2
        %v1833 = vadd.f32 %v1831, %v1832
        %v1834 = vrot.slane %v1833, 1
        %v1835 = vadd.f32 %v1833, %v1834
        %v1836 = vadd.f32 %v1784, %v1786
        %v1837 = vrot.slane %v1836, 4
        %v1838 = vadd.f32 %v1836, %v1837
        %v1839 = vrot.slane %v1838, 2
        %v1840 = vadd.f32 %v1838, %v1839
        %v1841 = vrot.slane %v1840, 1
        %v1842 = vadd.f32 %v1840, %v1841
        %v1843 = vadd.f32 %v1785, %v1787
        %v1844 = vrot.slane %v1843, 4
        %v1845 = vadd.f32 %v1843, %v1844
        %v1846 = vrot.slane %v1845, 2
        %v1847 = vadd.f32 %v1845, %v1846
        %v1848 = vrot.slane %v1847, 1
        %v1849 = vadd.f32 %v1847, %v1848
        %v1850 = vadd.f32 %v1788, %v1790
        %v1851 = vrot.slane %v1850, 4
        %v1852 = vadd.f32 %v1850, %v1851
        %v1853 = vrot.slane %v1852, 2
        %v1854 = vadd.f32 %v1852, %v1853
        %v1855 = vrot.slane %v1854, 1
        %v1856 = vadd.f32 %v1854, %v1855
        %v1857 = vadd.f32 %v1789, %v1791
        %v1858 = vrot.slane %v1857, 4
        %v1859 = vadd.f32 %v1857, %v1858
        %v1860 = vrot.slane %v1859, 2
        %v1861 = vadd.f32 %v1859, %v1860
        %v1862 = vrot.slane %v1861, 1
        %v1863 = vadd.f32 %v1861, %v1862
        %v1864 = vadd.f32 %v1792, %v1794
        %v1865 = vrot.slane %v1864, 4
        %v1866 = vadd.f32 %v1864, %v1865
        %v1867 = vrot.slane %v1866, 2
        %v1868 = vadd.f32 %v1866, %v1867
        %v1869 = vrot.slane %v1868, 1
        %v1870 = vadd.f32 %v1868, %v1869
        %v1871 = vadd.f32 %v1793, %v1795
        %v1872 = vrot.slane %v1871, 4
        %v1873 = vadd.f32 %v1871, %v1872
        %v1874 = vrot.slane %v1873, 2
        %v1875 = vadd.f32 %v1873, %v1874
        %v1876 = vrot.slane %v1875, 1
        %v1877 = vadd.f32 %v1875, %v1876
        %v1878 = vadd.f32 %v1796, %v1798
        %v1879 = vrot.slane %v1878, 4
        %v1880 = vadd.f32 %v1878, %v1879
        %v1881 = vrot.slane %v1880, 2
        %v1882 = vadd.f32 %v1880, %v1881
        %v1883 = vrot.slane %v1882, 1
        %v1884 = vadd.f32 %v1882, %v1883
        %v1885 = vadd.f32 %v1797, %v1799
        %v1886 = vrot.slane %v1885, 4
        %v1887 = vadd.f32 %v1885, %v1886
        %v1888 = vrot.slane %v1887, 2
        %v1889 = vadd.f32 %v1887, %v1888
        %v1890 = vrot.slane %v1889, 1
        %v1891 = vadd.f32 %v1889, %v1890
        %v1892 = vadd.f32 %v1800, %v1802
        %v1893 = vrot.slane %v1892, 4
        %v1894 = vadd.f32 %v1892, %v1893
        %v1895 = vrot.slane %v1894, 2
        %v1896 = vadd.f32 %v1894, %v1895
        %v1897 = vrot.slane %v1896, 1
        %v1898 = vadd.f32 %v1896, %v1897
        %v1899 = vadd.f32 %v1801, %v1803
        %v1900 = vrot.slane %v1899, 4
        %v1901 = vadd.f32 %v1899, %v1900
        %v1902 = vrot.slane %v1901, 2
        %v1903 = vadd.f32 %v1901, %v1902
        %v1904 = vrot.slane %v1903, 1
        %v1905 = vadd.f32 %v1903, %v1904
        %v1906 = vadd.f32 %v1804, %v1806
        %v1907 = vrot.slane %v1906, 4
        %v1908 = vadd.f32 %v1906, %v1907
        %v1909 = vrot.slane %v1908, 2
        %v1910 = vadd.f32 %v1908, %v1909
        %v1911 = vrot.slane %v1910, 1
        %v1912 = vadd.f32 %v1910, %v1911
        %v1913 = vadd.f32 %v1805, %v1807
        %v1914 = vrot.slane %v1913, 4
        %v1915 = vadd.f32 %v1913, %v1914
        %v1916 = vrot.slane %v1915, 2
        %v1917 = vadd.f32 %v1915, %v1916
        %v1918 = vrot.slane %v1917, 1
        %v1919 = vadd.f32 %v1917, %v1918
        %vm1936 = vcmask 1041409
        %v1937 = vsel %vm1936, %v1828, %v1814
        %vm1938 = vcmask 1042434
        %v1939 = vsel %vm1938, %v1842, %v1937
        %vm1940 = vcmask 1043459
        %v1941 = vsel %vm1940, %v1856, %v1939
        %vm1942 = vcmask 1044484
        %v1943 = vsel %vm1942, %v1870, %v1941
        %vm1944 = vcmask 1045509
        %v1945 = vsel %vm1944, %v1884, %v1943
        %vm1946 = vcmask 1046534
        %v1947 = vsel %vm1946, %v1898, %v1945
        %vm1948 = vcmask 1047559
        %v1949 = vsel %vm1948, %v1912, %v1947
        %v1950 = vsel %vm1936, %v1835, %v1821
        %v1951 = vsel %vm1938, %v1849, %v1950
        %v1952 = vsel %vm1940, %v1863, %v1951
        %v1953 = vsel %vm1942, %v1877, %v1952
        %v1954 = vsel %vm1944, %v1891, %v1953
        %v1955 = vsel %vm1946, %v1905, %v1954
        %v1956 = vsel %vm1948, %v1919, %v1955
        %v1959 = vsub.f32 %v533, %v1949
        %v1960 = vsub.f32 %v534, %v1956
        %s1961 = scalar_lea.vmem %s7, 32
        %v1962 = vld [vmem:[%s1961] sm:$0xff]
        %1963 = vrot.lane.b32.xlu0 %v1959, 17
        %v1964 = vpop.permute.xlu0 %1963
        %1965 = vrot.lane.b32.xlu0 %v1960, 17
        %v1966 = vpop.permute.xlu0 %1965
        %v1967 = vsel %vm549, %v1964, %v1966
        %v1968 = vsel %vm549, %v1966, %v1964
        %v1969 = vmul.f32 %v1968, %v555
        %v1970 = vmul.f32 %v1967, %v559
        %v1971 = vld [vmem:[%s7] sm:$0xff]
        %v1973 = vsel %vm563, %v1971, 0
        %1975 = vmatprep.subr.mxu0 %v1970
        %1976 = vmatpush1.msra.mxu0 %v1969
        %1977 = vmatprep.subr.mxu0 0.0
        %1978 = vmatpush1.msra.mxu0 0.0
        %1979 = vmatprep.subr.mxu0 0.0
        %1980 = vmatpush1.msra.mxu0 0.0
        %1981 = vmatprep.subr.mxu0 0.0
        %1982 = vmatpush1.msra.mxu0 0.0
        %1983 = vmatprep.subr.mxu0 0.0
        %1984 = vmatpush1.msra.mxu0 0.0
        %1985 = vmatprep.subr.mxu0 0.0
        %1986 = vmatpush1.msra.mxu0 0.0
        %1987 = vmatprep.subr.mxu0 0.0
        %1988 = vmatpush1.msra.mxu0 0.0
        %1989 = vmatprep.subr.mxu0 0.0
        %1990 = vmatpush1.msra.mxu0 0.0
        %1991 = vmatprep.subr.mxu0 0.0
        %1992 = vmatpush1.msra.mxu0 0.0
        %1993 = vmatprep.subr.mxu0 0.0
        %1994 = vmatpush1.msra.mxu0 0.0
        %1995 = vmatprep.subr.mxu0 0.0
        %1996 = vmatpush1.msra.mxu0 0.0
        %1997 = vmatprep.subr.mxu0 0.0
        %1998 = vmatpush1.msra.mxu0 0.0
        %1999 = vmatprep.subr.mxu0 0.0
        %2000 = vmatpush1.msra.mxu0 0.0
        %2001 = vmatprep.subr.mxu0 0.0
        %2002 = vmatpush1.msra.mxu0 0.0
        %2003 = vmatprep.subr.mxu0 0.0
        %2004 = vmatpush1.msra.mxu0 0.0
        %2005 = vmatprep.subr.mxu0 0.0
        %2006 = vmatpush1.msra.mxu0 0.0
        %2007 = vmatprep.subr.mxu0 0.0
        %2008 = vmatpush1.msra.mxu0 0.0
        %2009 = vmatprep.subr.mxu0 0.0
        %2010 = vmatpush1.msra.mxu0 0.0
        %2011 = vmatprep.subr.mxu0 0.0
        %2012 = vmatpush1.msra.mxu0 0.0
        %2013 = vmatprep.subr.mxu0 0.0
        %2014 = vmatpush1.msra.mxu0 0.0
        %2015 = vmatprep.subr.mxu0 0.0
        %2016 = vmatpush1.msra.mxu0 0.0
        %2017 = vmatprep.subr.mxu0 0.0
        %2018 = vmatpush1.msra.mxu0 0.0
        %2019 = vmatprep.subr.mxu0 0.0
        %2020 = vmatpush1.msra.mxu0 0.0
        %2021 = vmatprep.subr.mxu0 0.0
        %2022 = vmatpush1.msra.mxu0 0.0
        %2023 = vmatprep.subr.mxu0 0.0
        %2024 = vmatpush1.msra.mxu0 0.0
        %2025 = vmatprep.subr.mxu0 0.0
        %2026 = vmatpush1.msra.mxu0 0.0
        %2027 = vmatprep.subr.mxu0 0.0
        %2028 = vmatpush1.msra.mxu0 0.0
        %2029 = vmatprep.subr.mxu0 0.0
        %2030 = vmatpush1.msra.mxu0 0.0
        %2031 = vmatprep.subr.mxu0 0.0
        %2032 = vmatpush1.msra.mxu0 0.0
        %2033 = vmatprep.subr.mxu0 0.0
        %2034 = vmatpush1.msra.mxu0 0.0
        %2035 = vmatprep.subr.mxu0 0.0
        %2036 = vmatpush1.msra.mxu0 0.0
        %2037 = vmatprep.subr.mxu0 0.0
        %2038 = vmatpush1.msra.mxu0 0.0
        %2039 = vmatprep.mubr.f32.mxu0 0.0
        %2040 = vmatmul.mubr.f32.gmra.mrb[0].mxu0 %v1973
        %v2041 = vpop.f32.mrb[0].mxu0
        %v2042 = vadd.f32 0.0, %v2041
        %v2043 = vpop.f32.mrb[0].mxu0
        %v2044 = vadd.f32 0.0, %v2043
        %2045 = vdwg.mxu0
        %v2047 = vsel %vm563, %v1962, 0
        %2049 = vmatprep.subr.mxu0 %v1960
        %2050 = vmatpush1.msra.mxu0 %v1959
        %2051 = vmatprep.subr.mxu0 0.0
        %2052 = vmatpush1.msra.mxu0 0.0
        %2053 = vmatprep.subr.mxu0 0.0
        %2054 = vmatpush1.msra.mxu0 0.0
        %2055 = vmatprep.subr.mxu0 0.0
        %2056 = vmatpush1.msra.mxu0 0.0
        %2057 = vmatprep.subr.mxu0 0.0
        %2058 = vmatpush1.msra.mxu0 0.0
        %2059 = vmatprep.subr.mxu0 0.0
        %2060 = vmatpush1.msra.mxu0 0.0
        %2061 = vmatprep.subr.mxu0 0.0
        %2062 = vmatpush1.msra.mxu0 0.0
        %2063 = vmatprep.subr.mxu0 0.0
        %2064 = vmatpush1.msra.mxu0 0.0
        %2065 = vmatprep.subr.mxu0 0.0
        %2066 = vmatpush1.msra.mxu0 0.0
        %2067 = vmatprep.subr.mxu0 0.0
        %2068 = vmatpush1.msra.mxu0 0.0
        %2069 = vmatprep.subr.mxu0 0.0
        %2070 = vmatpush1.msra.mxu0 0.0
        %2071 = vmatprep.subr.mxu0 0.0
        %2072 = vmatpush1.msra.mxu0 0.0
        %2073 = vmatprep.subr.mxu0 0.0
        %2074 = vmatpush1.msra.mxu0 0.0
        %2075 = vmatprep.subr.mxu0 0.0
        %2076 = vmatpush1.msra.mxu0 0.0
        %2077 = vmatprep.subr.mxu0 0.0
        %2078 = vmatpush1.msra.mxu0 0.0
        %2079 = vmatprep.subr.mxu0 0.0
        %2080 = vmatpush1.msra.mxu0 0.0
        %2081 = vmatprep.subr.mxu0 0.0
        %2082 = vmatpush1.msra.mxu0 0.0
        %2083 = vmatprep.subr.mxu0 0.0
        %2084 = vmatpush1.msra.mxu0 0.0
        %2085 = vmatprep.subr.mxu0 0.0
        %2086 = vmatpush1.msra.mxu0 0.0
        %2087 = vmatprep.subr.mxu0 0.0
        %2088 = vmatpush1.msra.mxu0 0.0
        %2089 = vmatprep.subr.mxu0 0.0
        %2090 = vmatpush1.msra.mxu0 0.0
        %2091 = vmatprep.subr.mxu0 0.0
        %2092 = vmatpush1.msra.mxu0 0.0
        %2093 = vmatprep.subr.mxu0 0.0
        %2094 = vmatpush1.msra.mxu0 0.0
        %2095 = vmatprep.subr.mxu0 0.0
        %2096 = vmatpush1.msra.mxu0 0.0
        %2097 = vmatprep.subr.mxu0 0.0
        %2098 = vmatpush1.msra.mxu0 0.0
        %2099 = vmatprep.subr.mxu0 0.0
        %2100 = vmatpush1.msra.mxu0 0.0
        %2101 = vmatprep.subr.mxu0 0.0
        %2102 = vmatpush1.msra.mxu0 0.0
        %2103 = vmatprep.subr.mxu0 0.0
        %2104 = vmatpush1.msra.mxu0 0.0
        %2105 = vmatprep.subr.mxu0 0.0
        %2106 = vmatpush1.msra.mxu0 0.0
        %2107 = vmatprep.subr.mxu0 0.0
        %2108 = vmatpush1.msra.mxu0 0.0
        %2109 = vmatprep.subr.mxu0 0.0
        %2110 = vmatpush1.msra.mxu0 0.0
        %2111 = vmatprep.subr.mxu0 0.0
        %2112 = vmatpush1.msra.mxu0 0.0
        %2113 = vmatprep.mubr.f32.mxu0 0.0
        %2114 = vmatmul.mubr.f32.gmra.mrb[0].mxu0 %v2047
        %v2115 = vpop.f32.mrb[0].mxu0
        %v2116 = vadd.f32 %v2042, %v2115
        %v2117 = vpop.f32.mrb[0].mxu0
        %v2118 = vadd.f32 %v2044, %v2117
        %2119 = vdwg.mxu0
        %2120 = vrot.lane.b32.xlu0 %v1959, 16
        %v2121 = vpop.permute.xlu0 %2120
        %2122 = vrot.lane.b32.xlu0 %v1960, 16
        %v2123 = vpop.permute.xlu0 %2122
        %v2124 = vsel %vm716, %v2121, %v2123
        %v2125 = vsel %vm716, %v2123, %v2121
        %v2126 = vmul.f32 %v2125, %v722
        %v2127 = vmul.f32 %v2124, %v726
        %s2128 = scalar_lea.vmem %s7, 8
        %v2129 = vld [vmem:[%s2128] sm:$0xff]
        %v2131 = vsel %vm563, %v2129, 0
        %2133 = vmatprep.subr.mxu0 %v2127
        %2134 = vmatpush1.msra.mxu0 %v2126
        %2135 = vmatprep.subr.mxu0 0.0
        %2136 = vmatpush1.msra.mxu0 0.0
        %2137 = vmatprep.subr.mxu0 0.0
        %2138 = vmatpush1.msra.mxu0 0.0
        %2139 = vmatprep.subr.mxu0 0.0
        %2140 = vmatpush1.msra.mxu0 0.0
        %2141 = vmatprep.subr.mxu0 0.0
        %2142 = vmatpush1.msra.mxu0 0.0
        %2143 = vmatprep.subr.mxu0 0.0
        %2144 = vmatpush1.msra.mxu0 0.0
        %2145 = vmatprep.subr.mxu0 0.0
        %2146 = vmatpush1.msra.mxu0 0.0
        %2147 = vmatprep.subr.mxu0 0.0
        %2148 = vmatpush1.msra.mxu0 0.0
        %2149 = vmatprep.subr.mxu0 0.0
        %2150 = vmatpush1.msra.mxu0 0.0
        %2151 = vmatprep.subr.mxu0 0.0
        %2152 = vmatpush1.msra.mxu0 0.0
        %2153 = vmatprep.subr.mxu0 0.0
        %2154 = vmatpush1.msra.mxu0 0.0
        %2155 = vmatprep.subr.mxu0 0.0
        %2156 = vmatpush1.msra.mxu0 0.0
        %2157 = vmatprep.subr.mxu0 0.0
        %2158 = vmatpush1.msra.mxu0 0.0
        %2159 = vmatprep.subr.mxu0 0.0
        %2160 = vmatpush1.msra.mxu0 0.0
        %2161 = vmatprep.subr.mxu0 0.0
        %2162 = vmatpush1.msra.mxu0 0.0
        %2163 = vmatprep.subr.mxu0 0.0
        %2164 = vmatpush1.msra.mxu0 0.0
        %2165 = vmatprep.subr.mxu0 0.0
        %2166 = vmatpush1.msra.mxu0 0.0
        %2167 = vmatprep.subr.mxu0 0.0
        %2168 = vmatpush1.msra.mxu0 0.0
        %2169 = vmatprep.subr.mxu0 0.0
        %2170 = vmatpush1.msra.mxu0 0.0
        %2171 = vmatprep.subr.mxu0 0.0
        %2172 = vmatpush1.msra.mxu0 0.0
        %2173 = vmatprep.subr.mxu0 0.0
        %2174 = vmatpush1.msra.mxu0 0.0
        %2175 = vmatprep.subr.mxu0 0.0
        %2176 = vmatpush1.msra.mxu0 0.0
        %2177 = vmatprep.subr.mxu0 0.0
        %2178 = vmatpush1.msra.mxu0 0.0
        %2179 = vmatprep.subr.mxu0 0.0
        %2180 = vmatpush1.msra.mxu0 0.0
        %2181 = vmatprep.subr.mxu0 0.0
        %2182 = vmatpush1.msra.mxu0 0.0
        %2183 = vmatprep.subr.mxu0 0.0
        %2184 = vmatpush1.msra.mxu0 0.0
        %2185 = vmatprep.subr.mxu0 0.0
        %2186 = vmatpush1.msra.mxu0 0.0
        %2187 = vmatprep.subr.mxu0 0.0
        %2188 = vmatpush1.msra.mxu0 0.0
        %2189 = vmatprep.subr.mxu0 0.0
        %2190 = vmatpush1.msra.mxu0 0.0
        %2191 = vmatprep.subr.mxu0 0.0
        %2192 = vmatpush1.msra.mxu0 0.0
        %2193 = vmatprep.subr.mxu0 0.0
        %2194 = vmatpush1.msra.mxu0 0.0
        %2195 = vmatprep.subr.mxu0 0.0
        %2196 = vmatpush1.msra.mxu0 0.0
        %2197 = vmatprep.mubr.f32.mxu0 0.0
        %2198 = vmatmul.mubr.f32.gmra.mrb[0].mxu0 %v2131
        %v2199 = vpop.f32.mrb[0].mxu0
        %v2200 = vadd.f32 0.0, %v2199
        %v2201 = vpop.f32.mrb[0].mxu0
        %v2202 = vadd.f32 0.0, %v2201
        %2203 = vdwg.mxu0
        %v2204 = vadd.f32 %v2116, %v2200
        %v2205 = vadd.f32 %v2118, %v2202
        %2206 = vrot.lane.b32.xlu0 %v1959, 15
        %v2207 = vpop.permute.xlu0 %2206
        %2208 = vrot.lane.b32.xlu0 %v1960, 15
        %v2209 = vpop.permute.xlu0 %2208
        %v2210 = vsel %vm811, %v2207, %v2209
        %v2211 = vsel %vm811, %v2209, %v2207
        %v2212 = vmul.f32 %v2211, %v817
        %v2213 = vmul.f32 %v2210, %v821
        %s2214 = scalar_lea.vmem %s7, 16
        %v2215 = vld [vmem:[%s2214] sm:$0xff]
        %v2217 = vsel %vm563, %v2215, 0
        %2219 = vmatprep.subr.mxu0 %v2213
        %2220 = vmatpush1.msra.mxu0 %v2212
        %2221 = vmatprep.subr.mxu0 0.0
        %2222 = vmatpush1.msra.mxu0 0.0
        %2223 = vmatprep.subr.mxu0 0.0
        %2224 = vmatpush1.msra.mxu0 0.0
        %2225 = vmatprep.subr.mxu0 0.0
        %2226 = vmatpush1.msra.mxu0 0.0
        %2227 = vmatprep.subr.mxu0 0.0
        %2228 = vmatpush1.msra.mxu0 0.0
        %2229 = vmatprep.subr.mxu0 0.0
        %2230 = vmatpush1.msra.mxu0 0.0
        %2231 = vmatprep.subr.mxu0 0.0
        %2232 = vmatpush1.msra.mxu0 0.0
        %2233 = vmatprep.subr.mxu0 0.0
        %2234 = vmatpush1.msra.mxu0 0.0
        %2235 = vmatprep.subr.mxu0 0.0
        %2236 = vmatpush1.msra.mxu0 0.0
        %2237 = vmatprep.subr.mxu0 0.0
        %2238 = vmatpush1.msra.mxu0 0.0
        %2239 = vmatprep.subr.mxu0 0.0
        %2240 = vmatpush1.msra.mxu0 0.0
        %2241 = vmatprep.subr.mxu0 0.0
        %2242 = vmatpush1.msra.mxu0 0.0
        %2243 = vmatprep.subr.mxu0 0.0
        %2244 = vmatpush1.msra.mxu0 0.0
        %2245 = vmatprep.subr.mxu0 0.0
        %2246 = vmatpush1.msra.mxu0 0.0
        %2247 = vmatprep.subr.mxu0 0.0
        %2248 = vmatpush1.msra.mxu0 0.0
        %2249 = vmatprep.subr.mxu0 0.0
        %2250 = vmatpush1.msra.mxu0 0.0
        %2251 = vmatprep.subr.mxu0 0.0
        %2252 = vmatpush1.msra.mxu0 0.0
        %2253 = vmatprep.subr.mxu0 0.0
        %2254 = vmatpush1.msra.mxu0 0.0
        %2255 = vmatprep.subr.mxu0 0.0
        %2256 = vmatpush1.msra.mxu0 0.0
        %2257 = vmatprep.subr.mxu0 0.0
        %2258 = vmatpush1.msra.mxu0 0.0
        %2259 = vmatprep.subr.mxu0 0.0
        %2260 = vmatpush1.msra.mxu0 0.0
        %2261 = vmatprep.subr.mxu0 0.0
        %2262 = vmatpush1.msra.mxu0 0.0
        %2263 = vmatprep.subr.mxu0 0.0
        %2264 = vmatpush1.msra.mxu0 0.0
        %2265 = vmatprep.subr.mxu0 0.0
        %2266 = vmatpush1.msra.mxu0 0.0
        %2267 = vmatprep.subr.mxu0 0.0
        %2268 = vmatpush1.msra.mxu0 0.0
        %2269 = vmatprep.subr.mxu0 0.0
        %2270 = vmatpush1.msra.mxu0 0.0
        %2271 = vmatprep.subr.mxu0 0.0
        %2272 = vmatpush1.msra.mxu0 0.0
        %2273 = vmatprep.subr.mxu0 0.0
        %2274 = vmatpush1.msra.mxu0 0.0
        %2275 = vmatprep.subr.mxu0 0.0
        %2276 = vmatpush1.msra.mxu0 0.0
        %2277 = vmatprep.subr.mxu0 0.0
        %2278 = vmatpush1.msra.mxu0 0.0
        %2279 = vmatprep.subr.mxu0 0.0
        %2280 = vmatpush1.msra.mxu0 0.0
        %2281 = vmatprep.subr.mxu0 0.0
        %2282 = vmatpush1.msra.mxu0 0.0
        %2283 = vmatprep.mubr.f32.mxu0 0.0
        %2284 = vmatmul.mubr.f32.gmra.mrb[0].mxu0 %v2217
        %v2285 = vpop.f32.mrb[0].mxu0
        %v2286 = vadd.f32 0.0, %v2285
        %v2287 = vpop.f32.mrb[0].mxu0
        %v2288 = vadd.f32 0.0, %v2287
        %2289 = vdwg.mxu0
        %v2290 = vadd.f32 %v2204, %v2286
        %v2291 = vadd.f32 %v2205, %v2288
        %2292 = vrot.lane.b32.xlu0 %v1959, 1
        %v2293 = vpop.permute.xlu0 %2292
        %2294 = vrot.lane.b32.xlu0 %v1960, 1
        %v2295 = vpop.permute.xlu0 %2294
        %v2296 = vsel %vm906, %v2293, %v2295
        %v2297 = vsel %vm906, %v2295, %v2293
        %v2298 = vmul.f32 %v2297, %v912
        %v2299 = vmul.f32 %v2296, %v916
        %s2300 = scalar_lea.vmem %s7, 24
        %v2301 = vld [vmem:[%s2300] sm:$0xff]
        %v2303 = vsel %vm563, %v2301, 0
        %2305 = vmatprep.subr.mxu0 %v2299
        %2306 = vmatpush1.msra.mxu0 %v2298
        %2307 = vmatprep.subr.mxu0 0.0
        %2308 = vmatpush1.msra.mxu0 0.0
        %2309 = vmatprep.subr.mxu0 0.0
        %2310 = vmatpush1.msra.mxu0 0.0
        %2311 = vmatprep.subr.mxu0 0.0
        %2312 = vmatpush1.msra.mxu0 0.0
        %2313 = vmatprep.subr.mxu0 0.0
        %2314 = vmatpush1.msra.mxu0 0.0
        %2315 = vmatprep.subr.mxu0 0.0
        %2316 = vmatpush1.msra.mxu0 0.0
        %2317 = vmatprep.subr.mxu0 0.0
        %2318 = vmatpush1.msra.mxu0 0.0
        %2319 = vmatprep.subr.mxu0 0.0
        %2320 = vmatpush1.msra.mxu0 0.0
        %2321 = vmatprep.subr.mxu0 0.0
        %2322 = vmatpush1.msra.mxu0 0.0
        %2323 = vmatprep.subr.mxu0 0.0
        %2324 = vmatpush1.msra.mxu0 0.0
        %2325 = vmatprep.subr.mxu0 0.0
        %2326 = vmatpush1.msra.mxu0 0.0
        %2327 = vmatprep.subr.mxu0 0.0
        %2328 = vmatpush1.msra.mxu0 0.0
        %2329 = vmatprep.subr.mxu0 0.0
        %2330 = vmatpush1.msra.mxu0 0.0
        %2331 = vmatprep.subr.mxu0 0.0
        %2332 = vmatpush1.msra.mxu0 0.0
        %2333 = vmatprep.subr.mxu0 0.0
        %2334 = vmatpush1.msra.mxu0 0.0
        %2335 = vmatprep.subr.mxu0 0.0
        %2336 = vmatpush1.msra.mxu0 0.0
        %2337 = vmatprep.subr.mxu0 0.0
        %2338 = vmatpush1.msra.mxu0 0.0
        %2339 = vmatprep.subr.mxu0 0.0
        %2340 = vmatpush1.msra.mxu0 0.0
        %2341 = vmatprep.subr.mxu0 0.0
        %2342 = vmatpush1.msra.mxu0 0.0
        %2343 = vmatprep.subr.mxu0 0.0
        %2344 = vmatpush1.msra.mxu0 0.0
        %2345 = vmatprep.subr.mxu0 0.0
        %2346 = vmatpush1.msra.mxu0 0.0
        %2347 = vmatprep.subr.mxu0 0.0
        %2348 = vmatpush1.msra.mxu0 0.0
        %2349 = vmatprep.subr.mxu0 0.0
        %2350 = vmatpush1.msra.mxu0 0.0
        %2351 = vmatprep.subr.mxu0 0.0
        %2352 = vmatpush1.msra.mxu0 0.0
        %2353 = vmatprep.subr.mxu0 0.0
        %2354 = vmatpush1.msra.mxu0 0.0
        %2355 = vmatprep.subr.mxu0 0.0
        %2356 = vmatpush1.msra.mxu0 0.0
        %2357 = vmatprep.subr.mxu0 0.0
        %2358 = vmatpush1.msra.mxu0 0.0
        %2359 = vmatprep.subr.mxu0 0.0
        %2360 = vmatpush1.msra.mxu0 0.0
        %2361 = vmatprep.subr.mxu0 0.0
        %2362 = vmatpush1.msra.mxu0 0.0
        %2363 = vmatprep.subr.mxu0 0.0
        %2364 = vmatpush1.msra.mxu0 0.0
        %2365 = vmatprep.subr.mxu0 0.0
        %2366 = vmatpush1.msra.mxu0 0.0
        %2367 = vmatprep.subr.mxu0 0.0
        %2368 = vmatpush1.msra.mxu0 0.0
        %2369 = vmatprep.mubr.f32.mxu0 0.0
        %2370 = vmatmul.mubr.f32.gmra.mrb[0].mxu0 %v2303
        %v2371 = vpop.f32.mrb[0].mxu0
        %v2372 = vadd.f32 0.0, %v2371
        %v2373 = vpop.f32.mrb[0].mxu0
        %v2374 = vadd.f32 0.0, %v2373
        %2375 = vdwg.mxu0
        %v2376 = vadd.f32 %v2290, %v2372
        %v2377 = vadd.f32 %v2291, %v2374
        %2378 = vrot.lane.b32.xlu0 %v1959, 127
        %v2379 = vpop.permute.xlu0 %2378
        %2380 = vrot.lane.b32.xlu0 %v1960, 127
        %v2381 = vpop.permute.xlu0 %2380
        %v2382 = vsel %vm1001, %v2379, %v2381
        %v2383 = vsel %vm1001, %v2381, %v2379
        %v2384 = vmul.f32 %v2382, %v1007
        %v2385 = vmul.f32 %v2383, %v1011
        %s2386 = scalar_lea.vmem %s7, 40
        %v2387 = vld [vmem:[%s2386] sm:$0xff]
        %v2389 = vsel %vm563, %v2387, 0
        %2391 = vmatprep.subr.mxu0 %v2385
        %2392 = vmatpush1.msra.mxu0 %v2384
        %2393 = vmatprep.subr.mxu0 0.0
        %2394 = vmatpush1.msra.mxu0 0.0
        %2395 = vmatprep.subr.mxu0 0.0
        %2396 = vmatpush1.msra.mxu0 0.0
        %2397 = vmatprep.subr.mxu0 0.0
        %2398 = vmatpush1.msra.mxu0 0.0
        %2399 = vmatprep.subr.mxu0 0.0
        %2400 = vmatpush1.msra.mxu0 0.0
        %2401 = vmatprep.subr.mxu0 0.0
        %2402 = vmatpush1.msra.mxu0 0.0
        %2403 = vmatprep.subr.mxu0 0.0
        %2404 = vmatpush1.msra.mxu0 0.0
        %2405 = vmatprep.subr.mxu0 0.0
        %2406 = vmatpush1.msra.mxu0 0.0
        %2407 = vmatprep.subr.mxu0 0.0
        %2408 = vmatpush1.msra.mxu0 0.0
        %2409 = vmatprep.subr.mxu0 0.0
        %2410 = vmatpush1.msra.mxu0 0.0
        %2411 = vmatprep.subr.mxu0 0.0
        %2412 = vmatpush1.msra.mxu0 0.0
        %2413 = vmatprep.subr.mxu0 0.0
        %2414 = vmatpush1.msra.mxu0 0.0
        %2415 = vmatprep.subr.mxu0 0.0
        %2416 = vmatpush1.msra.mxu0 0.0
        %2417 = vmatprep.subr.mxu0 0.0
        %2418 = vmatpush1.msra.mxu0 0.0
        %2419 = vmatprep.subr.mxu0 0.0
        %2420 = vmatpush1.msra.mxu0 0.0
        %2421 = vmatprep.subr.mxu0 0.0
        %2422 = vmatpush1.msra.mxu0 0.0
        %2423 = vmatprep.subr.mxu0 0.0
        %2424 = vmatpush1.msra.mxu0 0.0
        %2425 = vmatprep.subr.mxu0 0.0
        %2426 = vmatpush1.msra.mxu0 0.0
        %2427 = vmatprep.subr.mxu0 0.0
        %2428 = vmatpush1.msra.mxu0 0.0
        %2429 = vmatprep.subr.mxu0 0.0
        %2430 = vmatpush1.msra.mxu0 0.0
        %2431 = vmatprep.subr.mxu0 0.0
        %2432 = vmatpush1.msra.mxu0 0.0
        %2433 = vmatprep.subr.mxu0 0.0
        %2434 = vmatpush1.msra.mxu0 0.0
        %2435 = vmatprep.subr.mxu0 0.0
        %2436 = vmatpush1.msra.mxu0 0.0
        %2437 = vmatprep.subr.mxu0 0.0
        %2438 = vmatpush1.msra.mxu0 0.0
        %2439 = vmatprep.subr.mxu0 0.0
        %2440 = vmatpush1.msra.mxu0 0.0
        %2441 = vmatprep.subr.mxu0 0.0
        %2442 = vmatpush1.msra.mxu0 0.0
        %2443 = vmatprep.subr.mxu0 0.0
        %2444 = vmatpush1.msra.mxu0 0.0
        %2445 = vmatprep.subr.mxu0 0.0
        %2446 = vmatpush1.msra.mxu0 0.0
        %2447 = vmatprep.subr.mxu0 0.0
        %2448 = vmatpush1.msra.mxu0 0.0
        %2449 = vmatprep.subr.mxu0 0.0
        %2450 = vmatpush1.msra.mxu0 0.0
        %2451 = vmatprep.subr.mxu0 0.0
        %2452 = vmatpush1.msra.mxu0 0.0
        %2453 = vmatprep.subr.mxu0 0.0
        %2454 = vmatpush1.msra.mxu0 0.0
        %2455 = vmatprep.mubr.f32.mxu0 0.0
        %2456 = vmatmul.mubr.f32.gmra.mrb[0].mxu0 %v2389
        %v2457 = vpop.f32.mrb[0].mxu0
        %v2458 = vadd.f32 0.0, %v2457
        %v2459 = vpop.f32.mrb[0].mxu0
        %v2460 = vadd.f32 0.0, %v2459
        %2461 = vdwg.mxu0
        %v2462 = vadd.f32 %v2376, %v2458
        %v2463 = vadd.f32 %v2377, %v2460
        %2464 = vrot.lane.b32.xlu0 %v1959, 113
        %v2465 = vpop.permute.xlu0 %2464
        %2466 = vrot.lane.b32.xlu0 %v1960, 113
        %v2467 = vpop.permute.xlu0 %2466
        %v2468 = vsel %vm1096, %v2465, %v2467
        %v2469 = vsel %vm1096, %v2467, %v2465
        %v2470 = vmul.f32 %v2468, %v1102
        %v2471 = vmul.f32 %v2469, %v1106
        %s2472 = scalar_lea.vmem %s7, 48
        %v2473 = vld [vmem:[%s2472] sm:$0xff]
        %v2475 = vsel %vm563, %v2473, 0
        %2477 = vmatprep.subr.mxu0 %v2471
        %2478 = vmatpush1.msra.mxu0 %v2470
        %2479 = vmatprep.subr.mxu0 0.0
        %2480 = vmatpush1.msra.mxu0 0.0
        %2481 = vmatprep.subr.mxu0 0.0
        %2482 = vmatpush1.msra.mxu0 0.0
        %2483 = vmatprep.subr.mxu0 0.0
        %2484 = vmatpush1.msra.mxu0 0.0
        %2485 = vmatprep.subr.mxu0 0.0
        %2486 = vmatpush1.msra.mxu0 0.0
        %2487 = vmatprep.subr.mxu0 0.0
        %2488 = vmatpush1.msra.mxu0 0.0
        %2489 = vmatprep.subr.mxu0 0.0
        %2490 = vmatpush1.msra.mxu0 0.0
        %2491 = vmatprep.subr.mxu0 0.0
        %2492 = vmatpush1.msra.mxu0 0.0
        %2493 = vmatprep.subr.mxu0 0.0
        %2494 = vmatpush1.msra.mxu0 0.0
        %2495 = vmatprep.subr.mxu0 0.0
        %2496 = vmatpush1.msra.mxu0 0.0
        %2497 = vmatprep.subr.mxu0 0.0
        %2498 = vmatpush1.msra.mxu0 0.0
        %2499 = vmatprep.subr.mxu0 0.0
        %2500 = vmatpush1.msra.mxu0 0.0
        %2501 = vmatprep.subr.mxu0 0.0
        %2502 = vmatpush1.msra.mxu0 0.0
        %2503 = vmatprep.subr.mxu0 0.0
        %2504 = vmatpush1.msra.mxu0 0.0
        %2505 = vmatprep.subr.mxu0 0.0
        %2506 = vmatpush1.msra.mxu0 0.0
        %2507 = vmatprep.subr.mxu0 0.0
        %2508 = vmatpush1.msra.mxu0 0.0
        %2509 = vmatprep.subr.mxu0 0.0
        %2510 = vmatpush1.msra.mxu0 0.0
        %2511 = vmatprep.subr.mxu0 0.0
        %2512 = vmatpush1.msra.mxu0 0.0
        %2513 = vmatprep.subr.mxu0 0.0
        %2514 = vmatpush1.msra.mxu0 0.0
        %2515 = vmatprep.subr.mxu0 0.0
        %2516 = vmatpush1.msra.mxu0 0.0
        %2517 = vmatprep.subr.mxu0 0.0
        %2518 = vmatpush1.msra.mxu0 0.0
        %2519 = vmatprep.subr.mxu0 0.0
        %2520 = vmatpush1.msra.mxu0 0.0
        %2521 = vmatprep.subr.mxu0 0.0
        %2522 = vmatpush1.msra.mxu0 0.0
        %2523 = vmatprep.subr.mxu0 0.0
        %2524 = vmatpush1.msra.mxu0 0.0
        %2525 = vmatprep.subr.mxu0 0.0
        %2526 = vmatpush1.msra.mxu0 0.0
        %2527 = vmatprep.subr.mxu0 0.0
        %2528 = vmatpush1.msra.mxu0 0.0
        %2529 = vmatprep.subr.mxu0 0.0
        %2530 = vmatpush1.msra.mxu0 0.0
        %2531 = vmatprep.subr.mxu0 0.0
        %2532 = vmatpush1.msra.mxu0 0.0
        %2533 = vmatprep.subr.mxu0 0.0
        %2534 = vmatpush1.msra.mxu0 0.0
        %2535 = vmatprep.subr.mxu0 0.0
        %2536 = vmatpush1.msra.mxu0 0.0
        %2537 = vmatprep.subr.mxu0 0.0
        %2538 = vmatpush1.msra.mxu0 0.0
        %2539 = vmatprep.subr.mxu0 0.0
        %2540 = vmatpush1.msra.mxu0 0.0
        %2541 = vmatprep.mubr.f32.mxu0 0.0
        %2542 = vmatmul.mubr.f32.gmra.mrb[0].mxu0 %v2475
        %v2543 = vpop.f32.mrb[0].mxu0
        %v2544 = vadd.f32 0.0, %v2543
        %v2545 = vpop.f32.mrb[0].mxu0
        %v2546 = vadd.f32 0.0, %v2545
        %2547 = vdwg.mxu0
        %v2548 = vadd.f32 %v2462, %v2544
        %v2549 = vadd.f32 %v2463, %v2546
        %2550 = vrot.lane.b32.xlu0 %v1959, 112
        %v2551 = vpop.permute.xlu0 %2550
        %2552 = vrot.lane.b32.xlu0 %v1960, 112
        %v2553 = vpop.permute.xlu0 %2552
        %v2554 = vsel %vm1191, %v2551, %v2553
        %v2555 = vsel %vm1191, %v2553, %v2551
        %v2556 = vmul.f32 %v2554, %v1197
        %v2557 = vmul.f32 %v2555, %v1201
        %s2558 = scalar_lea.vmem %s7, 56
        %v2559 = vld [vmem:[%s2558] sm:$0xff]
        %v2561 = vsel %vm563, %v2559, 0
        %2563 = vmatprep.subr.mxu0 %v2557
        %2564 = vmatpush1.msra.mxu0 %v2556
        %2565 = vmatprep.subr.mxu0 0.0
        %2566 = vmatpush1.msra.mxu0 0.0
        %2567 = vmatprep.subr.mxu0 0.0
        %2568 = vmatpush1.msra.mxu0 0.0
        %2569 = vmatprep.subr.mxu0 0.0
        %2570 = vmatpush1.msra.mxu0 0.0
        %2571 = vmatprep.subr.mxu0 0.0
        %2572 = vmatpush1.msra.mxu0 0.0
        %2573 = vmatprep.subr.mxu0 0.0
        %2574 = vmatpush1.msra.mxu0 0.0
        %2575 = vmatprep.subr.mxu0 0.0
        %2576 = vmatpush1.msra.mxu0 0.0
        %2577 = vmatprep.subr.mxu0 0.0
        %2578 = vmatpush1.msra.mxu0 0.0
        %2579 = vmatprep.subr.mxu0 0.0
        %2580 = vmatpush1.msra.mxu0 0.0
        %2581 = vmatprep.subr.mxu0 0.0
        %2582 = vmatpush1.msra.mxu0 0.0
        %2583 = vmatprep.subr.mxu0 0.0
        %2584 = vmatpush1.msra.mxu0 0.0
        %2585 = vmatprep.subr.mxu0 0.0
        %2586 = vmatpush1.msra.mxu0 0.0
        %2587 = vmatprep.subr.mxu0 0.0
        %2588 = vmatpush1.msra.mxu0 0.0
        %2589 = vmatprep.subr.mxu0 0.0
        %2590 = vmatpush1.msra.mxu0 0.0
        %2591 = vmatprep.subr.mxu0 0.0
        %2592 = vmatpush1.msra.mxu0 0.0
        %2593 = vmatprep.subr.mxu0 0.0
        %2594 = vmatpush1.msra.mxu0 0.0
        %2595 = vmatprep.subr.mxu0 0.0
        %2596 = vmatpush1.msra.mxu0 0.0
        %2597 = vmatprep.subr.mxu0 0.0
        %2598 = vmatpush1.msra.mxu0 0.0
        %2599 = vmatprep.subr.mxu0 0.0
        %2600 = vmatpush1.msra.mxu0 0.0
        %2601 = vmatprep.subr.mxu0 0.0
        %2602 = vmatpush1.msra.mxu0 0.0
        %2603 = vmatprep.subr.mxu0 0.0
        %2604 = vmatpush1.msra.mxu0 0.0
        %2605 = vmatprep.subr.mxu0 0.0
        %2606 = vmatpush1.msra.mxu0 0.0
        %2607 = vmatprep.subr.mxu0 0.0
        %2608 = vmatpush1.msra.mxu0 0.0
        %2609 = vmatprep.subr.mxu0 0.0
        %2610 = vmatpush1.msra.mxu0 0.0
        %2611 = vmatprep.subr.mxu0 0.0
        %2612 = vmatpush1.msra.mxu0 0.0
        %2613 = vmatprep.subr.mxu0 0.0
        %2614 = vmatpush1.msra.mxu0 0.0
        %2615 = vmatprep.subr.mxu0 0.0
        %2616 = vmatpush1.msra.mxu0 0.0
        %2617 = vmatprep.subr.mxu0 0.0
        %2618 = vmatpush1.msra.mxu0 0.0
        %2619 = vmatprep.subr.mxu0 0.0
        %2620 = vmatpush1.msra.mxu0 0.0
        %2621 = vmatprep.subr.mxu0 0.0
        %2622 = vmatpush1.msra.mxu0 0.0
        %2623 = vmatprep.subr.mxu0 0.0
        %2624 = vmatpush1.msra.mxu0 0.0
        %2625 = vmatprep.subr.mxu0 0.0
        %2626 = vmatpush1.msra.mxu0 0.0
        %2627 = vmatprep.mubr.f32.mxu0 0.0
        %2628 = vmatmul.mubr.f32.gmra.mrb[0].mxu0 %v2561
        %v2629 = vpop.f32.mrb[0].mxu0
        %v2630 = vadd.f32 0.0, %v2629
        %v2631 = vpop.f32.mrb[0].mxu0
        %v2632 = vadd.f32 0.0, %v2631
        %2633 = vdwg.mxu0
        %v2634 = vadd.f32 %v2548, %v2630
        %v2635 = vadd.f32 %v2549, %v2632
        %2636 = vrot.lane.b32.xlu0 %v1959, 111
        %v2637 = vpop.permute.xlu0 %2636
        %2638 = vrot.lane.b32.xlu0 %v1960, 111
        %v2639 = vpop.permute.xlu0 %2638
        %v2640 = vsel %vm1286, %v2637, %v2639
        %v2641 = vsel %vm1286, %v2639, %v2637
        %v2642 = vmul.f32 %v2640, %v1292
        %v2643 = vmul.f32 %v2641, %v1296
        %s2644 = scalar_lea.vmem %s7, 64
        %v2645 = vld [vmem:[%s2644] sm:$0xff]
        %v2647 = vsel %vm563, %v2645, 0
        %2649 = vmatprep.subr.mxu0 %v2643
        %2650 = vmatpush1.msra.mxu0 %v2642
        %2651 = vmatprep.subr.mxu0 0.0
        %2652 = vmatpush1.msra.mxu0 0.0
        %2653 = vmatprep.subr.mxu0 0.0
        %2654 = vmatpush1.msra.mxu0 0.0
        %2655 = vmatprep.subr.mxu0 0.0
        %2656 = vmatpush1.msra.mxu0 0.0
        %2657 = vmatprep.subr.mxu0 0.0
        %2658 = vmatpush1.msra.mxu0 0.0
        %2659 = vmatprep.subr.mxu0 0.0
        %2660 = vmatpush1.msra.mxu0 0.0
        %2661 = vmatprep.subr.mxu0 0.0
        %2662 = vmatpush1.msra.mxu0 0.0
        %2663 = vmatprep.subr.mxu0 0.0
        %2664 = vmatpush1.msra.mxu0 0.0
        %2665 = vmatprep.subr.mxu0 0.0
        %2666 = vmatpush1.msra.mxu0 0.0
        %2667 = vmatprep.subr.mxu0 0.0
        %2668 = vmatpush1.msra.mxu0 0.0
        %2669 = vmatprep.subr.mxu0 0.0
        %2670 = vmatpush1.msra.mxu0 0.0
        %2671 = vmatprep.subr.mxu0 0.0
        %2672 = vmatpush1.msra.mxu0 0.0
        %2673 = vmatprep.subr.mxu0 0.0
        %2674 = vmatpush1.msra.mxu0 0.0
        %2675 = vmatprep.subr.mxu0 0.0
        %2676 = vmatpush1.msra.mxu0 0.0
        %2677 = vmatprep.subr.mxu0 0.0
        %2678 = vmatpush1.msra.mxu0 0.0
        %2679 = vmatprep.subr.mxu0 0.0
        %2680 = vmatpush1.msra.mxu0 0.0
        %2681 = vmatprep.subr.mxu0 0.0
        %2682 = vmatpush1.msra.mxu0 0.0
        %2683 = vmatprep.subr.mxu0 0.0
        %2684 = vmatpush1.msra.mxu0 0.0
        %2685 = vmatprep.subr.mxu0 0.0
        %2686 = vmatpush1.msra.mxu0 0.0
        %2687 = vmatprep.subr.mxu0 0.0
        %2688 = vmatpush1.msra.mxu0 0.0
        %2689 = vmatprep.subr.mxu0 0.0
        %2690 = vmatpush1.msra.mxu0 0.0
        %2691 = vmatprep.subr.mxu0 0.0
        %2692 = vmatpush1.msra.mxu0 0.0
        %2693 = vmatprep.subr.mxu0 0.0
        %2694 = vmatpush1.msra.mxu0 0.0
        %2695 = vmatprep.subr.mxu0 0.0
        %2696 = vmatpush1.msra.mxu0 0.0
        %2697 = vmatprep.subr.mxu0 0.0
        %2698 = vmatpush1.msra.mxu0 0.0
        %2699 = vmatprep.subr.mxu0 0.0
        %2700 = vmatpush1.msra.mxu0 0.0
        %2701 = vmatprep.subr.mxu0 0.0
        %2702 = vmatpush1.msra.mxu0 0.0
        %2703 = vmatprep.subr.mxu0 0.0
        %2704 = vmatpush1.msra.mxu0 0.0
        %2705 = vmatprep.subr.mxu0 0.0
        %2706 = vmatpush1.msra.mxu0 0.0
        %2707 = vmatprep.subr.mxu0 0.0
        %2708 = vmatpush1.msra.mxu0 0.0
        %2709 = vmatprep.subr.mxu0 0.0
        %2710 = vmatpush1.msra.mxu0 0.0
        %2711 = vmatprep.subr.mxu0 0.0
        %2712 = vmatpush1.msra.mxu0 0.0
        %2713 = vmatprep.mubr.f32.mxu0 0.0
        %2714 = vmatmul.mubr.f32.gmra.mrb[0].mxu0 %v2647
        %v2715 = vpop.f32.mrb[0].mxu0
        %v2716 = vadd.f32 0.0, %v2715
        %v2717 = vpop.f32.mrb[0].mxu0
        %v2718 = vadd.f32 0.0, %v2717
        %2719 = vdwg.mxu0
        %v2720 = vadd.f32 %v2634, %v2716
        %v2721 = vadd.f32 %v2635, %v2718
        %s2722 = scalar_lea.vmem %s8, 32
        %v2723 = vld [vmem:[%s2722] sm:$0xff]
        %2724 = vrot.lane.b32.xlu0 %v535, 17
        %v2725 = vpop.permute.xlu0 %2724
        %2726 = vrot.lane.b32.xlu0 %v536, 17
        %v2727 = vpop.permute.xlu0 %2726
        %v2728 = vsel %vm549, %v2725, %v2727
        %v2729 = vsel %vm549, %v2727, %v2725
        %v2730 = vmul.f32 %v2729, %v555
        %v2731 = vmul.f32 %v2728, %v559
        %v2732 = vld [vmem:[%s8] sm:$0xff]
        %v2734 = vsel %vm563, %v2732, 0
        %2736 = vmatprep.subr.mxu0 %v2731
        %2737 = vmatpush1.msra.mxu0 %v2730
        %2738 = vmatprep.subr.mxu0 0.0
        %2739 = vmatpush1.msra.mxu0 0.0
        %2740 = vmatprep.subr.mxu0 0.0
        %2741 = vmatpush1.msra.mxu0 0.0
        %2742 = vmatprep.subr.mxu0 0.0
        %2743 = vmatpush1.msra.mxu0 0.0
        %2744 = vmatprep.subr.mxu0 0.0
        %2745 = vmatpush1.msra.mxu0 0.0
        %2746 = vmatprep.subr.mxu0 0.0
        %2747 = vmatpush1.msra.mxu0 0.0
        %2748 = vmatprep.subr.mxu0 0.0
        %2749 = vmatpush1.msra.mxu0 0.0
        %2750 = vmatprep.subr.mxu0 0.0
        %2751 = vmatpush1.msra.mxu0 0.0
        %2752 = vmatprep.subr.mxu0 0.0
        %2753 = vmatpush1.msra.mxu0 0.0
        %2754 = vmatprep.subr.mxu0 0.0
        %2755 = vmatpush1.msra.mxu0 0.0
        %2756 = vmatprep.subr.mxu0 0.0
        %2757 = vmatpush1.msra.mxu0 0.0
        %2758 = vmatprep.subr.mxu0 0.0
        %2759 = vmatpush1.msra.mxu0 0.0
        %2760 = vmatprep.subr.mxu0 0.0
        %2761 = vmatpush1.msra.mxu0 0.0
        %2762 = vmatprep.subr.mxu0 0.0
        %2763 = vmatpush1.msra.mxu0 0.0
        %2764 = vmatprep.subr.mxu0 0.0
        %2765 = vmatpush1.msra.mxu0 0.0
        %2766 = vmatprep.subr.mxu0 0.0
        %2767 = vmatpush1.msra.mxu0 0.0
        %2768 = vmatprep.subr.mxu0 0.0
        %2769 = vmatpush1.msra.mxu0 0.0
        %2770 = vmatprep.subr.mxu0 0.0
        %2771 = vmatpush1.msra.mxu0 0.0
        %2772 = vmatprep.subr.mxu0 0.0
        %2773 = vmatpush1.msra.mxu0 0.0
        %2774 = vmatprep.subr.mxu0 0.0
        %2775 = vmatpush1.msra.mxu0 0.0
        %2776 = vmatprep.subr.mxu0 0.0
        %2777 = vmatpush1.msra.mxu0 0.0
        %2778 = vmatprep.subr.mxu0 0.0
        %2779 = vmatpush1.msra.mxu0 0.0
        %2780 = vmatprep.subr.mxu0 0.0
        %2781 = vmatpush1.msra.mxu0 0.0
        %2782 = vmatprep.subr.mxu0 0.0
        %2783 = vmatpush1.msra.mxu0 0.0
        %2784 = vmatprep.subr.mxu0 0.0
        %2785 = vmatpush1.msra.mxu0 0.0
        %2786 = vmatprep.subr.mxu0 0.0
        %2787 = vmatpush1.msra.mxu0 0.0
        %2788 = vmatprep.subr.mxu0 0.0
        %2789 = vmatpush1.msra.mxu0 0.0
        %2790 = vmatprep.subr.mxu0 0.0
        %2791 = vmatpush1.msra.mxu0 0.0
        %2792 = vmatprep.subr.mxu0 0.0
        %2793 = vmatpush1.msra.mxu0 0.0
        %2794 = vmatprep.subr.mxu0 0.0
        %2795 = vmatpush1.msra.mxu0 0.0
        %2796 = vmatprep.subr.mxu0 0.0
        %2797 = vmatpush1.msra.mxu0 0.0
        %2798 = vmatprep.subr.mxu0 0.0
        %2799 = vmatpush1.msra.mxu0 0.0
        %2800 = vmatprep.mubr.f32.mxu0 0.0
        %2801 = vmatmul.mubr.f32.gmra.mrb[0].mxu0 %v2734
        %v2802 = vpop.f32.mrb[0].mxu0
        %v2803 = vadd.f32 0.0, %v2802
        %v2804 = vpop.f32.mrb[0].mxu0
        %v2805 = vadd.f32 0.0, %v2804
        %2806 = vdwg.mxu0
        %v2808 = vsel %vm563, %v2723, 0
        %2810 = vmatprep.subr.mxu0 %v536
        %2811 = vmatpush1.msra.mxu0 %v535
        %2812 = vmatprep.subr.mxu0 0.0
        %2813 = vmatpush1.msra.mxu0 0.0
        %2814 = vmatprep.subr.mxu0 0.0
        %2815 = vmatpush1.msra.mxu0 0.0
        %2816 = vmatprep.subr.mxu0 0.0
        %2817 = vmatpush1.msra.mxu0 0.0
        %2818 = vmatprep.subr.mxu0 0.0
        %2819 = vmatpush1.msra.mxu0 0.0
        %2820 = vmatprep.subr.mxu0 0.0
        %2821 = vmatpush1.msra.mxu0 0.0
        %2822 = vmatprep.subr.mxu0 0.0
        %2823 = vmatpush1.msra.mxu0 0.0
        %2824 = vmatprep.subr.mxu0 0.0
        %2825 = vmatpush1.msra.mxu0 0.0
        %2826 = vmatprep.subr.mxu0 0.0
        %2827 = vmatpush1.msra.mxu0 0.0
        %2828 = vmatprep.subr.mxu0 0.0
        %2829 = vmatpush1.msra.mxu0 0.0
        %2830 = vmatprep.subr.mxu0 0.0
        %2831 = vmatpush1.msra.mxu0 0.0
        %2832 = vmatprep.subr.mxu0 0.0
        %2833 = vmatpush1.msra.mxu0 0.0
        %2834 = vmatprep.subr.mxu0 0.0
        %2835 = vmatpush1.msra.mxu0 0.0
        %2836 = vmatprep.subr.mxu0 0.0
        %2837 = vmatpush1.msra.mxu0 0.0
        %2838 = vmatprep.subr.mxu0 0.0
        %2839 = vmatpush1.msra.mxu0 0.0
        %2840 = vmatprep.subr.mxu0 0.0
        %2841 = vmatpush1.msra.mxu0 0.0
        %2842 = vmatprep.subr.mxu0 0.0
        %2843 = vmatpush1.msra.mxu0 0.0
        %2844 = vmatprep.subr.mxu0 0.0
        %2845 = vmatpush1.msra.mxu0 0.0
        %2846 = vmatprep.subr.mxu0 0.0
        %2847 = vmatpush1.msra.mxu0 0.0
        %2848 = vmatprep.subr.mxu0 0.0
        %2849 = vmatpush1.msra.mxu0 0.0
        %2850 = vmatprep.subr.mxu0 0.0
        %2851 = vmatpush1.msra.mxu0 0.0
        %2852 = vmatprep.subr.mxu0 0.0
        %2853 = vmatpush1.msra.mxu0 0.0
        %2854 = vmatprep.subr.mxu0 0.0
        %2855 = vmatpush1.msra.mxu0 0.0
        %2856 = vmatprep.subr.mxu0 0.0
        %2857 = vmatpush1.msra.mxu0 0.0
        %2858 = vmatprep.subr.mxu0 0.0
        %2859 = vmatpush1.msra.mxu0 0.0
        %2860 = vmatprep.subr.mxu0 0.0
        %2861 = vmatpush1.msra.mxu0 0.0
        %2862 = vmatprep.subr.mxu0 0.0
        %2863 = vmatpush1.msra.mxu0 0.0
        %2864 = vmatprep.subr.mxu0 0.0
        %2865 = vmatpush1.msra.mxu0 0.0
        %2866 = vmatprep.subr.mxu0 0.0
        %2867 = vmatpush1.msra.mxu0 0.0
        %2868 = vmatprep.subr.mxu0 0.0
        %2869 = vmatpush1.msra.mxu0 0.0
        %2870 = vmatprep.subr.mxu0 0.0
        %2871 = vmatpush1.msra.mxu0 0.0
        %2872 = vmatprep.subr.mxu0 0.0
        %2873 = vmatpush1.msra.mxu0 0.0
        %2874 = vmatprep.mubr.f32.mxu0 0.0
        %2875 = vmatmul.mubr.f32.gmra.mrb[0].mxu0 %v2808
        %v2876 = vpop.f32.mrb[0].mxu0
        %v2877 = vadd.f32 %v2803, %v2876
        %v2878 = vpop.f32.mrb[0].mxu0
        %v2879 = vadd.f32 %v2805, %v2878
        %2880 = vdwg.mxu0
        %2881 = vrot.lane.b32.xlu0 %v535, 16
        %v2882 = vpop.permute.xlu0 %2881
        %2883 = vrot.lane.b32.xlu0 %v536, 16
        %v2884 = vpop.permute.xlu0 %2883
        %v2885 = vsel %vm716, %v2882, %v2884
        %v2886 = vsel %vm716, %v2884, %v2882
        %v2887 = vmul.f32 %v2886, %v722
        %v2888 = vmul.f32 %v2885, %v726
        %s2889 = scalar_lea.vmem %s8, 8
        %v2890 = vld [vmem:[%s2889] sm:$0xff]
        %v2892 = vsel %vm563, %v2890, 0
        %2894 = vmatprep.subr.mxu0 %v2888
        %2895 = vmatpush1.msra.mxu0 %v2887
        %2896 = vmatprep.subr.mxu0 0.0
        %2897 = vmatpush1.msra.mxu0 0.0
        %2898 = vmatprep.subr.mxu0 0.0
        %2899 = vmatpush1.msra.mxu0 0.0
        %2900 = vmatprep.subr.mxu0 0.0
        %2901 = vmatpush1.msra.mxu0 0.0
        %2902 = vmatprep.subr.mxu0 0.0
        %2903 = vmatpush1.msra.mxu0 0.0
        %2904 = vmatprep.subr.mxu0 0.0
        %2905 = vmatpush1.msra.mxu0 0.0
        %2906 = vmatprep.subr.mxu0 0.0
        %2907 = vmatpush1.msra.mxu0 0.0
        %2908 = vmatprep.subr.mxu0 0.0
        %2909 = vmatpush1.msra.mxu0 0.0
        %2910 = vmatprep.subr.mxu0 0.0
        %2911 = vmatpush1.msra.mxu0 0.0
        %2912 = vmatprep.subr.mxu0 0.0
        %2913 = vmatpush1.msra.mxu0 0.0
        %2914 = vmatprep.subr.mxu0 0.0
        %2915 = vmatpush1.msra.mxu0 0.0
        %2916 = vmatprep.subr.mxu0 0.0
        %2917 = vmatpush1.msra.mxu0 0.0
        %2918 = vmatprep.subr.mxu0 0.0
        %2919 = vmatpush1.msra.mxu0 0.0
        %2920 = vmatprep.subr.mxu0 0.0
        %2921 = vmatpush1.msra.mxu0 0.0
        %2922 = vmatprep.subr.mxu0 0.0
        %2923 = vmatpush1.msra.mxu0 0.0
        %2924 = vmatprep.subr.mxu0 0.0
        %2925 = vmatpush1.msra.mxu0 0.0
        %2926 = vmatprep.subr.mxu0 0.0
        %2927 = vmatpush1.msra.mxu0 0.0
        %2928 = vmatprep.subr.mxu0 0.0
        %2929 = vmatpush1.msra.mxu0 0.0
        %2930 = vmatprep.subr.mxu0 0.0
        %2931 = vmatpush1.msra.mxu0 0.0
        %2932 = vmatprep.subr.mxu0 0.0
        %2933 = vmatpush1.msra.mxu0 0.0
        %2934 = vmatprep.subr.mxu0 0.0
        %2935 = vmatpush1.msra.mxu0 0.0
        %2936 = vmatprep.subr.mxu0 0.0
        %2937 = vmatpush1.msra.mxu0 0.0
        %2938 = vmatprep.subr.mxu0 0.0
        %2939 = vmatpush1.msra.mxu0 0.0
        %2940 = vmatprep.subr.mxu0 0.0
        %2941 = vmatpush1.msra.mxu0 0.0
        %2942 = vmatprep.subr.mxu0 0.0
        %2943 = vmatpush1.msra.mxu0 0.0
        %2944 = vmatprep.subr.mxu0 0.0
        %2945 = vmatpush1.msra.mxu0 0.0
        %2946 = vmatprep.subr.mxu0 0.0
        %2947 = vmatpush1.msra.mxu0 0.0
        %2948 = vmatprep.subr.mxu0 0.0
        %2949 = vmatpush1.msra.mxu0 0.0
        %2950 = vmatprep.subr.mxu0 0.0
        %2951 = vmatpush1.msra.mxu0 0.0
        %2952 = vmatprep.subr.mxu0 0.0
        %2953 = vmatpush1.msra.mxu0 0.0
        %2954 = vmatprep.subr.mxu0 0.0
        %2955 = vmatpush1.msra.mxu0 0.0
        %2956 = vmatprep.subr.mxu0 0.0
        %2957 = vmatpush1.msra.mxu0 0.0
        %2958 = vmatprep.mubr.f32.mxu0 0.0
        %2959 = vmatmul.mubr.f32.gmra.mrb[0].mxu0 %v2892
        %v2960 = vpop.f32.mrb[0].mxu0
        %v2961 = vadd.f32 0.0, %v2960
        %v2962 = vpop.f32.mrb[0].mxu0
        %v2963 = vadd.f32 0.0, %v2962
        %2964 = vdwg.mxu0
        %v2965 = vadd.f32 %v2877, %v2961
        %v2966 = vadd.f32 %v2879, %v2963
        %2967 = vrot.lane.b32.xlu0 %v535, 15
        %v2968 = vpop.permute.xlu0 %2967
        %2969 = vrot.lane.b32.xlu0 %v536, 15
        %v2970 = vpop.permute.xlu0 %2969
        %v2971 = vsel %vm811, %v2968, %v2970
        %v2972 = vsel %vm811, %v2970, %v2968
        %v2973 = vmul.f32 %v2972, %v817
        %v2974 = vmul.f32 %v2971, %v821
        %s2975 = scalar_lea.vmem %s8, 16
        %v2976 = vld [vmem:[%s2975] sm:$0xff]
        %v2978 = vsel %vm563, %v2976, 0
        %2980 = vmatprep.subr.mxu0 %v2974
        %2981 = vmatpush1.msra.mxu0 %v2973
        %2982 = vmatprep.subr.mxu0 0.0
        %2983 = vmatpush1.msra.mxu0 0.0
        %2984 = vmatprep.subr.mxu0 0.0
        %2985 = vmatpush1.msra.mxu0 0.0
        %2986 = vmatprep.subr.mxu0 0.0
        %2987 = vmatpush1.msra.mxu0 0.0
        %2988 = vmatprep.subr.mxu0 0.0
        %2989 = vmatpush1.msra.mxu0 0.0
        %2990 = vmatprep.subr.mxu0 0.0
        %2991 = vmatpush1.msra.mxu0 0.0
        %2992 = vmatprep.subr.mxu0 0.0
        %2993 = vmatpush1.msra.mxu0 0.0
        %2994 = vmatprep.subr.mxu0 0.0
        %2995 = vmatpush1.msra.mxu0 0.0
        %2996 = vmatprep.subr.mxu0 0.0
        %2997 = vmatpush1.msra.mxu0 0.0
        %2998 = vmatprep.subr.mxu0 0.0
        %2999 = vmatpush1.msra.mxu0 0.0
        %3000 = vmatprep.subr.mxu0 0.0
        %3001 = vmatpush1.msra.mxu0 0.0
        %3002 = vmatprep.subr.mxu0 0.0
        %3003 = vmatpush1.msra.mxu0 0.0
        %3004 = vmatprep.subr.mxu0 0.0
        %3005 = vmatpush1.msra.mxu0 0.0
        %3006 = vmatprep.subr.mxu0 0.0
        %3007 = vmatpush1.msra.mxu0 0.0
        %3008 = vmatprep.subr.mxu0 0.0
        %3009 = vmatpush1.msra.mxu0 0.0
        %3010 = vmatprep.subr.mxu0 0.0
        %3011 = vmatpush1.msra.mxu0 0.0
        %3012 = vmatprep.subr.mxu0 0.0
        %3013 = vmatpush1.msra.mxu0 0.0
        %3014 = vmatprep.subr.mxu0 0.0
        %3015 = vmatpush1.msra.mxu0 0.0
        %3016 = vmatprep.subr.mxu0 0.0
        %3017 = vmatpush1.msra.mxu0 0.0
        %3018 = vmatprep.subr.mxu0 0.0
        %3019 = vmatpush1.msra.mxu0 0.0
        %3020 = vmatprep.subr.mxu0 0.0
        %3021 = vmatpush1.msra.mxu0 0.0
        %3022 = vmatprep.subr.mxu0 0.0
        %3023 = vmatpush1.msra.mxu0 0.0
        %3024 = vmatprep.subr.mxu0 0.0
        %3025 = vmatpush1.msra.mxu0 0.0
        %3026 = vmatprep.subr.mxu0 0.0
        %3027 = vmatpush1.msra.mxu0 0.0
        %3028 = vmatprep.subr.mxu0 0.0
        %3029 = vmatpush1.msra.mxu0 0.0
        %3030 = vmatprep.subr.mxu0 0.0
        %3031 = vmatpush1.msra.mxu0 0.0
        %3032 = vmatprep.subr.mxu0 0.0
        %3033 = vmatpush1.msra.mxu0 0.0
        %3034 = vmatprep.subr.mxu0 0.0
        %3035 = vmatpush1.msra.mxu0 0.0
        %3036 = vmatprep.subr.mxu0 0.0
        %3037 = vmatpush1.msra.mxu0 0.0
        %3038 = vmatprep.subr.mxu0 0.0
        %3039 = vmatpush1.msra.mxu0 0.0
        %3040 = vmatprep.subr.mxu0 0.0
        %3041 = vmatpush1.msra.mxu0 0.0
        %3042 = vmatprep.subr.mxu0 0.0
        %3043 = vmatpush1.msra.mxu0 0.0
        %3044 = vmatprep.mubr.f32.mxu0 0.0
        %3045 = vmatmul.mubr.f32.gmra.mrb[0].mxu0 %v2978
        %v3046 = vpop.f32.mrb[0].mxu0
        %v3047 = vadd.f32 0.0, %v3046
        %v3048 = vpop.f32.mrb[0].mxu0
        %v3049 = vadd.f32 0.0, %v3048
        %3050 = vdwg.mxu0
        %v3051 = vadd.f32 %v2965, %v3047
        %v3052 = vadd.f32 %v2966, %v3049
        %3053 = vrot.lane.b32.xlu0 %v535, 1
        %v3054 = vpop.permute.xlu0 %3053
        %3055 = vrot.lane.b32.xlu0 %v536, 1
        %v3056 = vpop.permute.xlu0 %3055
        %v3057 = vsel %vm906, %v3054, %v3056
        %v3058 = vsel %vm906, %v3056, %v3054
        %v3059 = vmul.f32 %v3058, %v912
        %v3060 = vmul.f32 %v3057, %v916
        %s3061 = scalar_lea.vmem %s8, 24
        %v3062 = vld [vmem:[%s3061] sm:$0xff]
        %v3064 = vsel %vm563, %v3062, 0
        %3066 = vmatprep.subr.mxu0 %v3060
        %3067 = vmatpush1.msra.mxu0 %v3059
        %3068 = vmatprep.subr.mxu0 0.0
        %3069 = vmatpush1.msra.mxu0 0.0
        %3070 = vmatprep.subr.mxu0 0.0
        %3071 = vmatpush1.msra.mxu0 0.0
        %3072 = vmatprep.subr.mxu0 0.0
        %3073 = vmatpush1.msra.mxu0 0.0
        %3074 = vmatprep.subr.mxu0 0.0
        %3075 = vmatpush1.msra.mxu0 0.0
        %3076 = vmatprep.subr.mxu0 0.0
        %3077 = vmatpush1.msra.mxu0 0.0
        %3078 = vmatprep.subr.mxu0 0.0
        %3079 = vmatpush1.msra.mxu0 0.0
        %3080 = vmatprep.subr.mxu0 0.0
        %3081 = vmatpush1.msra.mxu0 0.0
        %3082 = vmatprep.subr.mxu0 0.0
        %3083 = vmatpush1.msra.mxu0 0.0
        %3084 = vmatprep.subr.mxu0 0.0
        %3085 = vmatpush1.msra.mxu0 0.0
        %3086 = vmatprep.subr.mxu0 0.0
        %3087 = vmatpush1.msra.mxu0 0.0
        %3088 = vmatprep.subr.mxu0 0.0
        %3089 = vmatpush1.msra.mxu0 0.0
        %3090 = vmatprep.subr.mxu0 0.0
        %3091 = vmatpush1.msra.mxu0 0.0
        %3092 = vmatprep.subr.mxu0 0.0
        %3093 = vmatpush1.msra.mxu0 0.0
        %3094 = vmatprep.subr.mxu0 0.0
        %3095 = vmatpush1.msra.mxu0 0.0
        %3096 = vmatprep.subr.mxu0 0.0
        %3097 = vmatpush1.msra.mxu0 0.0
        %3098 = vmatprep.subr.mxu0 0.0
        %3099 = vmatpush1.msra.mxu0 0.0
        %3100 = vmatprep.subr.mxu0 0.0
        %3101 = vmatpush1.msra.mxu0 0.0
        %3102 = vmatprep.subr.mxu0 0.0
        %3103 = vmatpush1.msra.mxu0 0.0
        %3104 = vmatprep.subr.mxu0 0.0
        %3105 = vmatpush1.msra.mxu0 0.0
        %3106 = vmatprep.subr.mxu0 0.0
        %3107 = vmatpush1.msra.mxu0 0.0
        %3108 = vmatprep.subr.mxu0 0.0
        %3109 = vmatpush1.msra.mxu0 0.0
        %3110 = vmatprep.subr.mxu0 0.0
        %3111 = vmatpush1.msra.mxu0 0.0
        %3112 = vmatprep.subr.mxu0 0.0
        %3113 = vmatpush1.msra.mxu0 0.0
        %3114 = vmatprep.subr.mxu0 0.0
        %3115 = vmatpush1.msra.mxu0 0.0
        %3116 = vmatprep.subr.mxu0 0.0
        %3117 = vmatpush1.msra.mxu0 0.0
        %3118 = vmatprep.subr.mxu0 0.0
        %3119 = vmatpush1.msra.mxu0 0.0
        %3120 = vmatprep.subr.mxu0 0.0
        %3121 = vmatpush1.msra.mxu0 0.0
        %3122 = vmatprep.subr.mxu0 0.0
        %3123 = vmatpush1.msra.mxu0 0.0
        %3124 = vmatprep.subr.mxu0 0.0
        %3125 = vmatpush1.msra.mxu0 0.0
        %3126 = vmatprep.subr.mxu0 0.0
        %3127 = vmatpush1.msra.mxu0 0.0
        %3128 = vmatprep.subr.mxu0 0.0
        %3129 = vmatpush1.msra.mxu0 0.0
        %3130 = vmatprep.mubr.f32.mxu0 0.0
        %3131 = vmatmul.mubr.f32.gmra.mrb[0].mxu0 %v3064
        %v3132 = vpop.f32.mrb[0].mxu0
        %v3133 = vadd.f32 0.0, %v3132
        %v3134 = vpop.f32.mrb[0].mxu0
        %v3135 = vadd.f32 0.0, %v3134
        %3136 = vdwg.mxu0
        %v3137 = vadd.f32 %v3051, %v3133
        %v3138 = vadd.f32 %v3052, %v3135
        %3139 = vrot.lane.b32.xlu0 %v535, 127
        %v3140 = vpop.permute.xlu0 %3139
        %3141 = vrot.lane.b32.xlu0 %v536, 127
        %v3142 = vpop.permute.xlu0 %3141
        %v3143 = vsel %vm1001, %v3140, %v3142
        %v3144 = vsel %vm1001, %v3142, %v3140
        %v3145 = vmul.f32 %v3143, %v1007
        %v3146 = vmul.f32 %v3144, %v1011
        %s3147 = scalar_lea.vmem %s8, 40
        %v3148 = vld [vmem:[%s3147] sm:$0xff]
        %v3150 = vsel %vm563, %v3148, 0
        %3152 = vmatprep.subr.mxu0 %v3146
        %3153 = vmatpush1.msra.mxu0 %v3145
        %3154 = vmatprep.subr.mxu0 0.0
        %3155 = vmatpush1.msra.mxu0 0.0
        %3156 = vmatprep.subr.mxu0 0.0
        %3157 = vmatpush1.msra.mxu0 0.0
        %3158 = vmatprep.subr.mxu0 0.0
        %3159 = vmatpush1.msra.mxu0 0.0
        %3160 = vmatprep.subr.mxu0 0.0
        %3161 = vmatpush1.msra.mxu0 0.0
        %3162 = vmatprep.subr.mxu0 0.0
        %3163 = vmatpush1.msra.mxu0 0.0
        %3164 = vmatprep.subr.mxu0 0.0
        %3165 = vmatpush1.msra.mxu0 0.0
        %3166 = vmatprep.subr.mxu0 0.0
        %3167 = vmatpush1.msra.mxu0 0.0
        %3168 = vmatprep.subr.mxu0 0.0
        %3169 = vmatpush1.msra.mxu0 0.0
        %3170 = vmatprep.subr.mxu0 0.0
        %3171 = vmatpush1.msra.mxu0 0.0
        %3172 = vmatprep.subr.mxu0 0.0
        %3173 = vmatpush1.msra.mxu0 0.0
        %3174 = vmatprep.subr.mxu0 0.0
        %3175 = vmatpush1.msra.mxu0 0.0
        %3176 = vmatprep.subr.mxu0 0.0
        %3177 = vmatpush1.msra.mxu0 0.0
        %3178 = vmatprep.subr.mxu0 0.0
        %3179 = vmatpush1.msra.mxu0 0.0
        %3180 = vmatprep.subr.mxu0 0.0
        %3181 = vmatpush1.msra.mxu0 0.0
        %3182 = vmatprep.subr.mxu0 0.0
        %3183 = vmatpush1.msra.mxu0 0.0
        %3184 = vmatprep.subr.mxu0 0.0
        %3185 = vmatpush1.msra.mxu0 0.0
        %3186 = vmatprep.subr.mxu0 0.0
        %3187 = vmatpush1.msra.mxu0 0.0
        %3188 = vmatprep.subr.mxu0 0.0
        %3189 = vmatpush1.msra.mxu0 0.0
        %3190 = vmatprep.subr.mxu0 0.0
        %3191 = vmatpush1.msra.mxu0 0.0
        %3192 = vmatprep.subr.mxu0 0.0
        %3193 = vmatpush1.msra.mxu0 0.0
        %3194 = vmatprep.subr.mxu0 0.0
        %3195 = vmatpush1.msra.mxu0 0.0
        %3196 = vmatprep.subr.mxu0 0.0
        %3197 = vmatpush1.msra.mxu0 0.0
        %3198 = vmatprep.subr.mxu0 0.0
        %3199 = vmatpush1.msra.mxu0 0.0
        %3200 = vmatprep.subr.mxu0 0.0
        %3201 = vmatpush1.msra.mxu0 0.0
        %3202 = vmatprep.subr.mxu0 0.0
        %3203 = vmatpush1.msra.mxu0 0.0
        %3204 = vmatprep.subr.mxu0 0.0
        %3205 = vmatpush1.msra.mxu0 0.0
        %3206 = vmatprep.subr.mxu0 0.0
        %3207 = vmatpush1.msra.mxu0 0.0
        %3208 = vmatprep.subr.mxu0 0.0
        %3209 = vmatpush1.msra.mxu0 0.0
        %3210 = vmatprep.subr.mxu0 0.0
        %3211 = vmatpush1.msra.mxu0 0.0
        %3212 = vmatprep.subr.mxu0 0.0
        %3213 = vmatpush1.msra.mxu0 0.0
        %3214 = vmatprep.subr.mxu0 0.0
        %3215 = vmatpush1.msra.mxu0 0.0
        %3216 = vmatprep.mubr.f32.mxu0 0.0
        %3217 = vmatmul.mubr.f32.gmra.mrb[0].mxu0 %v3150
        %v3218 = vpop.f32.mrb[0].mxu0
        %v3219 = vadd.f32 0.0, %v3218
        %v3220 = vpop.f32.mrb[0].mxu0
        %v3221 = vadd.f32 0.0, %v3220
        %3222 = vdwg.mxu0
        %v3223 = vadd.f32 %v3137, %v3219
        %v3224 = vadd.f32 %v3138, %v3221
        %3225 = vrot.lane.b32.xlu0 %v535, 113
        %v3226 = vpop.permute.xlu0 %3225
        %3227 = vrot.lane.b32.xlu0 %v536, 113
        %v3228 = vpop.permute.xlu0 %3227
        %v3229 = vsel %vm1096, %v3226, %v3228
        %v3230 = vsel %vm1096, %v3228, %v3226
        %v3231 = vmul.f32 %v3229, %v1102
        %v3232 = vmul.f32 %v3230, %v1106
        %s3233 = scalar_lea.vmem %s8, 48
        %v3234 = vld [vmem:[%s3233] sm:$0xff]
        %v3236 = vsel %vm563, %v3234, 0
        %3238 = vmatprep.subr.mxu0 %v3232
        %3239 = vmatpush1.msra.mxu0 %v3231
        %3240 = vmatprep.subr.mxu0 0.0
        %3241 = vmatpush1.msra.mxu0 0.0
        %3242 = vmatprep.subr.mxu0 0.0
        %3243 = vmatpush1.msra.mxu0 0.0
        %3244 = vmatprep.subr.mxu0 0.0
        %3245 = vmatpush1.msra.mxu0 0.0
        %3246 = vmatprep.subr.mxu0 0.0
        %3247 = vmatpush1.msra.mxu0 0.0
        %3248 = vmatprep.subr.mxu0 0.0
        %3249 = vmatpush1.msra.mxu0 0.0
        %3250 = vmatprep.subr.mxu0 0.0
        %3251 = vmatpush1.msra.mxu0 0.0
        %3252 = vmatprep.subr.mxu0 0.0
        %3253 = vmatpush1.msra.mxu0 0.0
        %3254 = vmatprep.subr.mxu0 0.0
        %3255 = vmatpush1.msra.mxu0 0.0
        %3256 = vmatprep.subr.mxu0 0.0
        %3257 = vmatpush1.msra.mxu0 0.0
        %3258 = vmatprep.subr.mxu0 0.0
        %3259 = vmatpush1.msra.mxu0 0.0
        %3260 = vmatprep.subr.mxu0 0.0
        %3261 = vmatpush1.msra.mxu0 0.0
        %3262 = vmatprep.subr.mxu0 0.0
        %3263 = vmatpush1.msra.mxu0 0.0
        %3264 = vmatprep.subr.mxu0 0.0
        %3265 = vmatpush1.msra.mxu0 0.0
        %3266 = vmatprep.subr.mxu0 0.0
        %3267 = vmatpush1.msra.mxu0 0.0
        %3268 = vmatprep.subr.mxu0 0.0
        %3269 = vmatpush1.msra.mxu0 0.0
        %3270 = vmatprep.subr.mxu0 0.0
        %3271 = vmatpush1.msra.mxu0 0.0
        %3272 = vmatprep.subr.mxu0 0.0
        %3273 = vmatpush1.msra.mxu0 0.0
        %3274 = vmatprep.subr.mxu0 0.0
        %3275 = vmatpush1.msra.mxu0 0.0
        %3276 = vmatprep.subr.mxu0 0.0
        %3277 = vmatpush1.msra.mxu0 0.0
        %3278 = vmatprep.subr.mxu0 0.0
        %3279 = vmatpush1.msra.mxu0 0.0
        %3280 = vmatprep.subr.mxu0 0.0
        %3281 = vmatpush1.msra.mxu0 0.0
        %3282 = vmatprep.subr.mxu0 0.0
        %3283 = vmatpush1.msra.mxu0 0.0
        %3284 = vmatprep.subr.mxu0 0.0
        %3285 = vmatpush1.msra.mxu0 0.0
        %3286 = vmatprep.subr.mxu0 0.0
        %3287 = vmatpush1.msra.mxu0 0.0
        %3288 = vmatprep.subr.mxu0 0.0
        %3289 = vmatpush1.msra.mxu0 0.0
        %3290 = vmatprep.subr.mxu0 0.0
        %3291 = vmatpush1.msra.mxu0 0.0
        %3292 = vmatprep.subr.mxu0 0.0
        %3293 = vmatpush1.msra.mxu0 0.0
        %3294 = vmatprep.subr.mxu0 0.0
        %3295 = vmatpush1.msra.mxu0 0.0
        %3296 = vmatprep.subr.mxu0 0.0
        %3297 = vmatpush1.msra.mxu0 0.0
        %3298 = vmatprep.subr.mxu0 0.0
        %3299 = vmatpush1.msra.mxu0 0.0
        %3300 = vmatprep.subr.mxu0 0.0
        %3301 = vmatpush1.msra.mxu0 0.0
        %3302 = vmatprep.mubr.f32.mxu0 0.0
        %3303 = vmatmul.mubr.f32.gmra.mrb[0].mxu0 %v3236
        %v3304 = vpop.f32.mrb[0].mxu0
        %v3305 = vadd.f32 0.0, %v3304
        %v3306 = vpop.f32.mrb[0].mxu0
        %v3307 = vadd.f32 0.0, %v3306
        %3308 = vdwg.mxu0
        %v3309 = vadd.f32 %v3223, %v3305
        %v3310 = vadd.f32 %v3224, %v3307
        %3311 = vrot.lane.b32.xlu0 %v535, 112
        %v3312 = vpop.permute.xlu0 %3311
        %3313 = vrot.lane.b32.xlu0 %v536, 112
        %v3314 = vpop.permute.xlu0 %3313
        %v3315 = vsel %vm1191, %v3312, %v3314
        %v3316 = vsel %vm1191, %v3314, %v3312
        %v3317 = vmul.f32 %v3315, %v1197
        %v3318 = vmul.f32 %v3316, %v1201
        %s3319 = scalar_lea.vmem %s8, 56
        %v3320 = vld [vmem:[%s3319] sm:$0xff]
        %v3322 = vsel %vm563, %v3320, 0
        %3324 = vmatprep.subr.mxu0 %v3318
        %3325 = vmatpush1.msra.mxu0 %v3317
        %3326 = vmatprep.subr.mxu0 0.0
        %3327 = vmatpush1.msra.mxu0 0.0
        %3328 = vmatprep.subr.mxu0 0.0
        %3329 = vmatpush1.msra.mxu0 0.0
        %3330 = vmatprep.subr.mxu0 0.0
        %3331 = vmatpush1.msra.mxu0 0.0
        %3332 = vmatprep.subr.mxu0 0.0
        %3333 = vmatpush1.msra.mxu0 0.0
        %3334 = vmatprep.subr.mxu0 0.0
        %3335 = vmatpush1.msra.mxu0 0.0
        %3336 = vmatprep.subr.mxu0 0.0
        %3337 = vmatpush1.msra.mxu0 0.0
        %3338 = vmatprep.subr.mxu0 0.0
        %3339 = vmatpush1.msra.mxu0 0.0
        %3340 = vmatprep.subr.mxu0 0.0
        %3341 = vmatpush1.msra.mxu0 0.0
        %3342 = vmatprep.subr.mxu0 0.0
        %3343 = vmatpush1.msra.mxu0 0.0
        %3344 = vmatprep.subr.mxu0 0.0
        %3345 = vmatpush1.msra.mxu0 0.0
        %3346 = vmatprep.subr.mxu0 0.0
        %3347 = vmatpush1.msra.mxu0 0.0
        %3348 = vmatprep.subr.mxu0 0.0
        %3349 = vmatpush1.msra.mxu0 0.0
        %3350 = vmatprep.subr.mxu0 0.0
        %3351 = vmatpush1.msra.mxu0 0.0
        %3352 = vmatprep.subr.mxu0 0.0
        %3353 = vmatpush1.msra.mxu0 0.0
        %3354 = vmatprep.subr.mxu0 0.0
        %3355 = vmatpush1.msra.mxu0 0.0
        %3356 = vmatprep.subr.mxu0 0.0
        %3357 = vmatpush1.msra.mxu0 0.0
        %3358 = vmatprep.subr.mxu0 0.0
        %3359 = vmatpush1.msra.mxu0 0.0
        %3360 = vmatprep.subr.mxu0 0.0
        %3361 = vmatpush1.msra.mxu0 0.0
        %3362 = vmatprep.subr.mxu0 0.0
        %3363 = vmatpush1.msra.mxu0 0.0
        %3364 = vmatprep.subr.mxu0 0.0
        %3365 = vmatpush1.msra.mxu0 0.0
        %3366 = vmatprep.subr.mxu0 0.0
        %3367 = vmatpush1.msra.mxu0 0.0
        %3368 = vmatprep.subr.mxu0 0.0
        %3369 = vmatpush1.msra.mxu0 0.0
        %3370 = vmatprep.subr.mxu0 0.0
        %3371 = vmatpush1.msra.mxu0 0.0
        %3372 = vmatprep.subr.mxu0 0.0
        %3373 = vmatpush1.msra.mxu0 0.0
        %3374 = vmatprep.subr.mxu0 0.0
        %3375 = vmatpush1.msra.mxu0 0.0
        %3376 = vmatprep.subr.mxu0 0.0
        %3377 = vmatpush1.msra.mxu0 0.0
        %3378 = vmatprep.subr.mxu0 0.0
        %3379 = vmatpush1.msra.mxu0 0.0
        %3380 = vmatprep.subr.mxu0 0.0
        %3381 = vmatpush1.msra.mxu0 0.0
        %3382 = vmatprep.subr.mxu0 0.0
        %3383 = vmatpush1.msra.mxu0 0.0
        %3384 = vmatprep.subr.mxu0 0.0
        %3385 = vmatpush1.msra.mxu0 0.0
        %3386 = vmatprep.subr.mxu0 0.0
        %3387 = vmatpush1.msra.mxu0 0.0
        %3388 = vmatprep.mubr.f32.mxu0 0.0
        %3389 = vmatmul.mubr.f32.gmra.mrb[0].mxu0 %v3322
        %v3390 = vpop.f32.mrb[0].mxu0
        %v3391 = vadd.f32 0.0, %v3390
        %v3392 = vpop.f32.mrb[0].mxu0
        %v3393 = vadd.f32 0.0, %v3392
        %3394 = vdwg.mxu0
        %v3395 = vadd.f32 %v3309, %v3391
        %v3396 = vadd.f32 %v3310, %v3393
        %3397 = vrot.lane.b32.xlu0 %v535, 111
        %v3398 = vpop.permute.xlu0 %3397
        %3399 = vrot.lane.b32.xlu0 %v536, 111
        %v3400 = vpop.permute.xlu0 %3399
        %v3401 = vsel %vm1286, %v3398, %v3400
        %v3402 = vsel %vm1286, %v3400, %v3398
        %v3403 = vmul.f32 %v3401, %v1292
        %v3404 = vmul.f32 %v3402, %v1296
        %s3405 = scalar_lea.vmem %s8, 64
        %v3406 = vld [vmem:[%s3405] sm:$0xff]
        %v3408 = vsel %vm563, %v3406, 0
        %3410 = vmatprep.subr.mxu0 %v3404
        %3411 = vmatpush1.msra.mxu0 %v3403
        %3412 = vmatprep.subr.mxu0 0.0
        %3413 = vmatpush1.msra.mxu0 0.0
        %3414 = vmatprep.subr.mxu0 0.0
        %3415 = vmatpush1.msra.mxu0 0.0
        %3416 = vmatprep.subr.mxu0 0.0
        %3417 = vmatpush1.msra.mxu0 0.0
        %3418 = vmatprep.subr.mxu0 0.0
        %3419 = vmatpush1.msra.mxu0 0.0
        %3420 = vmatprep.subr.mxu0 0.0
        %3421 = vmatpush1.msra.mxu0 0.0
        %3422 = vmatprep.subr.mxu0 0.0
        %3423 = vmatpush1.msra.mxu0 0.0
        %3424 = vmatprep.subr.mxu0 0.0
        %3425 = vmatpush1.msra.mxu0 0.0
        %3426 = vmatprep.subr.mxu0 0.0
        %3427 = vmatpush1.msra.mxu0 0.0
        %3428 = vmatprep.subr.mxu0 0.0
        %3429 = vmatpush1.msra.mxu0 0.0
        %3430 = vmatprep.subr.mxu0 0.0
        %3431 = vmatpush1.msra.mxu0 0.0
        %3432 = vmatprep.subr.mxu0 0.0
        %3433 = vmatpush1.msra.mxu0 0.0
        %3434 = vmatprep.subr.mxu0 0.0
        %3435 = vmatpush1.msra.mxu0 0.0
        %3436 = vmatprep.subr.mxu0 0.0
        %3437 = vmatpush1.msra.mxu0 0.0
        %3438 = vmatprep.subr.mxu0 0.0
        %3439 = vmatpush1.msra.mxu0 0.0
        %3440 = vmatprep.subr.mxu0 0.0
        %3441 = vmatpush1.msra.mxu0 0.0
        %3442 = vmatprep.subr.mxu0 0.0
        %3443 = vmatpush1.msra.mxu0 0.0
        %3444 = vmatprep.subr.mxu0 0.0
        %3445 = vmatpush1.msra.mxu0 0.0
        %3446 = vmatprep.subr.mxu0 0.0
        %3447 = vmatpush1.msra.mxu0 0.0
        %3448 = vmatprep.subr.mxu0 0.0
        %3449 = vmatpush1.msra.mxu0 0.0
        %3450 = vmatprep.subr.mxu0 0.0
        %3451 = vmatpush1.msra.mxu0 0.0
        %3452 = vmatprep.subr.mxu0 0.0
        %3453 = vmatpush1.msra.mxu0 0.0
        %3454 = vmatprep.subr.mxu0 0.0
        %3455 = vmatpush1.msra.mxu0 0.0
        %3456 = vmatprep.subr.mxu0 0.0
        %3457 = vmatpush1.msra.mxu0 0.0
        %3458 = vmatprep.subr.mxu0 0.0
        %3459 = vmatpush1.msra.mxu0 0.0
        %3460 = vmatprep.subr.mxu0 0.0
        %3461 = vmatpush1.msra.mxu0 0.0
        %3462 = vmatprep.subr.mxu0 0.0
        %3463 = vmatpush1.msra.mxu0 0.0
        %3464 = vmatprep.subr.mxu0 0.0
        %3465 = vmatpush1.msra.mxu0 0.0
        %3466 = vmatprep.subr.mxu0 0.0
        %3467 = vmatpush1.msra.mxu0 0.0
        %3468 = vmatprep.subr.mxu0 0.0
        %3469 = vmatpush1.msra.mxu0 0.0
        %3470 = vmatprep.subr.mxu0 0.0
        %3471 = vmatpush1.msra.mxu0 0.0
        %3472 = vmatprep.subr.mxu0 0.0
        %3473 = vmatpush1.msra.mxu0 0.0
        %3474 = vmatprep.mubr.f32.mxu0 0.0
        %3475 = vmatmul.mubr.f32.gmra.mrb[0].mxu0 %v3408
        %v3476 = vpop.f32.mrb[0].mxu0
        %v3477 = vadd.f32 0.0, %v3476
        %v3478 = vpop.f32.mrb[0].mxu0
        %v3479 = vadd.f32 0.0, %v3478
        %3480 = vdwg.mxu0
        %v3481 = vadd.f32 %v3395, %v3477
        %v3482 = vadd.f32 %v3396, %v3479
        %v3483 = vadd.f32 %v2720, %v3481
        %v3484 = vadd.f32 %v2721, %v3482
        %v3485 = vld [vmem:[%s9] sm:$0xff]
        %3487 = vset.pattern.permute.xlu0 0
        %3488 = vperm.xlu0 %3487, %v3485
        %v3489 = vpop.permute.xlu0 %3488
        %v3491 = vadd.f32 %v3483, %v3489
        %v3492 = vadd.f32 %v3484, %v3489
        %v3493 = vmax.f32 %v3491, 0.0
        %v3494 = vmax.f32 %v3492, 0.0
        %s3495 = scalar_lea.vmem %s10, 32
        %v3496 = vld [vmem:[%s3495] sm:$0xff]
        %3497 = vrot.lane.b32.xlu0 %v3493, 17
        %v3498 = vpop.permute.xlu0 %3497
        %3499 = vrot.lane.b32.xlu0 %v3494, 17
        %v3500 = vpop.permute.xlu0 %3499
        %v3501 = vsel %vm549, %v3498, %v3500
        %v3502 = vsel %vm549, %v3500, %v3498
        %v3503 = vmul.f32 %v3502, %v555
        %v3504 = vmul.f32 %v3501, %v559
        %v3505 = vld [vmem:[%s10] sm:$0xff]
        %v3507 = vsel %vm563, %v3505, 0
        %3509 = vmatprep.subr.mxu0 %v3504
        %3510 = vmatpush1.msra.mxu0 %v3503
        %3511 = vmatprep.subr.mxu0 0.0
        %3512 = vmatpush1.msra.mxu0 0.0
        %3513 = vmatprep.subr.mxu0 0.0
        %3514 = vmatpush1.msra.mxu0 0.0
        %3515 = vmatprep.subr.mxu0 0.0
        %3516 = vmatpush1.msra.mxu0 0.0
        %3517 = vmatprep.subr.mxu0 0.0
        %3518 = vmatpush1.msra.mxu0 0.0
        %3519 = vmatprep.subr.mxu0 0.0
        %3520 = vmatpush1.msra.mxu0 0.0
        %3521 = vmatprep.subr.mxu0 0.0
        %3522 = vmatpush1.msra.mxu0 0.0
        %3523 = vmatprep.subr.mxu0 0.0
        %3524 = vmatpush1.msra.mxu0 0.0
        %3525 = vmatprep.subr.mxu0 0.0
        %3526 = vmatpush1.msra.mxu0 0.0
        %3527 = vmatprep.subr.mxu0 0.0
        %3528 = vmatpush1.msra.mxu0 0.0
        %3529 = vmatprep.subr.mxu0 0.0
        %3530 = vmatpush1.msra.mxu0 0.0
        %3531 = vmatprep.subr.mxu0 0.0
        %3532 = vmatpush1.msra.mxu0 0.0
        %3533 = vmatprep.subr.mxu0 0.0
        %3534 = vmatpush1.msra.mxu0 0.0
        %3535 = vmatprep.subr.mxu0 0.0
        %3536 = vmatpush1.msra.mxu0 0.0
        %3537 = vmatprep.subr.mxu0 0.0
        %3538 = vmatpush1.msra.mxu0 0.0
        %3539 = vmatprep.subr.mxu0 0.0
        %3540 = vmatpush1.msra.mxu0 0.0
        %3541 = vmatprep.subr.mxu0 0.0
        %3542 = vmatpush1.msra.mxu0 0.0
        %3543 = vmatprep.subr.mxu0 0.0
        %3544 = vmatpush1.msra.mxu0 0.0
        %3545 = vmatprep.subr.mxu0 0.0
        %3546 = vmatpush1.msra.mxu0 0.0
        %3547 = vmatprep.subr.mxu0 0.0
        %3548 = vmatpush1.msra.mxu0 0.0
        %3549 = vmatprep.subr.mxu0 0.0
        %3550 = vmatpush1.msra.mxu0 0.0
        %3551 = vmatprep.subr.mxu0 0.0
        %3552 = vmatpush1.msra.mxu0 0.0
        %3553 = vmatprep.subr.mxu0 0.0
        %3554 = vmatpush1.msra.mxu0 0.0
        %3555 = vmatprep.subr.mxu0 0.0
        %3556 = vmatpush1.msra.mxu0 0.0
        %3557 = vmatprep.subr.mxu0 0.0
        %3558 = vmatpush1.msra.mxu0 0.0
        %3559 = vmatprep.subr.mxu0 0.0
        %3560 = vmatpush1.msra.mxu0 0.0
        %3561 = vmatprep.subr.mxu0 0.0
        %3562 = vmatpush1.msra.mxu0 0.0
        %3563 = vmatprep.subr.mxu0 0.0
        %3564 = vmatpush1.msra.mxu0 0.0
        %3565 = vmatprep.subr.mxu0 0.0
        %3566 = vmatpush1.msra.mxu0 0.0
        %3567 = vmatprep.subr.mxu0 0.0
        %3568 = vmatpush1.msra.mxu0 0.0
        %3569 = vmatprep.subr.mxu0 0.0
        %3570 = vmatpush1.msra.mxu0 0.0
        %3571 = vmatprep.subr.mxu0 0.0
        %3572 = vmatpush1.msra.mxu0 0.0
        %3573 = vmatprep.mubr.f32.mxu0 0.0
        %3574 = vmatmul.mubr.f32.gmra.mrb[0].mxu0 %v3507
        %v3575 = vpop.f32.mrb[0].mxu0
        %v3576 = vadd.f32 0.0, %v3575
        %v3577 = vpop.f32.mrb[0].mxu0
        %v3578 = vadd.f32 0.0, %v3577
        %3579 = vdwg.mxu0
        %v3581 = vsel %vm563, %v3496, 0
        %3583 = vmatprep.subr.mxu0 %v3494
        %3584 = vmatpush1.msra.mxu0 %v3493
        %3585 = vmatprep.subr.mxu0 0.0
        %3586 = vmatpush1.msra.mxu0 0.0
        %3587 = vmatprep.subr.mxu0 0.0
        %3588 = vmatpush1.msra.mxu0 0.0
        %3589 = vmatprep.subr.mxu0 0.0
        %3590 = vmatpush1.msra.mxu0 0.0
        %3591 = vmatprep.subr.mxu0 0.0
        %3592 = vmatpush1.msra.mxu0 0.0
        %3593 = vmatprep.subr.mxu0 0.0
        %3594 = vmatpush1.msra.mxu0 0.0
        %3595 = vmatprep.subr.mxu0 0.0
        %3596 = vmatpush1.msra.mxu0 0.0
        %3597 = vmatprep.subr.mxu0 0.0
        %3598 = vmatpush1.msra.mxu0 0.0
        %3599 = vmatprep.subr.mxu0 0.0
        %3600 = vmatpush1.msra.mxu0 0.0
        %3601 = vmatprep.subr.mxu0 0.0
        %3602 = vmatpush1.msra.mxu0 0.0
        %3603 = vmatprep.subr.mxu0 0.0
        %3604 = vmatpush1.msra.mxu0 0.0
        %3605 = vmatprep.subr.mxu0 0.0
        %3606 = vmatpush1.msra.mxu0 0.0
        %3607 = vmatprep.subr.mxu0 0.0
        %3608 = vmatpush1.msra.mxu0 0.0
        %3609 = vmatprep.subr.mxu0 0.0
        %3610 = vmatpush1.msra.mxu0 0.0
        %3611 = vmatprep.subr.mxu0 0.0
        %3612 = vmatpush1.msra.mxu0 0.0
        %3613 = vmatprep.subr.mxu0 0.0
        %3614 = vmatpush1.msra.mxu0 0.0
        %3615 = vmatprep.subr.mxu0 0.0
        %3616 = vmatpush1.msra.mxu0 0.0
        %3617 = vmatprep.subr.mxu0 0.0
        %3618 = vmatpush1.msra.mxu0 0.0
        %3619 = vmatprep.subr.mxu0 0.0
        %3620 = vmatpush1.msra.mxu0 0.0
        %3621 = vmatprep.subr.mxu0 0.0
        %3622 = vmatpush1.msra.mxu0 0.0
        %3623 = vmatprep.subr.mxu0 0.0
        %3624 = vmatpush1.msra.mxu0 0.0
        %3625 = vmatprep.subr.mxu0 0.0
        %3626 = vmatpush1.msra.mxu0 0.0
        %3627 = vmatprep.subr.mxu0 0.0
        %3628 = vmatpush1.msra.mxu0 0.0
        %3629 = vmatprep.subr.mxu0 0.0
        %3630 = vmatpush1.msra.mxu0 0.0
        %3631 = vmatprep.subr.mxu0 0.0
        %3632 = vmatpush1.msra.mxu0 0.0
        %3633 = vmatprep.subr.mxu0 0.0
        %3634 = vmatpush1.msra.mxu0 0.0
        %3635 = vmatprep.subr.mxu0 0.0
        %3636 = vmatpush1.msra.mxu0 0.0
        %3637 = vmatprep.subr.mxu0 0.0
        %3638 = vmatpush1.msra.mxu0 0.0
        %3639 = vmatprep.subr.mxu0 0.0
        %3640 = vmatpush1.msra.mxu0 0.0
        %3641 = vmatprep.subr.mxu0 0.0
        %3642 = vmatpush1.msra.mxu0 0.0
        %3643 = vmatprep.subr.mxu0 0.0
        %3644 = vmatpush1.msra.mxu0 0.0
        %3645 = vmatprep.subr.mxu0 0.0
        %3646 = vmatpush1.msra.mxu0 0.0
        %3647 = vmatprep.mubr.f32.mxu0 0.0
        %3648 = vmatmul.mubr.f32.gmra.mrb[0].mxu0 %v3581
        %v3649 = vpop.f32.mrb[0].mxu0
        %v3650 = vadd.f32 %v3576, %v3649
        %v3651 = vpop.f32.mrb[0].mxu0
        %v3652 = vadd.f32 %v3578, %v3651
        %3653 = vdwg.mxu0
        %3654 = vrot.lane.b32.xlu0 %v3493, 16
        %v3655 = vpop.permute.xlu0 %3654
        %3656 = vrot.lane.b32.xlu0 %v3494, 16
        %v3657 = vpop.permute.xlu0 %3656
        %v3658 = vsel %vm716, %v3655, %v3657
        %v3659 = vsel %vm716, %v3657, %v3655
        %v3660 = vmul.f32 %v3659, %v722
        %v3661 = vmul.f32 %v3658, %v726
        %s3662 = scalar_lea.vmem %s10, 8
        %v3663 = vld [vmem:[%s3662] sm:$0xff]
        %v3665 = vsel %vm563, %v3663, 0
        %3667 = vmatprep.subr.mxu0 %v3661
        %3668 = vmatpush1.msra.mxu0 %v3660
        %3669 = vmatprep.subr.mxu0 0.0
        %3670 = vmatpush1.msra.mxu0 0.0
        %3671 = vmatprep.subr.mxu0 0.0
        %3672 = vmatpush1.msra.mxu0 0.0
        %3673 = vmatprep.subr.mxu0 0.0
        %3674 = vmatpush1.msra.mxu0 0.0
        %3675 = vmatprep.subr.mxu0 0.0
        %3676 = vmatpush1.msra.mxu0 0.0
        %3677 = vmatprep.subr.mxu0 0.0
        %3678 = vmatpush1.msra.mxu0 0.0
        %3679 = vmatprep.subr.mxu0 0.0
        %3680 = vmatpush1.msra.mxu0 0.0
        %3681 = vmatprep.subr.mxu0 0.0
        %3682 = vmatpush1.msra.mxu0 0.0
        %3683 = vmatprep.subr.mxu0 0.0
        %3684 = vmatpush1.msra.mxu0 0.0
        %3685 = vmatprep.subr.mxu0 0.0
        %3686 = vmatpush1.msra.mxu0 0.0
        %3687 = vmatprep.subr.mxu0 0.0
        %3688 = vmatpush1.msra.mxu0 0.0
        %3689 = vmatprep.subr.mxu0 0.0
        %3690 = vmatpush1.msra.mxu0 0.0
        %3691 = vmatprep.subr.mxu0 0.0
        %3692 = vmatpush1.msra.mxu0 0.0
        %3693 = vmatprep.subr.mxu0 0.0
        %3694 = vmatpush1.msra.mxu0 0.0
        %3695 = vmatprep.subr.mxu0 0.0
        %3696 = vmatpush1.msra.mxu0 0.0
        %3697 = vmatprep.subr.mxu0 0.0
        %3698 = vmatpush1.msra.mxu0 0.0
        %3699 = vmatprep.subr.mxu0 0.0
        %3700 = vmatpush1.msra.mxu0 0.0
        %3701 = vmatprep.subr.mxu0 0.0
        %3702 = vmatpush1.msra.mxu0 0.0
        %3703 = vmatprep.subr.mxu0 0.0
        %3704 = vmatpush1.msra.mxu0 0.0
        %3705 = vmatprep.subr.mxu0 0.0
        %3706 = vmatpush1.msra.mxu0 0.0
        %3707 = vmatprep.subr.mxu0 0.0
        %3708 = vmatpush1.msra.mxu0 0.0
        %3709 = vmatprep.subr.mxu0 0.0
        %3710 = vmatpush1.msra.mxu0 0.0
        %3711 = vmatprep.subr.mxu0 0.0
        %3712 = vmatpush1.msra.mxu0 0.0
        %3713 = vmatprep.subr.mxu0 0.0
        %3714 = vmatpush1.msra.mxu0 0.0
        %3715 = vmatprep.subr.mxu0 0.0
        %3716 = vmatpush1.msra.mxu0 0.0
        %3717 = vmatprep.subr.mxu0 0.0
        %3718 = vmatpush1.msra.mxu0 0.0
        %3719 = vmatprep.subr.mxu0 0.0
        %3720 = vmatpush1.msra.mxu0 0.0
        %3721 = vmatprep.subr.mxu0 0.0
        %3722 = vmatpush1.msra.mxu0 0.0
        %3723 = vmatprep.subr.mxu0 0.0
        %3724 = vmatpush1.msra.mxu0 0.0
        %3725 = vmatprep.subr.mxu0 0.0
        %3726 = vmatpush1.msra.mxu0 0.0
        %3727 = vmatprep.subr.mxu0 0.0
        %3728 = vmatpush1.msra.mxu0 0.0
        %3729 = vmatprep.subr.mxu0 0.0
        %3730 = vmatpush1.msra.mxu0 0.0
        %3731 = vmatprep.mubr.f32.mxu0 0.0
        %3732 = vmatmul.mubr.f32.gmra.mrb[0].mxu0 %v3665
        %v3733 = vpop.f32.mrb[0].mxu0
        %v3734 = vadd.f32 0.0, %v3733
        %v3735 = vpop.f32.mrb[0].mxu0
        %v3736 = vadd.f32 0.0, %v3735
        %3737 = vdwg.mxu0
        %v3738 = vadd.f32 %v3650, %v3734
        %v3739 = vadd.f32 %v3652, %v3736
        %3740 = vrot.lane.b32.xlu0 %v3493, 15
        %v3741 = vpop.permute.xlu0 %3740
        %3742 = vrot.lane.b32.xlu0 %v3494, 15
        %v3743 = vpop.permute.xlu0 %3742
        %v3744 = vsel %vm811, %v3741, %v3743
        %v3745 = vsel %vm811, %v3743, %v3741
        %v3746 = vmul.f32 %v3745, %v817
        %v3747 = vmul.f32 %v3744, %v821
        %s3748 = scalar_lea.vmem %s10, 16
        %v3749 = vld [vmem:[%s3748] sm:$0xff]
        %v3751 = vsel %vm563, %v3749, 0
        %3753 = vmatprep.subr.mxu0 %v3747
        %3754 = vmatpush1.msra.mxu0 %v3746
        %3755 = vmatprep.subr.mxu0 0.0
        %3756 = vmatpush1.msra.mxu0 0.0
        %3757 = vmatprep.subr.mxu0 0.0
        %3758 = vmatpush1.msra.mxu0 0.0
        %3759 = vmatprep.subr.mxu0 0.0
        %3760 = vmatpush1.msra.mxu0 0.0
        %3761 = vmatprep.subr.mxu0 0.0
        %3762 = vmatpush1.msra.mxu0 0.0
        %3763 = vmatprep.subr.mxu0 0.0
        %3764 = vmatpush1.msra.mxu0 0.0
        %3765 = vmatprep.subr.mxu0 0.0
        %3766 = vmatpush1.msra.mxu0 0.0
        %3767 = vmatprep.subr.mxu0 0.0
        %3768 = vmatpush1.msra.mxu0 0.0
        %3769 = vmatprep.subr.mxu0 0.0
        %3770 = vmatpush1.msra.mxu0 0.0
        %3771 = vmatprep.subr.mxu0 0.0
        %3772 = vmatpush1.msra.mxu0 0.0
        %3773 = vmatprep.subr.mxu0 0.0
        %3774 = vmatpush1.msra.mxu0 0.0
        %3775 = vmatprep.subr.mxu0 0.0
        %3776 = vmatpush1.msra.mxu0 0.0
        %3777 = vmatprep.subr.mxu0 0.0
        %3778 = vmatpush1.msra.mxu0 0.0
        %3779 = vmatprep.subr.mxu0 0.0
        %3780 = vmatpush1.msra.mxu0 0.0
        %3781 = vmatprep.subr.mxu0 0.0
        %3782 = vmatpush1.msra.mxu0 0.0
        %3783 = vmatprep.subr.mxu0 0.0
        %3784 = vmatpush1.msra.mxu0 0.0
        %3785 = vmatprep.subr.mxu0 0.0
        %3786 = vmatpush1.msra.mxu0 0.0
        %3787 = vmatprep.subr.mxu0 0.0
        %3788 = vmatpush1.msra.mxu0 0.0
        %3789 = vmatprep.subr.mxu0 0.0
        %3790 = vmatpush1.msra.mxu0 0.0
        %3791 = vmatprep.subr.mxu0 0.0
        %3792 = vmatpush1.msra.mxu0 0.0
        %3793 = vmatprep.subr.mxu0 0.0
        %3794 = vmatpush1.msra.mxu0 0.0
        %3795 = vmatprep.subr.mxu0 0.0
        %3796 = vmatpush1.msra.mxu0 0.0
        %3797 = vmatprep.subr.mxu0 0.0
        %3798 = vmatpush1.msra.mxu0 0.0
        %3799 = vmatprep.subr.mxu0 0.0
        %3800 = vmatpush1.msra.mxu0 0.0
        %3801 = vmatprep.subr.mxu0 0.0
        %3802 = vmatpush1.msra.mxu0 0.0
        %3803 = vmatprep.subr.mxu0 0.0
        %3804 = vmatpush1.msra.mxu0 0.0
        %3805 = vmatprep.subr.mxu0 0.0
        %3806 = vmatpush1.msra.mxu0 0.0
        %3807 = vmatprep.subr.mxu0 0.0
        %3808 = vmatpush1.msra.mxu0 0.0
        %3809 = vmatprep.subr.mxu0 0.0
        %3810 = vmatpush1.msra.mxu0 0.0
        %3811 = vmatprep.subr.mxu0 0.0
        %3812 = vmatpush1.msra.mxu0 0.0
        %3813 = vmatprep.subr.mxu0 0.0
        %3814 = vmatpush1.msra.mxu0 0.0
        %3815 = vmatprep.subr.mxu0 0.0
        %3816 = vmatpush1.msra.mxu0 0.0
        %3817 = vmatprep.mubr.f32.mxu0 0.0
        %3818 = vmatmul.mubr.f32.gmra.mrb[0].mxu0 %v3751
        %v3819 = vpop.f32.mrb[0].mxu0
        %v3820 = vadd.f32 0.0, %v3819
        %v3821 = vpop.f32.mrb[0].mxu0
        %v3822 = vadd.f32 0.0, %v3821
        %3823 = vdwg.mxu0
        %v3824 = vadd.f32 %v3738, %v3820
        %v3825 = vadd.f32 %v3739, %v3822
        %3826 = vrot.lane.b32.xlu0 %v3493, 1
        %v3827 = vpop.permute.xlu0 %3826
        %3828 = vrot.lane.b32.xlu0 %v3494, 1
        %v3829 = vpop.permute.xlu0 %3828
        %v3830 = vsel %vm906, %v3827, %v3829
        %v3831 = vsel %vm906, %v3829, %v3827
        %v3832 = vmul.f32 %v3831, %v912
        %v3833 = vmul.f32 %v3830, %v916
        %s3834 = scalar_lea.vmem %s10, 24
        %v3835 = vld [vmem:[%s3834] sm:$0xff]
        %v3837 = vsel %vm563, %v3835, 0
        %3839 = vmatprep.subr.mxu0 %v3833
        %3840 = vmatpush1.msra.mxu0 %v3832
        %3841 = vmatprep.subr.mxu0 0.0
        %3842 = vmatpush1.msra.mxu0 0.0
        %3843 = vmatprep.subr.mxu0 0.0
        %3844 = vmatpush1.msra.mxu0 0.0
        %3845 = vmatprep.subr.mxu0 0.0
        %3846 = vmatpush1.msra.mxu0 0.0
        %3847 = vmatprep.subr.mxu0 0.0
        %3848 = vmatpush1.msra.mxu0 0.0
        %3849 = vmatprep.subr.mxu0 0.0
        %3850 = vmatpush1.msra.mxu0 0.0
        %3851 = vmatprep.subr.mxu0 0.0
        %3852 = vmatpush1.msra.mxu0 0.0
        %3853 = vmatprep.subr.mxu0 0.0
        %3854 = vmatpush1.msra.mxu0 0.0
        %3855 = vmatprep.subr.mxu0 0.0
        %3856 = vmatpush1.msra.mxu0 0.0
        %3857 = vmatprep.subr.mxu0 0.0
        %3858 = vmatpush1.msra.mxu0 0.0
        %3859 = vmatprep.subr.mxu0 0.0
        %3860 = vmatpush1.msra.mxu0 0.0
        %3861 = vmatprep.subr.mxu0 0.0
        %3862 = vmatpush1.msra.mxu0 0.0
        %3863 = vmatprep.subr.mxu0 0.0
        %3864 = vmatpush1.msra.mxu0 0.0
        %3865 = vmatprep.subr.mxu0 0.0
        %3866 = vmatpush1.msra.mxu0 0.0
        %3867 = vmatprep.subr.mxu0 0.0
        %3868 = vmatpush1.msra.mxu0 0.0
        %3869 = vmatprep.subr.mxu0 0.0
        %3870 = vmatpush1.msra.mxu0 0.0
        %3871 = vmatprep.subr.mxu0 0.0
        %3872 = vmatpush1.msra.mxu0 0.0
        %3873 = vmatprep.subr.mxu0 0.0
        %3874 = vmatpush1.msra.mxu0 0.0
        %3875 = vmatprep.subr.mxu0 0.0
        %3876 = vmatpush1.msra.mxu0 0.0
        %3877 = vmatprep.subr.mxu0 0.0
        %3878 = vmatpush1.msra.mxu0 0.0
        %3879 = vmatprep.subr.mxu0 0.0
        %3880 = vmatpush1.msra.mxu0 0.0
        %3881 = vmatprep.subr.mxu0 0.0
        %3882 = vmatpush1.msra.mxu0 0.0
        %3883 = vmatprep.subr.mxu0 0.0
        %3884 = vmatpush1.msra.mxu0 0.0
        %3885 = vmatprep.subr.mxu0 0.0
        %3886 = vmatpush1.msra.mxu0 0.0
        %3887 = vmatprep.subr.mxu0 0.0
        %3888 = vmatpush1.msra.mxu0 0.0
        %3889 = vmatprep.subr.mxu0 0.0
        %3890 = vmatpush1.msra.mxu0 0.0
        %3891 = vmatprep.subr.mxu0 0.0
        %3892 = vmatpush1.msra.mxu0 0.0
        %3893 = vmatprep.subr.mxu0 0.0
        %3894 = vmatpush1.msra.mxu0 0.0
        %3895 = vmatprep.subr.mxu0 0.0
        %3896 = vmatpush1.msra.mxu0 0.0
        %3897 = vmatprep.subr.mxu0 0.0
        %3898 = vmatpush1.msra.mxu0 0.0
        %3899 = vmatprep.subr.mxu0 0.0
        %3900 = vmatpush1.msra.mxu0 0.0
        %3901 = vmatprep.subr.mxu0 0.0
        %3902 = vmatpush1.msra.mxu0 0.0
        %3903 = vmatprep.mubr.f32.mxu0 0.0
        %3904 = vmatmul.mubr.f32.gmra.mrb[0].mxu0 %v3837
        %v3905 = vpop.f32.mrb[0].mxu0
        %v3906 = vadd.f32 0.0, %v3905
        %v3907 = vpop.f32.mrb[0].mxu0
        %v3908 = vadd.f32 0.0, %v3907
        %3909 = vdwg.mxu0
        %v3910 = vadd.f32 %v3824, %v3906
        %v3911 = vadd.f32 %v3825, %v3908
        %3912 = vrot.lane.b32.xlu0 %v3493, 127
        %v3913 = vpop.permute.xlu0 %3912
        %3914 = vrot.lane.b32.xlu0 %v3494, 127
        %v3915 = vpop.permute.xlu0 %3914
        %v3916 = vsel %vm1001, %v3913, %v3915
        %v3917 = vsel %vm1001, %v3915, %v3913
        %v3918 = vmul.f32 %v3916, %v1007
        %v3919 = vmul.f32 %v3917, %v1011
        %s3920 = scalar_lea.vmem %s10, 40
        %v3921 = vld [vmem:[%s3920] sm:$0xff]
        %v3923 = vsel %vm563, %v3921, 0
        %3925 = vmatprep.subr.mxu0 %v3919
        %3926 = vmatpush1.msra.mxu0 %v3918
        %3927 = vmatprep.subr.mxu0 0.0
        %3928 = vmatpush1.msra.mxu0 0.0
        %3929 = vmatprep.subr.mxu0 0.0
        %3930 = vmatpush1.msra.mxu0 0.0
        %3931 = vmatprep.subr.mxu0 0.0
        %3932 = vmatpush1.msra.mxu0 0.0
        %3933 = vmatprep.subr.mxu0 0.0
        %3934 = vmatpush1.msra.mxu0 0.0
        %3935 = vmatprep.subr.mxu0 0.0
        %3936 = vmatpush1.msra.mxu0 0.0
        %3937 = vmatprep.subr.mxu0 0.0
        %3938 = vmatpush1.msra.mxu0 0.0
        %3939 = vmatprep.subr.mxu0 0.0
        %3940 = vmatpush1.msra.mxu0 0.0
        %3941 = vmatprep.subr.mxu0 0.0
        %3942 = vmatpush1.msra.mxu0 0.0
        %3943 = vmatprep.subr.mxu0 0.0
        %3944 = vmatpush1.msra.mxu0 0.0
        %3945 = vmatprep.subr.mxu0 0.0
        %3946 = vmatpush1.msra.mxu0 0.0
        %3947 = vmatprep.subr.mxu0 0.0
        %3948 = vmatpush1.msra.mxu0 0.0
        %3949 = vmatprep.subr.mxu0 0.0
        %3950 = vmatpush1.msra.mxu0 0.0
        %3951 = vmatprep.subr.mxu0 0.0
        %3952 = vmatpush1.msra.mxu0 0.0
        %3953 = vmatprep.subr.mxu0 0.0
        %3954 = vmatpush1.msra.mxu0 0.0
        %3955 = vmatprep.subr.mxu0 0.0
        %3956 = vmatpush1.msra.mxu0 0.0
        %3957 = vmatprep.subr.mxu0 0.0
        %3958 = vmatpush1.msra.mxu0 0.0
        %3959 = vmatprep.subr.mxu0 0.0
        %3960 = vmatpush1.msra.mxu0 0.0
        %3961 = vmatprep.subr.mxu0 0.0
        %3962 = vmatpush1.msra.mxu0 0.0
        %3963 = vmatprep.subr.mxu0 0.0
        %3964 = vmatpush1.msra.mxu0 0.0
        %3965 = vmatprep.subr.mxu0 0.0
        %3966 = vmatpush1.msra.mxu0 0.0
        %3967 = vmatprep.subr.mxu0 0.0
        %3968 = vmatpush1.msra.mxu0 0.0
        %3969 = vmatprep.subr.mxu0 0.0
        %3970 = vmatpush1.msra.mxu0 0.0
        %3971 = vmatprep.subr.mxu0 0.0
        %3972 = vmatpush1.msra.mxu0 0.0
        %3973 = vmatprep.subr.mxu0 0.0
        %3974 = vmatpush1.msra.mxu0 0.0
        %3975 = vmatprep.subr.mxu0 0.0
        %3976 = vmatpush1.msra.mxu0 0.0
        %3977 = vmatprep.subr.mxu0 0.0
        %3978 = vmatpush1.msra.mxu0 0.0
        %3979 = vmatprep.subr.mxu0 0.0
        %3980 = vmatpush1.msra.mxu0 0.0
        %3981 = vmatprep.subr.mxu0 0.0
        %3982 = vmatpush1.msra.mxu0 0.0
        %3983 = vmatprep.subr.mxu0 0.0
        %3984 = vmatpush1.msra.mxu0 0.0
        %3985 = vmatprep.subr.mxu0 0.0
        %3986 = vmatpush1.msra.mxu0 0.0
        %3987 = vmatprep.subr.mxu0 0.0
        %3988 = vmatpush1.msra.mxu0 0.0
        %3989 = vmatprep.mubr.f32.mxu0 0.0
        %3990 = vmatmul.mubr.f32.gmra.mrb[0].mxu0 %v3923
        %v3991 = vpop.f32.mrb[0].mxu0
        %v3992 = vadd.f32 0.0, %v3991
        %v3993 = vpop.f32.mrb[0].mxu0
        %v3994 = vadd.f32 0.0, %v3993
        %3995 = vdwg.mxu0
        %v3996 = vadd.f32 %v3910, %v3992
        %v3997 = vadd.f32 %v3911, %v3994
        %3998 = vrot.lane.b32.xlu0 %v3493, 113
        %v3999 = vpop.permute.xlu0 %3998
        %4000 = vrot.lane.b32.xlu0 %v3494, 113
        %v4001 = vpop.permute.xlu0 %4000
        %v4002 = vsel %vm1096, %v3999, %v4001
        %v4003 = vsel %vm1096, %v4001, %v3999
        %v4004 = vmul.f32 %v4002, %v1102
        %v4005 = vmul.f32 %v4003, %v1106
        %s4006 = scalar_lea.vmem %s10, 48
        %v4007 = vld [vmem:[%s4006] sm:$0xff]
        %v4009 = vsel %vm563, %v4007, 0
        %4011 = vmatprep.subr.mxu0 %v4005
        %4012 = vmatpush1.msra.mxu0 %v4004
        %4013 = vmatprep.subr.mxu0 0.0
        %4014 = vmatpush1.msra.mxu0 0.0
        %4015 = vmatprep.subr.mxu0 0.0
        %4016 = vmatpush1.msra.mxu0 0.0
        %4017 = vmatprep.subr.mxu0 0.0
        %4018 = vmatpush1.msra.mxu0 0.0
        %4019 = vmatprep.subr.mxu0 0.0
        %4020 = vmatpush1.msra.mxu0 0.0
        %4021 = vmatprep.subr.mxu0 0.0
        %4022 = vmatpush1.msra.mxu0 0.0
        %4023 = vmatprep.subr.mxu0 0.0
        %4024 = vmatpush1.msra.mxu0 0.0
        %4025 = vmatprep.subr.mxu0 0.0
        %4026 = vmatpush1.msra.mxu0 0.0
        %4027 = vmatprep.subr.mxu0 0.0
        %4028 = vmatpush1.msra.mxu0 0.0
        %4029 = vmatprep.subr.mxu0 0.0
        %4030 = vmatpush1.msra.mxu0 0.0
        %4031 = vmatprep.subr.mxu0 0.0
        %4032 = vmatpush1.msra.mxu0 0.0
        %4033 = vmatprep.subr.mxu0 0.0
        %4034 = vmatpush1.msra.mxu0 0.0
        %4035 = vmatprep.subr.mxu0 0.0
        %4036 = vmatpush1.msra.mxu0 0.0
        %4037 = vmatprep.subr.mxu0 0.0
        %4038 = vmatpush1.msra.mxu0 0.0
        %4039 = vmatprep.subr.mxu0 0.0
        %4040 = vmatpush1.msra.mxu0 0.0
        %4041 = vmatprep.subr.mxu0 0.0
        %4042 = vmatpush1.msra.mxu0 0.0
        %4043 = vmatprep.subr.mxu0 0.0
        %4044 = vmatpush1.msra.mxu0 0.0
        %4045 = vmatprep.subr.mxu0 0.0
        %4046 = vmatpush1.msra.mxu0 0.0
        %4047 = vmatprep.subr.mxu0 0.0
        %4048 = vmatpush1.msra.mxu0 0.0
        %4049 = vmatprep.subr.mxu0 0.0
        %4050 = vmatpush1.msra.mxu0 0.0
        %4051 = vmatprep.subr.mxu0 0.0
        %4052 = vmatpush1.msra.mxu0 0.0
        %4053 = vmatprep.subr.mxu0 0.0
        %4054 = vmatpush1.msra.mxu0 0.0
        %4055 = vmatprep.subr.mxu0 0.0
        %4056 = vmatpush1.msra.mxu0 0.0
        %4057 = vmatprep.subr.mxu0 0.0
        %4058 = vmatpush1.msra.mxu0 0.0
        %4059 = vmatprep.subr.mxu0 0.0
        %4060 = vmatpush1.msra.mxu0 0.0
        %4061 = vmatprep.subr.mxu0 0.0
        %4062 = vmatpush1.msra.mxu0 0.0
        %4063 = vmatprep.subr.mxu0 0.0
        %4064 = vmatpush1.msra.mxu0 0.0
        %4065 = vmatprep.subr.mxu0 0.0
        %4066 = vmatpush1.msra.mxu0 0.0
        %4067 = vmatprep.subr.mxu0 0.0
        %4068 = vmatpush1.msra.mxu0 0.0
        %4069 = vmatprep.subr.mxu0 0.0
        %4070 = vmatpush1.msra.mxu0 0.0
        %4071 = vmatprep.subr.mxu0 0.0
        %4072 = vmatpush1.msra.mxu0 0.0
        %4073 = vmatprep.subr.mxu0 0.0
        %4074 = vmatpush1.msra.mxu0 0.0
        %4075 = vmatprep.mubr.f32.mxu0 0.0
        %4076 = vmatmul.mubr.f32.gmra.mrb[0].mxu0 %v4009
        %v4077 = vpop.f32.mrb[0].mxu0
        %v4078 = vadd.f32 0.0, %v4077
        %v4079 = vpop.f32.mrb[0].mxu0
        %v4080 = vadd.f32 0.0, %v4079
        %4081 = vdwg.mxu0
        %v4082 = vadd.f32 %v3996, %v4078
        %v4083 = vadd.f32 %v3997, %v4080
        %4084 = vrot.lane.b32.xlu0 %v3493, 112
        %v4085 = vpop.permute.xlu0 %4084
        %4086 = vrot.lane.b32.xlu0 %v3494, 112
        %v4087 = vpop.permute.xlu0 %4086
        %v4088 = vsel %vm1191, %v4085, %v4087
        %v4089 = vsel %vm1191, %v4087, %v4085
        %v4090 = vmul.f32 %v4088, %v1197
        %v4091 = vmul.f32 %v4089, %v1201
        %s4092 = scalar_lea.vmem %s10, 56
        %v4093 = vld [vmem:[%s4092] sm:$0xff]
        %v4095 = vsel %vm563, %v4093, 0
        %4097 = vmatprep.subr.mxu0 %v4091
        %4098 = vmatpush1.msra.mxu0 %v4090
        %4099 = vmatprep.subr.mxu0 0.0
        %4100 = vmatpush1.msra.mxu0 0.0
        %4101 = vmatprep.subr.mxu0 0.0
        %4102 = vmatpush1.msra.mxu0 0.0
        %4103 = vmatprep.subr.mxu0 0.0
        %4104 = vmatpush1.msra.mxu0 0.0
        %4105 = vmatprep.subr.mxu0 0.0
        %4106 = vmatpush1.msra.mxu0 0.0
        %4107 = vmatprep.subr.mxu0 0.0
        %4108 = vmatpush1.msra.mxu0 0.0
        %4109 = vmatprep.subr.mxu0 0.0
        %4110 = vmatpush1.msra.mxu0 0.0
        %4111 = vmatprep.subr.mxu0 0.0
        %4112 = vmatpush1.msra.mxu0 0.0
        %4113 = vmatprep.subr.mxu0 0.0
        %4114 = vmatpush1.msra.mxu0 0.0
        %4115 = vmatprep.subr.mxu0 0.0
        %4116 = vmatpush1.msra.mxu0 0.0
        %4117 = vmatprep.subr.mxu0 0.0
        %4118 = vmatpush1.msra.mxu0 0.0
        %4119 = vmatprep.subr.mxu0 0.0
        %4120 = vmatpush1.msra.mxu0 0.0
        %4121 = vmatprep.subr.mxu0 0.0
        %4122 = vmatpush1.msra.mxu0 0.0
        %4123 = vmatprep.subr.mxu0 0.0
        %4124 = vmatpush1.msra.mxu0 0.0
        %4125 = vmatprep.subr.mxu0 0.0
        %4126 = vmatpush1.msra.mxu0 0.0
        %4127 = vmatprep.subr.mxu0 0.0
        %4128 = vmatpush1.msra.mxu0 0.0
        %4129 = vmatprep.subr.mxu0 0.0
        %4130 = vmatpush1.msra.mxu0 0.0
        %4131 = vmatprep.subr.mxu0 0.0
        %4132 = vmatpush1.msra.mxu0 0.0
        %4133 = vmatprep.subr.mxu0 0.0
        %4134 = vmatpush1.msra.mxu0 0.0
        %4135 = vmatprep.subr.mxu0 0.0
        %4136 = vmatpush1.msra.mxu0 0.0
        %4137 = vmatprep.subr.mxu0 0.0
        %4138 = vmatpush1.msra.mxu0 0.0
        %4139 = vmatprep.subr.mxu0 0.0
        %4140 = vmatpush1.msra.mxu0 0.0
        %4141 = vmatprep.subr.mxu0 0.0
        %4142 = vmatpush1.msra.mxu0 0.0
        %4143 = vmatprep.subr.mxu0 0.0
        %4144 = vmatpush1.msra.mxu0 0.0
        %4145 = vmatprep.subr.mxu0 0.0
        %4146 = vmatpush1.msra.mxu0 0.0
        %4147 = vmatprep.subr.mxu0 0.0
        %4148 = vmatpush1.msra.mxu0 0.0
        %4149 = vmatprep.subr.mxu0 0.0
        %4150 = vmatpush1.msra.mxu0 0.0
        %4151 = vmatprep.subr.mxu0 0.0
        %4152 = vmatpush1.msra.mxu0 0.0
        %4153 = vmatprep.subr.mxu0 0.0
        %4154 = vmatpush1.msra.mxu0 0.0
        %4155 = vmatprep.subr.mxu0 0.0
        %4156 = vmatpush1.msra.mxu0 0.0
        %4157 = vmatprep.subr.mxu0 0.0
        %4158 = vmatpush1.msra.mxu0 0.0
        %4159 = vmatprep.subr.mxu0 0.0
        %4160 = vmatpush1.msra.mxu0 0.0
        %4161 = vmatprep.mubr.f32.mxu0 0.0
        %4162 = vmatmul.mubr.f32.gmra.mrb[0].mxu0 %v4095
        %v4163 = vpop.f32.mrb[0].mxu0
        %v4164 = vadd.f32 0.0, %v4163
        %v4165 = vpop.f32.mrb[0].mxu0
        %v4166 = vadd.f32 0.0, %v4165
        %4167 = vdwg.mxu0
        %v4168 = vadd.f32 %v4082, %v4164
        %v4169 = vadd.f32 %v4083, %v4166
        %4170 = vrot.lane.b32.xlu0 %v3493, 111
        %v4171 = vpop.permute.xlu0 %4170
        %4172 = vrot.lane.b32.xlu0 %v3494, 111
        %v4173 = vpop.permute.xlu0 %4172
        %v4174 = vsel %vm1286, %v4171, %v4173
        %v4175 = vsel %vm1286, %v4173, %v4171
        %v4176 = vmul.f32 %v4174, %v1292
        %v4177 = vmul.f32 %v4175, %v1296
        %s4178 = scalar_lea.vmem %s10, 64
        %v4179 = vld [vmem:[%s4178] sm:$0xff]
        %v4181 = vsel %vm563, %v4179, 0
        %4183 = vmatprep.subr.mxu0 %v4177
        %4184 = vmatpush1.msra.mxu0 %v4176
        %4185 = vmatprep.subr.mxu0 0.0
        %4186 = vmatpush1.msra.mxu0 0.0
        %4187 = vmatprep.subr.mxu0 0.0
        %4188 = vmatpush1.msra.mxu0 0.0
        %4189 = vmatprep.subr.mxu0 0.0
        %4190 = vmatpush1.msra.mxu0 0.0
        %4191 = vmatprep.subr.mxu0 0.0
        %4192 = vmatpush1.msra.mxu0 0.0
        %4193 = vmatprep.subr.mxu0 0.0
        %4194 = vmatpush1.msra.mxu0 0.0
        %4195 = vmatprep.subr.mxu0 0.0
        %4196 = vmatpush1.msra.mxu0 0.0
        %4197 = vmatprep.subr.mxu0 0.0
        %4198 = vmatpush1.msra.mxu0 0.0
        %4199 = vmatprep.subr.mxu0 0.0
        %4200 = vmatpush1.msra.mxu0 0.0
        %4201 = vmatprep.subr.mxu0 0.0
        %4202 = vmatpush1.msra.mxu0 0.0
        %4203 = vmatprep.subr.mxu0 0.0
        %4204 = vmatpush1.msra.mxu0 0.0
        %4205 = vmatprep.subr.mxu0 0.0
        %4206 = vmatpush1.msra.mxu0 0.0
        %4207 = vmatprep.subr.mxu0 0.0
        %4208 = vmatpush1.msra.mxu0 0.0
        %4209 = vmatprep.subr.mxu0 0.0
        %4210 = vmatpush1.msra.mxu0 0.0
        %4211 = vmatprep.subr.mxu0 0.0
        %4212 = vmatpush1.msra.mxu0 0.0
        %4213 = vmatprep.subr.mxu0 0.0
        %4214 = vmatpush1.msra.mxu0 0.0
        %4215 = vmatprep.subr.mxu0 0.0
        %4216 = vmatpush1.msra.mxu0 0.0
        %4217 = vmatprep.subr.mxu0 0.0
        %4218 = vmatpush1.msra.mxu0 0.0
        %4219 = vmatprep.subr.mxu0 0.0
        %4220 = vmatpush1.msra.mxu0 0.0
        %4221 = vmatprep.subr.mxu0 0.0
        %4222 = vmatpush1.msra.mxu0 0.0
        %4223 = vmatprep.subr.mxu0 0.0
        %4224 = vmatpush1.msra.mxu0 0.0
        %4225 = vmatprep.subr.mxu0 0.0
        %4226 = vmatpush1.msra.mxu0 0.0
        %4227 = vmatprep.subr.mxu0 0.0
        %4228 = vmatpush1.msra.mxu0 0.0
        %4229 = vmatprep.subr.mxu0 0.0
        %4230 = vmatpush1.msra.mxu0 0.0
        %4231 = vmatprep.subr.mxu0 0.0
        %4232 = vmatpush1.msra.mxu0 0.0
        %4233 = vmatprep.subr.mxu0 0.0
        %4234 = vmatpush1.msra.mxu0 0.0
        %4235 = vmatprep.subr.mxu0 0.0
        %4236 = vmatpush1.msra.mxu0 0.0
        %4237 = vmatprep.subr.mxu0 0.0
        %4238 = vmatpush1.msra.mxu0 0.0
        %4239 = vmatprep.subr.mxu0 0.0
        %4240 = vmatpush1.msra.mxu0 0.0
        %4241 = vmatprep.subr.mxu0 0.0
        %4242 = vmatpush1.msra.mxu0 0.0
        %4243 = vmatprep.subr.mxu0 0.0
        %4244 = vmatpush1.msra.mxu0 0.0
        %4245 = vmatprep.subr.mxu0 0.0
        %4246 = vmatpush1.msra.mxu0 0.0
        %4247 = vmatprep.mubr.f32.mxu0 0.0
        %4248 = vmatmul.mubr.f32.gmra.mrb[0].mxu0 %v4181
        %v4249 = vpop.f32.mrb[0].mxu0
        %v4250 = vadd.f32 0.0, %v4249
        %v4251 = vpop.f32.mrb[0].mxu0
        %v4252 = vadd.f32 0.0, %v4251
        %4253 = vdwg.mxu0
        %v4254 = vadd.f32 %v4168, %v4250
        %v4255 = vadd.f32 %v4169, %v4252
        %v4256 = vld [vmem:[%s11] sm:$0xff]
        %4258 = vset.pattern.permute.xlu0 0
        %4259 = vperm.xlu0 %4258, %v4256
        %v4260 = vpop.permute.xlu0 %4259
        %v4262 = vadd.f32 %v4254, %v4260
        %v4263 = vadd.f32 %v4255, %v4260
        %v4264 = vld [vmem:[%s12] sm:$0xff]
        %v4265 = vld [vmem:[%s13] sm:$0xff]
        %v4267 = vsel %vm563, %v4265, 0
        %4269 = vmatprep.subr.mxu0 %v536
        %4270 = vmatpush1.msra.mxu0 %v535
        %4271 = vmatprep.subr.mxu0 0.0
        %4272 = vmatpush1.msra.mxu0 0.0
        %4273 = vmatprep.subr.mxu0 0.0
        %4274 = vmatpush1.msra.mxu0 0.0
        %4275 = vmatprep.subr.mxu0 0.0
        %4276 = vmatpush1.msra.mxu0 0.0
        %4277 = vmatprep.subr.mxu0 0.0
        %4278 = vmatpush1.msra.mxu0 0.0
        %4279 = vmatprep.subr.mxu0 0.0
        %4280 = vmatpush1.msra.mxu0 0.0
        %4281 = vmatprep.subr.mxu0 0.0
        %4282 = vmatpush1.msra.mxu0 0.0
        %4283 = vmatprep.subr.mxu0 0.0
        %4284 = vmatpush1.msra.mxu0 0.0
        %4285 = vmatprep.subr.mxu0 0.0
        %4286 = vmatpush1.msra.mxu0 0.0
        %4287 = vmatprep.subr.mxu0 0.0
        %4288 = vmatpush1.msra.mxu0 0.0
        %4289 = vmatprep.subr.mxu0 0.0
        %4290 = vmatpush1.msra.mxu0 0.0
        %4291 = vmatprep.subr.mxu0 0.0
        %4292 = vmatpush1.msra.mxu0 0.0
        %4293 = vmatprep.subr.mxu0 0.0
        %4294 = vmatpush1.msra.mxu0 0.0
        %4295 = vmatprep.subr.mxu0 0.0
        %4296 = vmatpush1.msra.mxu0 0.0
        %4297 = vmatprep.subr.mxu0 0.0
        %4298 = vmatpush1.msra.mxu0 0.0
        %4299 = vmatprep.subr.mxu0 0.0
        %4300 = vmatpush1.msra.mxu0 0.0
        %4301 = vmatprep.subr.mxu0 0.0
        %4302 = vmatpush1.msra.mxu0 0.0
        %4303 = vmatprep.subr.mxu0 0.0
        %4304 = vmatpush1.msra.mxu0 0.0
        %4305 = vmatprep.subr.mxu0 0.0
        %4306 = vmatpush1.msra.mxu0 0.0
        %4307 = vmatprep.subr.mxu0 0.0
        %4308 = vmatpush1.msra.mxu0 0.0
        %4309 = vmatprep.subr.mxu0 0.0
        %4310 = vmatpush1.msra.mxu0 0.0
        %4311 = vmatprep.subr.mxu0 0.0
        %4312 = vmatpush1.msra.mxu0 0.0
        %4313 = vmatprep.subr.mxu0 0.0
        %4314 = vmatpush1.msra.mxu0 0.0
        %4315 = vmatprep.subr.mxu0 0.0
        %4316 = vmatpush1.msra.mxu0 0.0
        %4317 = vmatprep.subr.mxu0 0.0
        %4318 = vmatpush1.msra.mxu0 0.0
        %4319 = vmatprep.subr.mxu0 0.0
        %4320 = vmatpush1.msra.mxu0 0.0
        %4321 = vmatprep.subr.mxu0 0.0
        %4322 = vmatpush1.msra.mxu0 0.0
        %4323 = vmatprep.subr.mxu0 0.0
        %4324 = vmatpush1.msra.mxu0 0.0
        %4325 = vmatprep.subr.mxu0 0.0
        %4326 = vmatpush1.msra.mxu0 0.0
        %4327 = vmatprep.subr.mxu0 0.0
        %4328 = vmatpush1.msra.mxu0 0.0
        %4329 = vmatprep.subr.mxu0 0.0
        %4330 = vmatpush1.msra.mxu0 0.0
        %4331 = vmatprep.subr.mxu0 0.0
        %4332 = vmatpush1.msra.mxu0 0.0
        %4333 = vmatprep.mubr.f32.mxu0 0.0
        %4334 = vmatmul.mubr.f32.gmra.mrb[0].mxu0 %v4267
        %v4335 = vpop.f32.mrb[0].mxu0
        %v4336 = vadd.f32 0.0, %v4335
        %v4337 = vpop.f32.mrb[0].mxu0
        %v4338 = vadd.f32 0.0, %v4337
        %4339 = vdwg.mxu0
        %v4341 = vsel %vm563, %v4264, 0
        %4343 = vmatprep.subr.mxu0 %v1960
        %4344 = vmatpush1.msra.mxu0 %v1959
        %4345 = vmatprep.subr.mxu0 0.0
        %4346 = vmatpush1.msra.mxu0 0.0
        %4347 = vmatprep.subr.mxu0 0.0
        %4348 = vmatpush1.msra.mxu0 0.0
        %4349 = vmatprep.subr.mxu0 0.0
        %4350 = vmatpush1.msra.mxu0 0.0
        %4351 = vmatprep.subr.mxu0 0.0
        %4352 = vmatpush1.msra.mxu0 0.0
        %4353 = vmatprep.subr.mxu0 0.0
        %4354 = vmatpush1.msra.mxu0 0.0
        %4355 = vmatprep.subr.mxu0 0.0
        %4356 = vmatpush1.msra.mxu0 0.0
        %4357 = vmatprep.subr.mxu0 0.0
        %4358 = vmatpush1.msra.mxu0 0.0
        %4359 = vmatprep.subr.mxu0 0.0
        %4360 = vmatpush1.msra.mxu0 0.0
        %4361 = vmatprep.subr.mxu0 0.0
        %4362 = vmatpush1.msra.mxu0 0.0
        %4363 = vmatprep.subr.mxu0 0.0
        %4364 = vmatpush1.msra.mxu0 0.0
        %4365 = vmatprep.subr.mxu0 0.0
        %4366 = vmatpush1.msra.mxu0 0.0
        %4367 = vmatprep.subr.mxu0 0.0
        %4368 = vmatpush1.msra.mxu0 0.0
        %4369 = vmatprep.subr.mxu0 0.0
        %4370 = vmatpush1.msra.mxu0 0.0
        %4371 = vmatprep.subr.mxu0 0.0
        %4372 = vmatpush1.msra.mxu0 0.0
        %4373 = vmatprep.subr.mxu0 0.0
        %4374 = vmatpush1.msra.mxu0 0.0
        %4375 = vmatprep.subr.mxu0 0.0
        %4376 = vmatpush1.msra.mxu0 0.0
        %4377 = vmatprep.subr.mxu0 0.0
        %4378 = vmatpush1.msra.mxu0 0.0
        %4379 = vmatprep.subr.mxu0 0.0
        %4380 = vmatpush1.msra.mxu0 0.0
        %4381 = vmatprep.subr.mxu0 0.0
        %4382 = vmatpush1.msra.mxu0 0.0
        %4383 = vmatprep.subr.mxu0 0.0
        %4384 = vmatpush1.msra.mxu0 0.0
        %4385 = vmatprep.subr.mxu0 0.0
        %4386 = vmatpush1.msra.mxu0 0.0
        %4387 = vmatprep.subr.mxu0 0.0
        %4388 = vmatpush1.msra.mxu0 0.0
        %4389 = vmatprep.subr.mxu0 0.0
        %4390 = vmatpush1.msra.mxu0 0.0
        %4391 = vmatprep.subr.mxu0 0.0
        %4392 = vmatpush1.msra.mxu0 0.0
        %4393 = vmatprep.subr.mxu0 0.0
        %4394 = vmatpush1.msra.mxu0 0.0
        %4395 = vmatprep.subr.mxu0 0.0
        %4396 = vmatpush1.msra.mxu0 0.0
        %4397 = vmatprep.subr.mxu0 0.0
        %4398 = vmatpush1.msra.mxu0 0.0
        %4399 = vmatprep.subr.mxu0 0.0
        %4400 = vmatpush1.msra.mxu0 0.0
        %4401 = vmatprep.subr.mxu0 0.0
        %4402 = vmatpush1.msra.mxu0 0.0
        %4403 = vmatprep.subr.mxu0 0.0
        %4404 = vmatpush1.msra.mxu0 0.0
        %4405 = vmatprep.subr.mxu0 0.0
        %4406 = vmatpush1.msra.mxu0 0.0
        %4407 = vmatprep.mubr.f32.mxu0 0.0
        %4408 = vmatmul.mubr.f32.gmra.mrb[0].mxu0 %v4341
        %v4409 = vpop.f32.mrb[0].mxu0
        %v4410 = vadd.f32 %v4336, %v4409
        %v4411 = vpop.f32.mrb[0].mxu0
        %v4412 = vadd.f32 %v4338, %v4411
        %4413 = vdwg.mxu0
        %v4414 = vld [vmem:[%s14] sm:$0xff]
        %4416 = vset.pattern.permute.xlu0 0
        %4417 = vperm.xlu0 %4416, %v4414
        %v4418 = vpop.permute.xlu0 %4417
        %v4420 = vadd.f32 %v4410, %v4418
        %v4421 = vadd.f32 %v4412, %v4418
        %v4422 = vadd.f32 %v4262, %v4420
        %v4423 = vadd.f32 %v4263, %v4421
        %v4424 = vmax.f32 %v4422, 0.0
        %v4425 = vmax.f32 %v4423, 0.0
        %v4426 = vxor.u32 %v4424, 2147483648
        %v4427 = vxor.u32 %v4425, 2147483648
        %v4428 = vmul.f32 %v4426, 1.442695
        %v4429 = vpow.pop %v4428
        %v4430 = vmul.f32 %v4427, 1.442695
        %v4431 = vpow.pop %v4430
        %v4432 = vadd.f32 %v4429, 1.0
        %v4433 = vadd.f32 %v4431, 1.0
        %v4434 = vrcp.pop %v4432
        %v4435 = vmul.f32 1.0, %v4434
        %v4436 = vrcp.pop %v4433
        %v4437 = vmul.f32 1.0, %v4436
        %v4440 = vrot.slane %v4435, 1
        %v4441 = vrot.slane %v4437, 1
        %v4442 = vrot.slane %v4435, 2
        %v4443 = vrot.slane %v4437, 2
        %v4444 = vrot.slane %v4435, 3
        %v4445 = vrot.slane %v4437, 3
        %v4446 = vrot.slane %v4435, 4
        %v4447 = vrot.slane %v4437, 4
        %v4448 = vrot.slane %v4435, 5
        %v4449 = vrot.slane %v4437, 5
        %v4450 = vrot.slane %v4435, 6
        %v4451 = vrot.slane %v4437, 6
        %v4452 = vrot.slane %v4435, 7
        %v4453 = vrot.slane %v4437, 7
        %v4470 = vadd.f32 %v1814, %v4435
        %v4471 = vadd.f32 %v1821, %v4437
        %v4472 = vadd.f32 %v1828, %v4440
        %v4473 = vadd.f32 %v1835, %v4441
        %v4474 = vadd.f32 %v1842, %v4442
        %v4475 = vadd.f32 %v1849, %v4443
        %v4476 = vadd.f32 %v1856, %v4444
        %v4477 = vadd.f32 %v1863, %v4445
        %v4478 = vadd.f32 %v1870, %v4446
        %v4479 = vadd.f32 %v1877, %v4447
        %v4480 = vadd.f32 %v1884, %v4448
        %v4481 = vadd.f32 %v1891, %v4449
        %v4482 = vadd.f32 %v1898, %v4450
        %v4483 = vadd.f32 %v1905, %v4451
        %v4484 = vadd.f32 %v1912, %v4452
        %v4485 = vadd.f32 %v1919, %v4453
        %v4502 = vrot.slane %v4472, 7
        %v4503 = vsel %vm1936, %v4502, %v4470
        %v4504 = vrot.slane %v4474, 6
        %v4505 = vsel %vm1938, %v4504, %v4503
        %v4506 = vrot.slane %v4476, 5
        %v4507 = vsel %vm1940, %v4506, %v4505
        %v4508 = vrot.slane %v4478, 4
        %v4509 = vsel %vm1942, %v4508, %v4507
        %v4510 = vrot.slane %v4480, 3
        %v4511 = vsel %vm1944, %v4510, %v4509
        %v4512 = vrot.slane %v4482, 2
        %v4513 = vsel %vm1946, %v4512, %v4511
        %v4514 = vrot.slane %v4484, 1
        %v4515 = vsel %vm1948, %v4514, %v4513
        %v4516 = vrot.slane %v4473, 7
        %v4517 = vsel %vm1936, %v4516, %v4471
        %v4518 = vrot.slane %v4475, 6
        %v4519 = vsel %vm1938, %v4518, %v4517
        %v4520 = vrot.slane %v4477, 5
        %v4521 = vsel %vm1940, %v4520, %v4519
        %v4522 = vrot.slane %v4479, 4
        %v4523 = vsel %vm1942, %v4522, %v4521
        %v4524 = vrot.slane %v4481, 3
        %v4525 = vsel %vm1944, %v4524, %v4523
        %v4526 = vrot.slane %v4483, 2
        %v4527 = vsel %vm1946, %v4526, %v4525
        %v4528 = vrot.slane %v4485, 1
        %v4529 = vsel %vm1948, %v4528, %v4527
        %4532 = vst [vmem:[%s517] sm:$0xff] %v4515
        %4533 = vst [vmem:[%s517 + $0x8] sm:$0xff] %v4529
        %s4534 = sand.u32 %s367, 1
        %s4535 = scalar_lea.sflag [#allocation3], %s4534
        %s4536 = sand.u32 %s367, 1
        %s4537 = smul.addr %s4536, 16
        %s4538 = scalar_lea.vmem [#allocation2], %s4537
        // Predicated region
        $region81: #{tpu_custom_call.1} parent=79 // pred_check
          %p4539 = pneg %p377
        $region82: #{tpu_custom_call.1} parent=79 // pred_check_branch
          %4541 = sbr.rel (%p4539) target = $region84
        $region83: #{tpu_custom_call.1} parent=79 // pred_region
          %s4543 = ssub.s32 256, 256
          %4544 = vsyncadd %s4535, %s4543
          %s4545 = smul.addr %s29, 2
          %s4546 = smul.addr %s4545, 128
          %s4547 = scalar_lea.hbm %s15, %s4546
          %s4549 = sshll.u32 %s4538, 4
          %s4550 = int_to_ptr.vmem [resolvable:$true] %s4549
          %4552 = dma.vmem_to_hbm [thread:$0]  %s4550, 256, %s4547, %s4535
        $region84: #{tpu_custom_call.1} parent=79 // pred_fallthru
          _
      $region80: #{tpu_custom_call.1} parent=5 // pred_fallthru
        _
      %p4553 = scmp.le.s32.totalorder 2, %s24
      // Predicated region
      $region85: #{tpu_custom_call.1} parent=5 // pred_check
        %p4554 = pneg %p4553
      $region86: #{tpu_custom_call.1} parent=5 // pred_check_branch
        %4556 = sbr.rel (%p4554) target = $region88
      $region87: #{tpu_custom_call.1} parent=5 // pred_region
        %s4557 = ssub.s32 %s24, 2
        // Predicated region
        $region89: #{tpu_custom_call.1} parent=87 // pred_check
          %p4558 = pneg %p383
        $region90: #{tpu_custom_call.1} parent=87 // pred_check_branch
          %4560 = sbr.rel (%p4558) target = $region92
        $region91: #{tpu_custom_call.1} parent=87 // pred_region
          %s4561 = sand.u32 %s368, 1
          %s4562 = scalar_lea.sflag [#allocation3], %s4561
          %s4563 = sand.u32 %s368, 1
          %s4564 = smul.addr %s4563, 16
          %s4565 = scalar_lea.vmem [#allocation2], %s4564
          %4566 = dma.done %s4562, 256
        $region92: #{tpu_custom_call.1} parent=87 // pred_fallthru
          _
      $region88: #{tpu_custom_call.1} parent=5 // pred_fallthru
        _
    $region6: #{tpu_custom_call.1} parent=1 // loop_footer
      %s28 = sadd.s32 1, %s24
    $region7: #{tpu_custom_call.1} parent=1 // loop_footer_branch
      %23 = sbr.rel target = $region3
    $region8: #{tpu_custom_call.1} parent=1 // loop_exit
      _
    %4567 = vsyncpa [#allocation3], 1
    %s4568 = scalar_lea.sflag [#allocation3], 1
    %4569 = vsyncpa %s4568, 1

</llo_original>
